<compile_context>
chip_gen: v7x
topology: tpu7x:2x2x1
jax: 0.10.0
libtpu: 0.0.40
codegen_flags: <defaults>
</compile_context>

<pallas_src>
import jax
import jax.numpy as jnp
from jax import lax
from jax.experimental import pallas as pl
from jax.experimental.pallas import tpu as pltpu


def _sigmoid(z):
    # sigmoid(z) = 0.5*tanh(0.5*z) + 0.5 : single EUP op, no exp(-z) overflow.
    return 0.5 * jnp.tanh(0.5 * z) + 0.5


def net_kernel(x_ref, wx_ref, b_ref,
               whi_ref, whf_ref, who_ref, whc_ref,
               wq_ref, wk_ref, wv_ref, wc_ref, bc_ref,
               out_ref,
               xi_ref, xf_ref, xo_ref, xc_ref, hseq_ref):
    """One batch-tile of the forward pass (minus the embedding gather).

    x_ref : (T, Bt, E)   embedded inputs, time-major, batch tile Bt
    wx_ref: (E, 4H)      packed [i|f|o|c] input->gate weights
    b_ref : (1, 4H)      packed gate biases
    wh*_ref: (H, H)      per-gate hidden->gate weights (lane-aligned gates)
    wq_ref/wk_ref: (H,H) wv_ref: (1,H)   additive-attention params
    wc_ref: (H, 128) bc_ref: (1, 128)    classifier, padded to lane-dense 128
    out_ref: (Bt, 128)   padded logits
    xi/xf/xo/xc_ref: (T, Bt, H) VMEM scratch, hoisted per-gate input projections
    hseq_ref: (T, Bt, H) VMEM scratch, per-step hidden states
    """
    T, Bt, E = x_ref.shape
    Hh = whi_ref.shape[0]

    # ---- hoisted input projection: one big matmul, bias added once ----------
    x2d = x_ref[...].reshape(T * Bt, E)
    xproj = jnp.dot(x2d, wx_ref[...],
                    preferred_element_type=jnp.float32) + b_ref[...]     # (T*Bt, 4H)
    # split into lane-aligned per-gate tensors ONCE (amortized over all steps)
    xi_ref[...] = xproj[:, 0 * Hh:1 * Hh].reshape(T, Bt, Hh)
    xf_ref[...] = xproj[:, 1 * Hh:2 * Hh].reshape(T, Bt, Hh)
    xo_ref[...] = xproj[:, 2 * Hh:3 * Hh].reshape(T, Bt, Hh)
    xc_ref[...] = xproj[:, 3 * Hh:4 * Hh].reshape(T, Bt, Hh)

    # ---- recurrence: only H @ W_h* remains on the serial dependency chain ---
    def step(t, carry):
        H, C = carry
        i_g = _sigmoid(xi_ref[t] + jnp.dot(H, whi_ref[...],
                                           preferred_element_type=jnp.float32))
        f_g = _sigmoid(xf_ref[t] + jnp.dot(H, whf_ref[...],
                                           preferred_element_type=jnp.float32))
        o_g = _sigmoid(xo_ref[t] + jnp.dot(H, who_ref[...],
                                           preferred_element_type=jnp.float32))
        c_t = jnp.tanh(xc_ref[t] + jnp.dot(H, whc_ref[...],
                                           preferred_element_type=jnp.float32))
        C = f_g * C + i_g * c_t
        H = o_g * jnp.tanh(C)
        hseq_ref[t] = H
        return (H, C)

    H0 = jnp.zeros((Bt, Hh), jnp.float32)
    C0 = jnp.zeros((Bt, Hh), jnp.float32)
    H_fin, _ = lax.fori_loop(0, T, step, (H0, C0), unroll=True)

    # ---- additive attention (query = final hidden state) --------------------
    hs = hseq_ref[...]                                                   # (T, Bt, H)
    # key projection hoisted out of the recurrence: one (T*Bt,H)x(H,H) matmul
    keys = jnp.dot(hs.reshape(T * Bt, Hh), wk_ref[...],
                   preferred_element_type=jnp.float32).reshape(T, Bt, Hh)
    q = jnp.dot(H_fin, wq_ref[...], preferred_element_type=jnp.float32)  # (Bt, H)
    feats = jnp.tanh(keys + q[None, :, :])                               # (T, Bt, H)

    # scores lane-dense as (Bt, T); softmax over the last (lane) dim
    scores = jnp.sum(feats * wv_ref[...], axis=-1).T                     # (Bt, T)
    scores = scores - jnp.max(scores, axis=-1, keepdims=True)
    e = jnp.exp(scores)
    attn = e / jnp.sum(e, axis=-1, keepdims=True)                        # (Bt, T)
    # TODO(synk): Dropout(p=0.1) on attention weights omitted (eval-mode semantics).

    ctx = jnp.sum(attn.T[:, :, None] * hs, axis=0)                       # (Bt, H)

    # lane-dense (Bt, 128) padded classifier output
    out_ref[...] = (jnp.dot(ctx, wc_ref[...],
                            preferred_element_type=jnp.float32) + bc_ref[...])


def net_forward(tokens, params):
    emb = params["embedding"]
    x = emb[tokens]                          # (B, T, E) gather in plain JAX
    x = jnp.transpose(x, (1, 0, 2))          # (T, B, E) time-major
    T, B, E = x.shape
    Hh = params["W_hi"].shape[0]
    nc = params["W_cls"].shape[1]
    C_PAD = 128

    tile_b = 8 if B % 8 == 0 else B          # full sublane tile when possible
    grid = (B // tile_b,)

    # pack the input->gate weights / biases once ([i|f|o|c] order)
    W_x = jnp.concatenate([params["W_xi"], params["W_xf"],
                           params["W_xo"], params["W_xc"]], axis=1)      # (E, 4H)
    b = jnp.concatenate([params["b_i"], params["b_f"],
                         params["b_o"], params["b_c"]])[None, :]         # (1, 4H)
    # pad classifier to 128 lanes (sliced back below)
    W_cls_p = jnp.zeros((Hh, C_PAD), jnp.float32).at[:, :nc].set(params["W_cls"])
    b_cls_p = jnp.zeros((1, C_PAD), jnp.float32).at[:, :nc].set(params["b_cls"])

    def full(shape):
        return pl.BlockSpec(shape, lambda b_, s=len(shape): (0,) * s)

    out_pad = pl.pallas_call(
        net_kernel,
        out_shape=jax.ShapeDtypeStruct((B, C_PAD), jnp.float32),
        grid_spec=pltpu.PrefetchScalarGridSpec(
            num_scalar_prefetch=0,
            grid=grid,
            in_specs=[
                pl.BlockSpec((T, tile_b, E), lambda bi: (0, bi, 0)),   # x
                full((E, 4 * Hh)),                                     # W_x packed
                full((1, 4 * Hh)),                                     # b packed
                full((Hh, Hh)), full((Hh, Hh)),                        # W_hi, W_hf
                full((Hh, Hh)), full((Hh, Hh)),                        # W_ho, W_hc
                full((Hh, Hh)), full((Hh, Hh)),                        # W_q, W_k
                full((1, Hh)),                                         # w_v
                full((Hh, C_PAD)), full((1, C_PAD)),                   # classifier
            ],
            out_specs=pl.BlockSpec((tile_b, C_PAD), lambda bi: (bi, 0)),
            scratch_shapes=[pltpu.VMEM((T, tile_b, Hh), jnp.float32)
                            for _ in range(5)],                        # xi,xf,xo,xc,hseq
        ),
        compiler_params=pltpu.CompilerParams(
            dimension_semantics=("parallel",)),
    )(x, W_x, b,
      params["W_hi"], params["W_hf"], params["W_ho"], params["W_hc"],
      params["W_q"], params["W_k"], params["w_v"],
      W_cls_p, b_cls_p)

    return out_pad[:, :nc]
    # TODO(synk): bf16 matmul path (v6e/v7x) left out to keep exact f32 parity
    # with the reference; at production sizes also stream x over T from HBM.


def net_reference(tokens, params):
    """Pure-JAX reference mirroring the PyTorch forward (eval mode)."""
    x = jnp.transpose(params["embedding"][tokens], (1, 0, 2))   # (T, B, E)
    T, B, _ = x.shape
    Hh = params["W_hi"].shape[0]
    H = jnp.zeros((B, Hh), jnp.float32)
    C = jnp.zeros((B, Hh), jnp.float32)
    hs = []
    for t in range(T):
        xt = x[t]
        i = jax.nn.sigmoid(xt @ params["W_xi"] + H @ params["W_hi"] + params["b_i"])
        f = jax.nn.sigmoid(xt @ params["W_xf"] + H @ params["W_hf"] + params["b_f"])
        o = jax.nn.sigmoid(xt @ params["W_xo"] + H @ params["W_ho"] + params["b_o"])
        ct = jnp.tanh(xt @ params["W_xc"] + H @ params["W_hc"] + params["b_c"])
        C = f * C + i * ct
        H = o * jnp.tanh(C)
        hs.append(H)
    outs = jnp.stack(hs, axis=1)                                # (B, T, H)
    q = H @ params["W_q"]                                       # (B, H)
    k = outs @ params["W_k"]                                    # (B, T, H)
    feats = jnp.tanh(q[:, None, :] + k)
    scores = jnp.sum(feats * params["w_v"][0], axis=-1)         # (B, T)
    attn = jax.nn.softmax(scores, axis=-1)
    ctx = jnp.einsum('bt,bth->bh', attn, outs)
    return ctx @ params["W_cls"] + params["b_cls"][0]


def init_params(key, vocab_size, embed_size, num_hiddens, num_classes):
    ks = jax.random.split(key, 20)

    def nrm(k, shape, scale):
        return jax.random.normal(k, shape, dtype=jnp.float32) * scale

    E, Hh = embed_size, num_hiddens
    s_in, s_h = 1.0 / (E ** 0.5), 1.0 / (Hh ** 0.5)
    return {
        "embedding": nrm(ks[0], (vocab_size, E), s_in),
        "W_xi": nrm(ks[1], (E, Hh), s_in), "W_xf": nrm(ks[2], (E, Hh), s_in),
        "W_xo": nrm(ks[3], (E, Hh), s_in), "W_xc": nrm(ks[4], (E, Hh), s_in),
        "W_hi": nrm(ks[5], (Hh, Hh), s_h), "W_hf": nrm(ks[6], (Hh, Hh), s_h),
        "W_ho": nrm(ks[7], (Hh, Hh), s_h), "W_hc": nrm(ks[8], (Hh, Hh), s_h),
        "b_i": nrm(ks[9], (Hh,), 0.1), "b_f": nrm(ks[10], (Hh,), 0.1),
        "b_o": nrm(ks[11], (Hh,), 0.1), "b_c": nrm(ks[12], (Hh,), 0.1),
        "W_q": nrm(ks[13], (Hh, Hh), s_h),
        "W_k": nrm(ks[14], (Hh, Hh), s_h),
        "w_v": nrm(ks[15], (1, Hh), s_h),
        "W_cls": nrm(ks[16], (Hh, num_classes), s_h),
        "b_cls": jnp.zeros((1, num_classes), jnp.float32),
    }


if __name__ == "__main__":
    vocab_size, embed_size, num_hiddens, num_classes = 50, 32, 32, 5
    batch, num_steps = 16, 8   # batch=16 -> batch grid of 2 parallel tiles of 8

    key = jax.random.PRNGKey(0)
    k_tok, k_par = jax.random.split(key)
    tokens = jax.random.randint(k_tok, (batch, num_steps), 0, vocab_size,
                                dtype=jnp.int32)
    params = init_params(k_par, vocab_size, embed_size, num_hiddens, num_classes)

    out = jax.jit(net_forward)(tokens, params)
    out = jax.block_until_ready(out)

    ref = net_reference(tokens, params)
    assert out.shape == (batch, num_classes)
    assert jnp.allclose(out, ref, rtol=1e-4, atol=1e-4), (out, ref)
    print("KERNEL_OK")
</pallas_src>

<mosaic_0001>
module attributes {stable_mosaic.version = 11 : i64} {
  func.func @net_kernel(%arg0: i32, %arg1: memref<8x8x32xf32, #tpu.memory_space<vmem>>, %arg2: memref<32x128xf32, #tpu.memory_space<vmem>>, %arg3: memref<1x128xf32, #tpu.memory_space<vmem>>, %arg4: memref<32x32xf32, #tpu.memory_space<vmem>>, %arg5: memref<32x32xf32, #tpu.memory_space<vmem>>, %arg6: memref<32x32xf32, #tpu.memory_space<vmem>>, %arg7: memref<32x32xf32, #tpu.memory_space<vmem>>, %arg8: memref<32x32xf32, #tpu.memory_space<vmem>>, %arg9: memref<32x32xf32, #tpu.memory_space<vmem>>, %arg10: memref<1x32xf32, #tpu.memory_space<vmem>>, %arg11: memref<32x128xf32, #tpu.memory_space<vmem>>, %arg12: memref<1x128xf32, #tpu.memory_space<vmem>>, %arg13: memref<8x128xf32, #tpu.memory_space<vmem>>, %arg14: memref<8x8x32xf32, #tpu.memory_space<vmem>>, %arg15: memref<8x8x32xf32, #tpu.memory_space<vmem>>, %arg16: memref<8x8x32xf32, #tpu.memory_space<vmem>>, %arg17: memref<8x8x32xf32, #tpu.memory_space<vmem>>, %arg18: memref<8x8x32xf32, #tpu.memory_space<vmem>>) attributes {dimension_semantics = [#tpu.dimension_semantics<parallel>], iteration_bounds = array<i64: 2>, scalar_prefetch = 0 : i64, scratch_operands = 5 : i64, tpu.core_type = #tpu.core_type<tc>, window_params = [{transform_indices = @transform_0, window_bounds = array<i64: 8, 8, 32>}, {pipeline_mode = #tpu.pipeline_mode<synchronous>, transform_indices = @transform_1, window_bounds = array<i64: 32, 128>}, {pipeline_mode = #tpu.pipeline_mode<synchronous>, transform_indices = @transform_2, window_bounds = array<i64: 1, 128>}, {pipeline_mode = #tpu.pipeline_mode<synchronous>, transform_indices = @transform_3, window_bounds = array<i64: 32, 32>}, {pipeline_mode = #tpu.pipeline_mode<synchronous>, transform_indices = @transform_4, window_bounds = array<i64: 32, 32>}, {pipeline_mode = #tpu.pipeline_mode<synchronous>, transform_indices = @transform_5, window_bounds = array<i64: 32, 32>}, {pipeline_mode = #tpu.pipeline_mode<synchronous>, transform_indices = @transform_6, window_bounds = array<i64: 32, 32>}, {pipeline_mode = #tpu.pipeline_mode<synchronous>, transform_indices = @transform_7, window_bounds = array<i64: 32, 32>}, {pipeline_mode = #tpu.pipeline_mode<synchronous>, transform_indices = @transform_8, window_bounds = array<i64: 32, 32>}, {pipeline_mode = #tpu.pipeline_mode<synchronous>, transform_indices = @transform_9, window_bounds = array<i64: 1, 32>}, {pipeline_mode = #tpu.pipeline_mode<synchronous>, transform_indices = @transform_10, window_bounds = array<i64: 32, 128>}, {pipeline_mode = #tpu.pipeline_mode<synchronous>, transform_indices = @transform_11, window_bounds = array<i64: 1, 128>}, {transform_indices = @transform_12, window_bounds = array<i64: 8, 128>}]} {
    %c0 = arith.constant 0 : index
    %c0_0 = arith.constant 0 : index
    %c0_1 = arith.constant 0 : index
    %0 = vector.load %arg1[%c0, %c0_0, %c0_1] : memref<8x8x32xf32, #tpu.memory_space<vmem>>, vector<8x8x32xf32>
    %1 = vector.shape_cast %0 : vector<8x8x32xf32> to vector<64x32xf32>
    %c0_2 = arith.constant 0 : index
    %c0_3 = arith.constant 0 : index
    %2 = vector.load %arg2[%c0_2, %c0_3] : memref<32x128xf32, #tpu.memory_space<vmem>>, vector<32x128xf32>
    %cst = arith.constant dense<0.000000e+00> : vector<64x128xf32>
    %3 = tpu.matmul %1, %2, %cst {dimension_numbers = #tpu.dot_dimension_numbers<[1], [0], [0], [1], [0, 0, 1, 1], [], []>} : vector<64x32xf32>, vector<32x128xf32>, vector<64x128xf32> -> vector<64x128xf32>
    %c0_4 = arith.constant 0 : index
    %c0_5 = arith.constant 0 : index
    %4 = vector.load %arg3[%c0_4, %c0_5] : memref<1x128xf32, #tpu.memory_space<vmem>>, vector<1x128xf32>
    %5 = vector.broadcast %4 : vector<1x128xf32> to vector<64x128xf32>
    %6 = arith.addf %3, %5 : vector<64x128xf32>
    %7 = vector.extract_strided_slice %6 {offsets = [0, 0], sizes = [64, 32], strides = [1, 1]} : vector<64x128xf32> to vector<64x32xf32>
    %8 = vector.shape_cast %7 : vector<64x32xf32> to vector<8x8x32xf32>
    %c0_6 = arith.constant 0 : index
    %c0_7 = arith.constant 0 : index
    %c0_8 = arith.constant 0 : index
    %9 = vector.load %arg14[%c0_6, %c0_7, %c0_8] : memref<8x8x32xf32, #tpu.memory_space<vmem>>, vector<8x8x32xf32>
    tpu.vector_store %arg14[%c0_6, %c0_7, %c0_8], %8 {strides = array<i32>} : memref<8x8x32xf32, #tpu.memory_space<vmem>>, vector<8x8x32xf32>,
    %10 = vector.extract_strided_slice %6 {offsets = [0, 32], sizes = [64, 32], strides = [1, 1]} : vector<64x128xf32> to vector<64x32xf32>
    %11 = vector.shape_cast %10 : vector<64x32xf32> to vector<8x8x32xf32>
    %c0_9 = arith.constant 0 : index
    %c0_10 = arith.constant 0 : index
    %c0_11 = arith.constant 0 : index
    %12 = vector.load %arg15[%c0_9, %c0_10, %c0_11] : memref<8x8x32xf32, #tpu.memory_space<vmem>>, vector<8x8x32xf32>
    tpu.vector_store %arg15[%c0_9, %c0_10, %c0_11], %11 {strides = array<i32>} : memref<8x8x32xf32, #tpu.memory_space<vmem>>, vector<8x8x32xf32>,
    %13 = vector.extract_strided_slice %6 {offsets = [0, 64], sizes = [64, 32], strides = [1, 1]} : vector<64x128xf32> to vector<64x32xf32>
    %14 = vector.shape_cast %13 : vector<64x32xf32> to vector<8x8x32xf32>
    %c0_12 = arith.constant 0 : index
    %c0_13 = arith.constant 0 : index
    %c0_14 = arith.constant 0 : index
    %15 = vector.load %arg16[%c0_12, %c0_13, %c0_14] : memref<8x8x32xf32, #tpu.memory_space<vmem>>, vector<8x8x32xf32>
    tpu.vector_store %arg16[%c0_12, %c0_13, %c0_14], %14 {strides = array<i32>} : memref<8x8x32xf32, #tpu.memory_space<vmem>>, vector<8x8x32xf32>,
    %16 = vector.extract_strided_slice %6 {offsets = [0, 96], sizes = [64, 32], strides = [1, 1]} : vector<64x128xf32> to vector<64x32xf32>
    %17 = vector.shape_cast %16 : vector<64x32xf32> to vector<8x8x32xf32>
    %c0_15 = arith.constant 0 : index
    %c0_16 = arith.constant 0 : index
    %c0_17 = arith.constant 0 : index
    %18 = vector.load %arg17[%c0_15, %c0_16, %c0_17] : memref<8x8x32xf32, #tpu.memory_space<vmem>>, vector<8x8x32xf32>
    tpu.vector_store %arg17[%c0_15, %c0_16, %c0_17], %17 {strides = array<i32>} : memref<8x8x32xf32, #tpu.memory_space<vmem>>, vector<8x8x32xf32>,
    %cst_18 = arith.constant 0.000000e+00 : f32
    %19 = vector.broadcast %cst_18 : f32 to vector<8x32xf32>
    %cst_19 = arith.constant 0.000000e+00 : f32
    %20 = vector.broadcast %cst_19 : f32 to vector<8x32xf32>
    %c0_i32 = arith.constant 0 : i32
    %21 = arith.index_cast %c0_i32 : i32 to index
    %c0_20 = arith.constant 0 : index
    %c0_21 = arith.constant 0 : index
    %22 = vector.load %arg14[%21, %c0_20, %c0_21] : memref<8x8x32xf32, #tpu.memory_space<vmem>>, vector<1x8x32xf32>
    %23 = vector.shape_cast %22 : vector<1x8x32xf32> to vector<8x32xf32>
    %c0_22 = arith.constant 0 : index
    %c0_23 = arith.constant 0 : index
    %24 = vector.load %arg4[%c0_22, %c0_23] : memref<32x32xf32, #tpu.memory_space<vmem>>, vector<32x32xf32>
    %cst_24 = arith.constant dense<0.000000e+00> : vector<8x32xf32>
    %25 = tpu.matmul %19, %24, %cst_24 {dimension_numbers = #tpu.dot_dimension_numbers<[1], [0], [0], [1], [0, 0, 1, 1], [], []>} : vector<8x32xf32>, vector<32x32xf32>, vector<8x32xf32> -> vector<8x32xf32>
    %26 = arith.addf %23, %25 : vector<8x32xf32>
    %cst_25 = arith.constant 5.000000e-01 : f32
    %27 = vector.broadcast %cst_25 : f32 to vector<8x32xf32>
    %28 = arith.mulf %27, %26 : vector<8x32xf32>
    %29 = math.tanh %28 : vector<8x32xf32>
    %cst_26 = arith.constant 5.000000e-01 : f32
    %30 = vector.broadcast %cst_26 : f32 to vector<8x32xf32>
    %31 = arith.mulf %30, %29 : vector<8x32xf32>
    %cst_27 = arith.constant 5.000000e-01 : f32
    %32 = vector.broadcast %cst_27 : f32 to vector<8x32xf32>
    %33 = arith.addf %31, %32 : vector<8x32xf32>
    %34 = arith.index_cast %c0_i32 : i32 to index
    %c0_28 = arith.constant 0 : index
    %c0_29 = arith.constant 0 : index
    %35 = vector.load %arg15[%34, %c0_28, %c0_29] : memref<8x8x32xf32, #tpu.memory_space<vmem>>, vector<1x8x32xf32>
    %36 = vector.shape_cast %35 : vector<1x8x32xf32> to vector<8x32xf32>
    %c0_30 = arith.constant 0 : index
    %c0_31 = arith.constant 0 : index
    %37 = vector.load %arg5[%c0_30, %c0_31] : memref<32x32xf32, #tpu.memory_space<vmem>>, vector<32x32xf32>
    %cst_32 = arith.constant dense<0.000000e+00> : vector<8x32xf32>
    %38 = tpu.matmul %19, %37, %cst_32 {dimension_numbers = #tpu.dot_dimension_numbers<[1], [0], [0], [1], [0, 0, 1, 1], [], []>} : vector<8x32xf32>, vector<32x32xf32>, vector<8x32xf32> -> vector<8x32xf32>
    %39 = arith.addf %36, %38 : vector<8x32xf32>
    %cst_33 = arith.constant 5.000000e-01 : f32
    %40 = vector.broadcast %cst_33 : f32 to vector<8x32xf32>
    %41 = arith.mulf %40, %39 : vector<8x32xf32>
    %42 = math.tanh %41 : vector<8x32xf32>
    %cst_34 = arith.constant 5.000000e-01 : f32
    %43 = vector.broadcast %cst_34 : f32 to vector<8x32xf32>
    %44 = arith.mulf %43, %42 : vector<8x32xf32>
    %cst_35 = arith.constant 5.000000e-01 : f32
    %45 = vector.broadcast %cst_35 : f32 to vector<8x32xf32>
    %46 = arith.addf %44, %45 : vector<8x32xf32>
    %47 = arith.index_cast %c0_i32 : i32 to index
    %c0_36 = arith.constant 0 : index
    %c0_37 = arith.constant 0 : index
    %48 = vector.load %arg16[%47, %c0_36, %c0_37] : memref<8x8x32xf32, #tpu.memory_space<vmem>>, vector<1x8x32xf32>
    %49 = vector.shape_cast %48 : vector<1x8x32xf32> to vector<8x32xf32>
    %c0_38 = arith.constant 0 : index
    %c0_39 = arith.constant 0 : index
    %50 = vector.load %arg6[%c0_38, %c0_39] : memref<32x32xf32, #tpu.memory_space<vmem>>, vector<32x32xf32>
    %cst_40 = arith.constant dense<0.000000e+00> : vector<8x32xf32>
    %51 = tpu.matmul %19, %50, %cst_40 {dimension_numbers = #tpu.dot_dimension_numbers<[1], [0], [0], [1], [0, 0, 1, 1], [], []>} : vector<8x32xf32>, vector<32x32xf32>, vector<8x32xf32> -> vector<8x32xf32>
    %52 = arith.addf %49, %51 : vector<8x32xf32>
    %cst_41 = arith.constant 5.000000e-01 : f32
    %53 = vector.broadcast %cst_41 : f32 to vector<8x32xf32>
    %54 = arith.mulf %53, %52 : vector<8x32xf32>
    %55 = math.tanh %54 : vector<8x32xf32>
    %cst_42 = arith.constant 5.000000e-01 : f32
    %56 = vector.broadcast %cst_42 : f32 to vector<8x32xf32>
    %57 = arith.mulf %56, %55 : vector<8x32xf32>
    %cst_43 = arith.constant 5.000000e-01 : f32
    %58 = vector.broadcast %cst_43 : f32 to vector<8x32xf32>
    %59 = arith.addf %57, %58 : vector<8x32xf32>
    %60 = arith.index_cast %c0_i32 : i32 to index
    %c0_44 = arith.constant 0 : index
    %c0_45 = arith.constant 0 : index
    %61 = vector.load %arg17[%60, %c0_44, %c0_45] : memref<8x8x32xf32, #tpu.memory_space<vmem>>, vector<1x8x32xf32>
    %62 = vector.shape_cast %61 : vector<1x8x32xf32> to vector<8x32xf32>
    %c0_46 = arith.constant 0 : index
    %c0_47 = arith.constant 0 : index
    %63 = vector.load %arg7[%c0_46, %c0_47] : memref<32x32xf32, #tpu.memory_space<vmem>>, vector<32x32xf32>
    %cst_48 = arith.constant dense<0.000000e+00> : vector<8x32xf32>
    %64 = tpu.matmul %19, %63, %cst_48 {dimension_numbers = #tpu.dot_dimension_numbers<[1], [0], [0], [1], [0, 0, 1, 1], [], []>} : vector<8x32xf32>, vector<32x32xf32>, vector<8x32xf32> -> vector<8x32xf32>
    %65 = arith.addf %62, %64 : vector<8x32xf32>
    %66 = math.tanh %65 : vector<8x32xf32>
    %67 = arith.mulf %46, %20 : vector<8x32xf32>
    %68 = arith.mulf %33, %66 : vector<8x32xf32>
    %69 = arith.addf %67, %68 : vector<8x32xf32>
    %70 = math.tanh %69 : vector<8x32xf32>
    %71 = arith.mulf %59, %70 : vector<8x32xf32>
    %72 = arith.index_cast %c0_i32 : i32 to index
    %c0_49 = arith.constant 0 : index
    %c0_50 = arith.constant 0 : index
    %73 = vector.load %arg18[%72, %c0_49, %c0_50] : memref<8x8x32xf32, #tpu.memory_space<vmem>>, vector<1x8x32xf32>
    %74 = vector.shape_cast %73 : vector<1x8x32xf32> to vector<8x32xf32>
    %75 = vector.shape_cast %71 : vector<8x32xf32> to vector<1x8x32xf32>
    tpu.vector_store %arg18[%72, %c0_49, %c0_50], %75 {strides = array<i32>} : memref<8x8x32xf32, #tpu.memory_space<vmem>>, vector<1x8x32xf32>,
    %c1_i32 = arith.constant 1 : i32
    %76 = arith.index_cast %c1_i32 : i32 to index
    %c0_51 = arith.constant 0 : index
    %c0_52 = arith.constant 0 : index
    %77 = vector.load %arg14[%76, %c0_51, %c0_52] : memref<8x8x32xf32, #tpu.memory_space<vmem>>, vector<1x8x32xf32>
    %78 = vector.shape_cast %77 : vector<1x8x32xf32> to vector<8x32xf32>
    %c0_53 = arith.constant 0 : index
    %c0_54 = arith.constant 0 : index
    %79 = vector.load %arg4[%c0_53, %c0_54] : memref<32x32xf32, #tpu.memory_space<vmem>>, vector<32x32xf32>
    %cst_55 = arith.constant dense<0.000000e+00> : vector<8x32xf32>
    %80 = tpu.matmul %71, %79, %cst_55 {dimension_numbers = #tpu.dot_dimension_numbers<[1], [0], [0], [1], [0, 0, 1, 1], [], []>} : vector<8x32xf32>, vector<32x32xf32>, vector<8x32xf32> -> vector<8x32xf32>
    %81 = arith.addf %78, %80 : vector<8x32xf32>
    %cst_56 = arith.constant 5.000000e-01 : f32
    %82 = vector.broadcast %cst_56 : f32 to vector<8x32xf32>
    %83 = arith.mulf %82, %81 : vector<8x32xf32>
    %84 = math.tanh %83 : vector<8x32xf32>
    %cst_57 = arith.constant 5.000000e-01 : f32
    %85 = vector.broadcast %cst_57 : f32 to vector<8x32xf32>
    %86 = arith.mulf %85, %84 : vector<8x32xf32>
    %cst_58 = arith.constant 5.000000e-01 : f32
    %87 = vector.broadcast %cst_58 : f32 to vector<8x32xf32>
    %88 = arith.addf %86, %87 : vector<8x32xf32>
    %89 = arith.index_cast %c1_i32 : i32 to index
    %c0_59 = arith.constant 0 : index
    %c0_60 = arith.constant 0 : index
    %90 = vector.load %arg15[%89, %c0_59, %c0_60] : memref<8x8x32xf32, #tpu.memory_space<vmem>>, vector<1x8x32xf32>
    %91 = vector.shape_cast %90 : vector<1x8x32xf32> to vector<8x32xf32>
    %c0_61 = arith.constant 0 : index
    %c0_62 = arith.constant 0 : index
    %92 = vector.load %arg5[%c0_61, %c0_62] : memref<32x32xf32, #tpu.memory_space<vmem>>, vector<32x32xf32>
    %cst_63 = arith.constant dense<0.000000e+00> : vector<8x32xf32>
    %93 = tpu.matmul %71, %92, %cst_63 {dimension_numbers = #tpu.dot_dimension_numbers<[1], [0], [0], [1], [0, 0, 1, 1], [], []>} : vector<8x32xf32>, vector<32x32xf32>, vector<8x32xf32> -> vector<8x32xf32>
    %94 = arith.addf %91, %93 : vector<8x32xf32>
    %cst_64 = arith.constant 5.000000e-01 : f32
    %95 = vector.broadcast %cst_64 : f32 to vector<8x32xf32>
    %96 = arith.mulf %95, %94 : vector<8x32xf32>
    %97 = math.tanh %96 : vector<8x32xf32>
    %cst_65 = arith.constant 5.000000e-01 : f32
    %98 = vector.broadcast %cst_65 : f32 to vector<8x32xf32>
    %99 = arith.mulf %98, %97 : vector<8x32xf32>
    %cst_66 = arith.constant 5.000000e-01 : f32
    %100 = vector.broadcast %cst_66 : f32 to vector<8x32xf32>
    %101 = arith.addf %99, %100 : vector<8x32xf32>
    %102 = arith.index_cast %c1_i32 : i32 to index
    %c0_67 = arith.constant 0 : index
    %c0_68 = arith.constant 0 : index
    %103 = vector.load %arg16[%102, %c0_67, %c0_68] : memref<8x8x32xf32, #tpu.memory_space<vmem>>, vector<1x8x32xf32>
    %104 = vector.shape_cast %103 : vector<1x8x32xf32> to vector<8x32xf32>
    %c0_69 = arith.constant 0 : index
    %c0_70 = arith.constant 0 : index
    %105 = vector.load %arg6[%c0_69, %c0_70] : memref<32x32xf32, #tpu.memory_space<vmem>>, vector<32x32xf32>
    %cst_71 = arith.constant dense<0.000000e+00> : vector<8x32xf32>
    %106 = tpu.matmul %71, %105, %cst_71 {dimension_numbers = #tpu.dot_dimension_numbers<[1], [0], [0], [1], [0, 0, 1, 1], [], []>} : vector<8x32xf32>, vector<32x32xf32>, vector<8x32xf32> -> vector<8x32xf32>
    %107 = arith.addf %104, %106 : vector<8x32xf32>
    %cst_72 = arith.constant 5.000000e-01 : f32
    %108 = vector.broadcast %cst_72 : f32 to vector<8x32xf32>
    %109 = arith.mulf %108, %107 : vector<8x32xf32>
    %110 = math.tanh %109 : vector<8x32xf32>
    %cst_73 = arith.constant 5.000000e-01 : f32
    %111 = vector.broadcast %cst_73 : f32 to vector<8x32xf32>
    %112 = arith.mulf %111, %110 : vector<8x32xf32>
    %cst_74 = arith.constant 5.000000e-01 : f32
    %113 = vector.broadcast %cst_74 : f32 to vector<8x32xf32>
    %114 = arith.addf %112, %113 : vector<8x32xf32>
    %115 = arith.index_cast %c1_i32 : i32 to index
    %c0_75 = arith.constant 0 : index
    %c0_76 = arith.constant 0 : index
    %116 = vector.load %arg17[%115, %c0_75, %c0_76] : memref<8x8x32xf32, #tpu.memory_space<vmem>>, vector<1x8x32xf32>
    %117 = vector.shape_cast %116 : vector<1x8x32xf32> to vector<8x32xf32>
    %c0_77 = arith.constant 0 : index
    %c0_78 = arith.constant 0 : index
    %118 = vector.load %arg7[%c0_77, %c0_78] : memref<32x32xf32, #tpu.memory_space<vmem>>, vector<32x32xf32>
    %cst_79 = arith.constant dense<0.000000e+00> : vector<8x32xf32>
    %119 = tpu.matmul %71, %118, %cst_79 {dimension_numbers = #tpu.dot_dimension_numbers<[1], [0], [0], [1], [0, 0, 1, 1], [], []>} : vector<8x32xf32>, vector<32x32xf32>, vector<8x32xf32> -> vector<8x32xf32>
    %120 = arith.addf %117, %119 : vector<8x32xf32>
    %121 = math.tanh %120 : vector<8x32xf32>
    %122 = arith.mulf %101, %69 : vector<8x32xf32>
    %123 = arith.mulf %88, %121 : vector<8x32xf32>
    %124 = arith.addf %122, %123 : vector<8x32xf32>
    %125 = math.tanh %124 : vector<8x32xf32>
    %126 = arith.mulf %114, %125 : vector<8x32xf32>
    %127 = arith.index_cast %c1_i32 : i32 to index
    %c0_80 = arith.constant 0 : index
    %c0_81 = arith.constant 0 : index
    %128 = vector.load %arg18[%127, %c0_80, %c0_81] : memref<8x8x32xf32, #tpu.memory_space<vmem>>, vector<1x8x32xf32>
    %129 = vector.shape_cast %128 : vector<1x8x32xf32> to vector<8x32xf32>
    %130 = vector.shape_cast %126 : vector<8x32xf32> to vector<1x8x32xf32>
    tpu.vector_store %arg18[%127, %c0_80, %c0_81], %130 {strides = array<i32>} : memref<8x8x32xf32, #tpu.memory_space<vmem>>, vector<1x8x32xf32>,
    %c2_i32 = arith.constant 2 : i32
    %131 = arith.index_cast %c2_i32 : i32 to index
    %c0_82 = arith.constant 0 : index
    %c0_83 = arith.constant 0 : index
    %132 = vector.load %arg14[%131, %c0_82, %c0_83] : memref<8x8x32xf32, #tpu.memory_space<vmem>>, vector<1x8x32xf32>
    %133 = vector.shape_cast %132 : vector<1x8x32xf32> to vector<8x32xf32>
    %c0_84 = arith.constant 0 : index
    %c0_85 = arith.constant 0 : index
    %134 = vector.load %arg4[%c0_84, %c0_85] : memref<32x32xf32, #tpu.memory_space<vmem>>, vector<32x32xf32>
    %cst_86 = arith.constant dense<0.000000e+00> : vector<8x32xf32>
    %135 = tpu.matmul %126, %134, %cst_86 {dimension_numbers = #tpu.dot_dimension_numbers<[1], [0], [0], [1], [0, 0, 1, 1], [], []>} : vector<8x32xf32>, vector<32x32xf32>, vector<8x32xf32> -> vector<8x32xf32>
    %136 = arith.addf %133, %135 : vector<8x32xf32>
    %cst_87 = arith.constant 5.000000e-01 : f32
    %137 = vector.broadcast %cst_87 : f32 to vector<8x32xf32>
    %138 = arith.mulf %137, %136 : vector<8x32xf32>
    %139 = math.tanh %138 : vector<8x32xf32>
    %cst_88 = arith.constant 5.000000e-01 : f32
    %140 = vector.broadcast %cst_88 : f32 to vector<8x32xf32>
    %141 = arith.mulf %140, %139 : vector<8x32xf32>
    %cst_89 = arith.constant 5.000000e-01 : f32
    %142 = vector.broadcast %cst_89 : f32 to vector<8x32xf32>
    %143 = arith.addf %141, %142 : vector<8x32xf32>
    %144 = arith.index_cast %c2_i32 : i32 to index
    %c0_90 = arith.constant 0 : index
    %c0_91 = arith.constant 0 : index
    %145 = vector.load %arg15[%144, %c0_90, %c0_91] : memref<8x8x32xf32, #tpu.memory_space<vmem>>, vector<1x8x32xf32>
    %146 = vector.shape_cast %145 : vector<1x8x32xf32> to vector<8x32xf32>
    %c0_92 = arith.constant 0 : index
    %c0_93 = arith.constant 0 : index
    %147 = vector.load %arg5[%c0_92, %c0_93] : memref<32x32xf32, #tpu.memory_space<vmem>>, vector<32x32xf32>
    %cst_94 = arith.constant dense<0.000000e+00> : vector<8x32xf32>
    %148 = tpu.matmul %126, %147, %cst_94 {dimension_numbers = #tpu.dot_dimension_numbers<[1], [0], [0], [1], [0, 0, 1, 1], [], []>} : vector<8x32xf32>, vector<32x32xf32>, vector<8x32xf32> -> vector<8x32xf32>
    %149 = arith.addf %146, %148 : vector<8x32xf32>
    %cst_95 = arith.constant 5.000000e-01 : f32
    %150 = vector.broadcast %cst_95 : f32 to vector<8x32xf32>
    %151 = arith.mulf %150, %149 : vector<8x32xf32>
    %152 = math.tanh %151 : vector<8x32xf32>
    %cst_96 = arith.constant 5.000000e-01 : f32
    %153 = vector.broadcast %cst_96 : f32 to vector<8x32xf32>
    %154 = arith.mulf %153, %152 : vector<8x32xf32>
    %cst_97 = arith.constant 5.000000e-01 : f32
    %155 = vector.broadcast %cst_97 : f32 to vector<8x32xf32>
    %156 = arith.addf %154, %155 : vector<8x32xf32>
    %157 = arith.index_cast %c2_i32 : i32 to index
    %c0_98 = arith.constant 0 : index
    %c0_99 = arith.constant 0 : index
    %158 = vector.load %arg16[%157, %c0_98, %c0_99] : memref<8x8x32xf32, #tpu.memory_space<vmem>>, vector<1x8x32xf32>
    %159 = vector.shape_cast %158 : vector<1x8x32xf32> to vector<8x32xf32>
    %c0_100 = arith.constant 0 : index
    %c0_101 = arith.constant 0 : index
    %160 = vector.load %arg6[%c0_100, %c0_101] : memref<32x32xf32, #tpu.memory_space<vmem>>, vector<32x32xf32>
    %cst_102 = arith.constant dense<0.000000e+00> : vector<8x32xf32>
    %161 = tpu.matmul %126, %160, %cst_102 {dimension_numbers = #tpu.dot_dimension_numbers<[1], [0], [0], [1], [0, 0, 1, 1], [], []>} : vector<8x32xf32>, vector<32x32xf32>, vector<8x32xf32> -> vector<8x32xf32>
    %162 = arith.addf %159, %161 : vector<8x32xf32>
    %cst_103 = arith.constant 5.000000e-01 : f32
    %163 = vector.broadcast %cst_103 : f32 to vector<8x32xf32>
    %164 = arith.mulf %163, %162 : vector<8x32xf32>
    %165 = math.tanh %164 : vector<8x32xf32>
    %cst_104 = arith.constant 5.000000e-01 : f32
    %166 = vector.broadcast %cst_104 : f32 to vector<8x32xf32>
    %167 = arith.mulf %166, %165 : vector<8x32xf32>
    %cst_105 = arith.constant 5.000000e-01 : f32
    %168 = vector.broadcast %cst_105 : f32 to vector<8x32xf32>
    %169 = arith.addf %167, %168 : vector<8x32xf32>
    %170 = arith.index_cast %c2_i32 : i32 to index
    %c0_106 = arith.constant 0 : index
    %c0_107 = arith.constant 0 : index
    %171 = vector.load %arg17[%170, %c0_106, %c0_107] : memref<8x8x32xf32, #tpu.memory_space<vmem>>, vector<1x8x32xf32>
    %172 = vector.shape_cast %171 : vector<1x8x32xf32> to vector<8x32xf32>
    %c0_108 = arith.constant 0 : index
    %c0_109 = arith.constant 0 : index
    %173 = vector.load %arg7[%c0_108, %c0_109] : memref<32x32xf32, #tpu.memory_space<vmem>>, vector<32x32xf32>
    %cst_110 = arith.constant dense<0.000000e+00> : vector<8x32xf32>
    %174 = tpu.matmul %126, %173, %cst_110 {dimension_numbers = #tpu.dot_dimension_numbers<[1], [0], [0], [1], [0, 0, 1, 1], [], []>} : vector<8x32xf32>, vector<32x32xf32>, vector<8x32xf32> -> vector<8x32xf32>
    %175 = arith.addf %172, %174 : vector<8x32xf32>
    %176 = math.tanh %175 : vector<8x32xf32>
    %177 = arith.mulf %156, %124 : vector<8x32xf32>
    %178 = arith.mulf %143, %176 : vector<8x32xf32>
    %179 = arith.addf %177, %178 : vector<8x32xf32>
    %180 = math.tanh %179 : vector<8x32xf32>
    %181 = arith.mulf %169, %180 : vector<8x32xf32>
    %182 = arith.index_cast %c2_i32 : i32 to index
    %c0_111 = arith.constant 0 : index
    %c0_112 = arith.constant 0 : index
    %183 = vector.load %arg18[%182, %c0_111, %c0_112] : memref<8x8x32xf32, #tpu.memory_space<vmem>>, vector<1x8x32xf32>
    %184 = vector.shape_cast %183 : vector<1x8x32xf32> to vector<8x32xf32>
    %185 = vector.shape_cast %181 : vector<8x32xf32> to vector<1x8x32xf32>
    tpu.vector_store %arg18[%182, %c0_111, %c0_112], %185 {strides = array<i32>} : memref<8x8x32xf32, #tpu.memory_space<vmem>>, vector<1x8x32xf32>,
    %c3_i32 = arith.constant 3 : i32
    %186 = arith.index_cast %c3_i32 : i32 to index
    %c0_113 = arith.constant 0 : index
    %c0_114 = arith.constant 0 : index
    %187 = vector.load %arg14[%186, %c0_113, %c0_114] : memref<8x8x32xf32, #tpu.memory_space<vmem>>, vector<1x8x32xf32>
    %188 = vector.shape_cast %187 : vector<1x8x32xf32> to vector<8x32xf32>
    %c0_115 = arith.constant 0 : index
    %c0_116 = arith.constant 0 : index
    %189 = vector.load %arg4[%c0_115, %c0_116] : memref<32x32xf32, #tpu.memory_space<vmem>>, vector<32x32xf32>
    %cst_117 = arith.constant dense<0.000000e+00> : vector<8x32xf32>
    %190 = tpu.matmul %181, %189, %cst_117 {dimension_numbers = #tpu.dot_dimension_numbers<[1], [0], [0], [1], [0, 0, 1, 1], [], []>} : vector<8x32xf32>, vector<32x32xf32>, vector<8x32xf32> -> vector<8x32xf32>
    %191 = arith.addf %188, %190 : vector<8x32xf32>
    %cst_118 = arith.constant 5.000000e-01 : f32
    %192 = vector.broadcast %cst_118 : f32 to vector<8x32xf32>
    %193 = arith.mulf %192, %191 : vector<8x32xf32>
    %194 = math.tanh %193 : vector<8x32xf32>
    %cst_119 = arith.constant 5.000000e-01 : f32
    %195 = vector.broadcast %cst_119 : f32 to vector<8x32xf32>
    %196 = arith.mulf %195, %194 : vector<8x32xf32>
    %cst_120 = arith.constant 5.000000e-01 : f32
    %197 = vector.broadcast %cst_120 : f32 to vector<8x32xf32>
    %198 = arith.addf %196, %197 : vector<8x32xf32>
    %199 = arith.index_cast %c3_i32 : i32 to index
    %c0_121 = arith.constant 0 : index
    %c0_122 = arith.constant 0 : index
    %200 = vector.load %arg15[%199, %c0_121, %c0_122] : memref<8x8x32xf32, #tpu.memory_space<vmem>>, vector<1x8x32xf32>
    %201 = vector.shape_cast %200 : vector<1x8x32xf32> to vector<8x32xf32>
    %c0_123 = arith.constant 0 : index
    %c0_124 = arith.constant 0 : index
    %202 = vector.load %arg5[%c0_123, %c0_124] : memref<32x32xf32, #tpu.memory_space<vmem>>, vector<32x32xf32>
    %cst_125 = arith.constant dense<0.000000e+00> : vector<8x32xf32>
    %203 = tpu.matmul %181, %202, %cst_125 {dimension_numbers = #tpu.dot_dimension_numbers<[1], [0], [0], [1], [0, 0, 1, 1], [], []>} : vector<8x32xf32>, vector<32x32xf32>, vector<8x32xf32> -> vector<8x32xf32>
    %204 = arith.addf %201, %203 : vector<8x32xf32>
    %cst_126 = arith.constant 5.000000e-01 : f32
    %205 = vector.broadcast %cst_126 : f32 to vector<8x32xf32>
    %206 = arith.mulf %205, %204 : vector<8x32xf32>
    %207 = math.tanh %206 : vector<8x32xf32>
    %cst_127 = arith.constant 5.000000e-01 : f32
    %208 = vector.broadcast %cst_127 : f32 to vector<8x32xf32>
    %209 = arith.mulf %208, %207 : vector<8x32xf32>
    %cst_128 = arith.constant 5.000000e-01 : f32
    %210 = vector.broadcast %cst_128 : f32 to vector<8x32xf32>
    %211 = arith.addf %209, %210 : vector<8x32xf32>
    %212 = arith.index_cast %c3_i32 : i32 to index
    %c0_129 = arith.constant 0 : index
    %c0_130 = arith.constant 0 : index
    %213 = vector.load %arg16[%212, %c0_129, %c0_130] : memref<8x8x32xf32, #tpu.memory_space<vmem>>, vector<1x8x32xf32>
    %214 = vector.shape_cast %213 : vector<1x8x32xf32> to vector<8x32xf32>
    %c0_131 = arith.constant 0 : index
    %c0_132 = arith.constant 0 : index
    %215 = vector.load %arg6[%c0_131, %c0_132] : memref<32x32xf32, #tpu.memory_space<vmem>>, vector<32x32xf32>
    %cst_133 = arith.constant dense<0.000000e+00> : vector<8x32xf32>
    %216 = tpu.matmul %181, %215, %cst_133 {dimension_numbers = #tpu.dot_dimension_numbers<[1], [0], [0], [1], [0, 0, 1, 1], [], []>} : vector<8x32xf32>, vector<32x32xf32>, vector<8x32xf32> -> vector<8x32xf32>
    %217 = arith.addf %214, %216 : vector<8x32xf32>
    %cst_134 = arith.constant 5.000000e-01 : f32
    %218 = vector.broadcast %cst_134 : f32 to vector<8x32xf32>
    %219 = arith.mulf %218, %217 : vector<8x32xf32>
    %220 = math.tanh %219 : vector<8x32xf32>
    %cst_135 = arith.constant 5.000000e-01 : f32
    %221 = vector.broadcast %cst_135 : f32 to vector<8x32xf32>
    %222 = arith.mulf %221, %220 : vector<8x32xf32>
    %cst_136 = arith.constant 5.000000e-01 : f32
    %223 = vector.broadcast %cst_136 : f32 to vector<8x32xf32>
    %224 = arith.addf %222, %223 : vector<8x32xf32>
    %225 = arith.index_cast %c3_i32 : i32 to index
    %c0_137 = arith.constant 0 : index
    %c0_138 = arith.constant 0 : index
    %226 = vector.load %arg17[%225, %c0_137, %c0_138] : memref<8x8x32xf32, #tpu.memory_space<vmem>>, vector<1x8x32xf32>
    %227 = vector.shape_cast %226 : vector<1x8x32xf32> to vector<8x32xf32>
    %c0_139 = arith.constant 0 : index
    %c0_140 = arith.constant 0 : index
    %228 = vector.load %arg7[%c0_139, %c0_140] : memref<32x32xf32, #tpu.memory_space<vmem>>, vector<32x32xf32>
    %cst_141 = arith.constant dense<0.000000e+00> : vector<8x32xf32>
    %229 = tpu.matmul %181, %228, %cst_141 {dimension_numbers = #tpu.dot_dimension_numbers<[1], [0], [0], [1], [0, 0, 1, 1], [], []>} : vector<8x32xf32>, vector<32x32xf32>, vector<8x32xf32> -> vector<8x32xf32>
    %230 = arith.addf %227, %229 : vector<8x32xf32>
    %231 = math.tanh %230 : vector<8x32xf32>
    %232 = arith.mulf %211, %179 : vector<8x32xf32>
    %233 = arith.mulf %198, %231 : vector<8x32xf32>
    %234 = arith.addf %232, %233 : vector<8x32xf32>
    %235 = math.tanh %234 : vector<8x32xf32>
    %236 = arith.mulf %224, %235 : vector<8x32xf32>
    %237 = arith.index_cast %c3_i32 : i32 to index
    %c0_142 = arith.constant 0 : index
    %c0_143 = arith.constant 0 : index
    %238 = vector.load %arg18[%237, %c0_142, %c0_143] : memref<8x8x32xf32, #tpu.memory_space<vmem>>, vector<1x8x32xf32>
    %239 = vector.shape_cast %238 : vector<1x8x32xf32> to vector<8x32xf32>
    %240 = vector.shape_cast %236 : vector<8x32xf32> to vector<1x8x32xf32>
    tpu.vector_store %arg18[%237, %c0_142, %c0_143], %240 {strides = array<i32>} : memref<8x8x32xf32, #tpu.memory_space<vmem>>, vector<1x8x32xf32>,
    %c4_i32 = arith.constant 4 : i32
    %241 = arith.index_cast %c4_i32 : i32 to index
    %c0_144 = arith.constant 0 : index
    %c0_145 = arith.constant 0 : index
    %242 = vector.load %arg14[%241, %c0_144, %c0_145] : memref<8x8x32xf32, #tpu.memory_space<vmem>>, vector<1x8x32xf32>
    %243 = vector.shape_cast %242 : vector<1x8x32xf32> to vector<8x32xf32>
    %c0_146 = arith.constant 0 : index
    %c0_147 = arith.constant 0 : index
    %244 = vector.load %arg4[%c0_146, %c0_147] : memref<32x32xf32, #tpu.memory_space<vmem>>, vector<32x32xf32>
    %cst_148 = arith.constant dense<0.000000e+00> : vector<8x32xf32>
    %245 = tpu.matmul %236, %244, %cst_148 {dimension_numbers = #tpu.dot_dimension_numbers<[1], [0], [0], [1], [0, 0, 1, 1], [], []>} : vector<8x32xf32>, vector<32x32xf32>, vector<8x32xf32> -> vector<8x32xf32>
    %246 = arith.addf %243, %245 : vector<8x32xf32>
    %cst_149 = arith.constant 5.000000e-01 : f32
    %247 = vector.broadcast %cst_149 : f32 to vector<8x32xf32>
    %248 = arith.mulf %247, %246 : vector<8x32xf32>
    %249 = math.tanh %248 : vector<8x32xf32>
    %cst_150 = arith.constant 5.000000e-01 : f32
    %250 = vector.broadcast %cst_150 : f32 to vector<8x32xf32>
    %251 = arith.mulf %250, %249 : vector<8x32xf32>
    %cst_151 = arith.constant 5.000000e-01 : f32
    %252 = vector.broadcast %cst_151 : f32 to vector<8x32xf32>
    %253 = arith.addf %251, %252 : vector<8x32xf32>
    %254 = arith.index_cast %c4_i32 : i32 to index
    %c0_152 = arith.constant 0 : index
    %c0_153 = arith.constant 0 : index
    %255 = vector.load %arg15[%254, %c0_152, %c0_153] : memref<8x8x32xf32, #tpu.memory_space<vmem>>, vector<1x8x32xf32>
    %256 = vector.shape_cast %255 : vector<1x8x32xf32> to vector<8x32xf32>
    %c0_154 = arith.constant 0 : index
    %c0_155 = arith.constant 0 : index
    %257 = vector.load %arg5[%c0_154, %c0_155] : memref<32x32xf32, #tpu.memory_space<vmem>>, vector<32x32xf32>
    %cst_156 = arith.constant dense<0.000000e+00> : vector<8x32xf32>
    %258 = tpu.matmul %236, %257, %cst_156 {dimension_numbers = #tpu.dot_dimension_numbers<[1], [0], [0], [1], [0, 0, 1, 1], [], []>} : vector<8x32xf32>, vector<32x32xf32>, vector<8x32xf32> -> vector<8x32xf32>
    %259 = arith.addf %256, %258 : vector<8x32xf32>
    %cst_157 = arith.constant 5.000000e-01 : f32
    %260 = vector.broadcast %cst_157 : f32 to vector<8x32xf32>
    %261 = arith.mulf %260, %259 : vector<8x32xf32>
    %262 = math.tanh %261 : vector<8x32xf32>
    %cst_158 = arith.constant 5.000000e-01 : f32
    %263 = vector.broadcast %cst_158 : f32 to vector<8x32xf32>
    %264 = arith.mulf %263, %262 : vector<8x32xf32>
    %cst_159 = arith.constant 5.000000e-01 : f32
    %265 = vector.broadcast %cst_159 : f32 to vector<8x32xf32>
    %266 = arith.addf %264, %265 : vector<8x32xf32>
    %267 = arith.index_cast %c4_i32 : i32 to index
    %c0_160 = arith.constant 0 : index
    %c0_161 = arith.constant 0 : index
    %268 = vector.load %arg16[%267, %c0_160, %c0_161] : memref<8x8x32xf32, #tpu.memory_space<vmem>>, vector<1x8x32xf32>
    %269 = vector.shape_cast %268 : vector<1x8x32xf32> to vector<8x32xf32>
    %c0_162 = arith.constant 0 : index
    %c0_163 = arith.constant 0 : index
    %270 = vector.load %arg6[%c0_162, %c0_163] : memref<32x32xf32, #tpu.memory_space<vmem>>, vector<32x32xf32>
    %cst_164 = arith.constant dense<0.000000e+00> : vector<8x32xf32>
    %271 = tpu.matmul %236, %270, %cst_164 {dimension_numbers = #tpu.dot_dimension_numbers<[1], [0], [0], [1], [0, 0, 1, 1], [], []>} : vector<8x32xf32>, vector<32x32xf32>, vector<8x32xf32> -> vector<8x32xf32>
    %272 = arith.addf %269, %271 : vector<8x32xf32>
    %cst_165 = arith.constant 5.000000e-01 : f32
    %273 = vector.broadcast %cst_165 : f32 to vector<8x32xf32>
    %274 = arith.mulf %273, %272 : vector<8x32xf32>
    %275 = math.tanh %274 : vector<8x32xf32>
    %cst_166 = arith.constant 5.000000e-01 : f32
    %276 = vector.broadcast %cst_166 : f32 to vector<8x32xf32>
    %277 = arith.mulf %276, %275 : vector<8x32xf32>
    %cst_167 = arith.constant 5.000000e-01 : f32
    %278 = vector.broadcast %cst_167 : f32 to vector<8x32xf32>
    %279 = arith.addf %277, %278 : vector<8x32xf32>
    %280 = arith.index_cast %c4_i32 : i32 to index
    %c0_168 = arith.constant 0 : index
    %c0_169 = arith.constant 0 : index
    %281 = vector.load %arg17[%280, %c0_168, %c0_169] : memref<8x8x32xf32, #tpu.memory_space<vmem>>, vector<1x8x32xf32>
    %282 = vector.shape_cast %281 : vector<1x8x32xf32> to vector<8x32xf32>
    %c0_170 = arith.constant 0 : index
    %c0_171 = arith.constant 0 : index
    %283 = vector.load %arg7[%c0_170, %c0_171] : memref<32x32xf32, #tpu.memory_space<vmem>>, vector<32x32xf32>
    %cst_172 = arith.constant dense<0.000000e+00> : vector<8x32xf32>
    %284 = tpu.matmul %236, %283, %cst_172 {dimension_numbers = #tpu.dot_dimension_numbers<[1], [0], [0], [1], [0, 0, 1, 1], [], []>} : vector<8x32xf32>, vector<32x32xf32>, vector<8x32xf32> -> vector<8x32xf32>
    %285 = arith.addf %282, %284 : vector<8x32xf32>
    %286 = math.tanh %285 : vector<8x32xf32>
    %287 = arith.mulf %266, %234 : vector<8x32xf32>
    %288 = arith.mulf %253, %286 : vector<8x32xf32>
    %289 = arith.addf %287, %288 : vector<8x32xf32>
    %290 = math.tanh %289 : vector<8x32xf32>
    %291 = arith.mulf %279, %290 : vector<8x32xf32>
    %292 = arith.index_cast %c4_i32 : i32 to index
    %c0_173 = arith.constant 0 : index
    %c0_174 = arith.constant 0 : index
    %293 = vector.load %arg18[%292, %c0_173, %c0_174] : memref<8x8x32xf32, #tpu.memory_space<vmem>>, vector<1x8x32xf32>
    %294 = vector.shape_cast %293 : vector<1x8x32xf32> to vector<8x32xf32>
    %295 = vector.shape_cast %291 : vector<8x32xf32> to vector<1x8x32xf32>
    tpu.vector_store %arg18[%292, %c0_173, %c0_174], %295 {strides = array<i32>} : memref<8x8x32xf32, #tpu.memory_space<vmem>>, vector<1x8x32xf32>,
    %c5_i32 = arith.constant 5 : i32
    %296 = arith.index_cast %c5_i32 : i32 to index
    %c0_175 = arith.constant 0 : index
    %c0_176 = arith.constant 0 : index
    %297 = vector.load %arg14[%296, %c0_175, %c0_176] : memref<8x8x32xf32, #tpu.memory_space<vmem>>, vector<1x8x32xf32>
    %298 = vector.shape_cast %297 : vector<1x8x32xf32> to vector<8x32xf32>
    %c0_177 = arith.constant 0 : index
    %c0_178 = arith.constant 0 : index
    %299 = vector.load %arg4[%c0_177, %c0_178] : memref<32x32xf32, #tpu.memory_space<vmem>>, vector<32x32xf32>
    %cst_179 = arith.constant dense<0.000000e+00> : vector<8x32xf32>
    %300 = tpu.matmul %291, %299, %cst_179 {dimension_numbers = #tpu.dot_dimension_numbers<[1], [0], [0], [1], [0, 0, 1, 1], [], []>} : vector<8x32xf32>, vector<32x32xf32>, vector<8x32xf32> -> vector<8x32xf32>
    %301 = arith.addf %298, %300 : vector<8x32xf32>
    %cst_180 = arith.constant 5.000000e-01 : f32
    %302 = vector.broadcast %cst_180 : f32 to vector<8x32xf32>
    %303 = arith.mulf %302, %301 : vector<8x32xf32>
    %304 = math.tanh %303 : vector<8x32xf32>
    %cst_181 = arith.constant 5.000000e-01 : f32
    %305 = vector.broadcast %cst_181 : f32 to vector<8x32xf32>
    %306 = arith.mulf %305, %304 : vector<8x32xf32>
    %cst_182 = arith.constant 5.000000e-01 : f32
    %307 = vector.broadcast %cst_182 : f32 to vector<8x32xf32>
    %308 = arith.addf %306, %307 : vector<8x32xf32>
    %309 = arith.index_cast %c5_i32 : i32 to index
    %c0_183 = arith.constant 0 : index
    %c0_184 = arith.constant 0 : index
    %310 = vector.load %arg15[%309, %c0_183, %c0_184] : memref<8x8x32xf32, #tpu.memory_space<vmem>>, vector<1x8x32xf32>
    %311 = vector.shape_cast %310 : vector<1x8x32xf32> to vector<8x32xf32>
    %c0_185 = arith.constant 0 : index
    %c0_186 = arith.constant 0 : index
    %312 = vector.load %arg5[%c0_185, %c0_186] : memref<32x32xf32, #tpu.memory_space<vmem>>, vector<32x32xf32>
    %cst_187 = arith.constant dense<0.000000e+00> : vector<8x32xf32>
    %313 = tpu.matmul %291, %312, %cst_187 {dimension_numbers = #tpu.dot_dimension_numbers<[1], [0], [0], [1], [0, 0, 1, 1], [], []>} : vector<8x32xf32>, vector<32x32xf32>, vector<8x32xf32> -> vector<8x32xf32>
    %314 = arith.addf %311, %313 : vector<8x32xf32>
    %cst_188 = arith.constant 5.000000e-01 : f32
    %315 = vector.broadcast %cst_188 : f32 to vector<8x32xf32>
    %316 = arith.mulf %315, %314 : vector<8x32xf32>
    %317 = math.tanh %316 : vector<8x32xf32>
    %cst_189 = arith.constant 5.000000e-01 : f32
    %318 = vector.broadcast %cst_189 : f32 to vector<8x32xf32>
    %319 = arith.mulf %318, %317 : vector<8x32xf32>
    %cst_190 = arith.constant 5.000000e-01 : f32
    %320 = vector.broadcast %cst_190 : f32 to vector<8x32xf32>
    %321 = arith.addf %319, %320 : vector<8x32xf32>
    %322 = arith.index_cast %c5_i32 : i32 to index
    %c0_191 = arith.constant 0 : index
    %c0_192 = arith.constant 0 : index
    %323 = vector.load %arg16[%322, %c0_191, %c0_192] : memref<8x8x32xf32, #tpu.memory_space<vmem>>, vector<1x8x32xf32>
    %324 = vector.shape_cast %323 : vector<1x8x32xf32> to vector<8x32xf32>
    %c0_193 = arith.constant 0 : index
    %c0_194 = arith.constant 0 : index
    %325 = vector.load %arg6[%c0_193, %c0_194] : memref<32x32xf32, #tpu.memory_space<vmem>>, vector<32x32xf32>
    %cst_195 = arith.constant dense<0.000000e+00> : vector<8x32xf32>
    %326 = tpu.matmul %291, %325, %cst_195 {dimension_numbers = #tpu.dot_dimension_numbers<[1], [0], [0], [1], [0, 0, 1, 1], [], []>} : vector<8x32xf32>, vector<32x32xf32>, vector<8x32xf32> -> vector<8x32xf32>
    %327 = arith.addf %324, %326 : vector<8x32xf32>
    %cst_196 = arith.constant 5.000000e-01 : f32
    %328 = vector.broadcast %cst_196 : f32 to vector<8x32xf32>
    %329 = arith.mulf %328, %327 : vector<8x32xf32>
    %330 = math.tanh %329 : vector<8x32xf32>
    %cst_197 = arith.constant 5.000000e-01 : f32
    %331 = vector.broadcast %cst_197 : f32 to vector<8x32xf32>
    %332 = arith.mulf %331, %330 : vector<8x32xf32>
    %cst_198 = arith.constant 5.000000e-01 : f32
    %333 = vector.broadcast %cst_198 : f32 to vector<8x32xf32>
    %334 = arith.addf %332, %333 : vector<8x32xf32>
    %335 = arith.index_cast %c5_i32 : i32 to index
    %c0_199 = arith.constant 0 : index
    %c0_200 = arith.constant 0 : index
    %336 = vector.load %arg17[%335, %c0_199, %c0_200] : memref<8x8x32xf32, #tpu.memory_space<vmem>>, vector<1x8x32xf32>
    %337 = vector.shape_cast %336 : vector<1x8x32xf32> to vector<8x32xf32>
    %c0_201 = arith.constant 0 : index
    %c0_202 = arith.constant 0 : index
    %338 = vector.load %arg7[%c0_201, %c0_202] : memref<32x32xf32, #tpu.memory_space<vmem>>, vector<32x32xf32>
    %cst_203 = arith.constant dense<0.000000e+00> : vector<8x32xf32>
    %339 = tpu.matmul %291, %338, %cst_203 {dimension_numbers = #tpu.dot_dimension_numbers<[1], [0], [0], [1], [0, 0, 1, 1], [], []>} : vector<8x32xf32>, vector<32x32xf32>, vector<8x32xf32> -> vector<8x32xf32>
    %340 = arith.addf %337, %339 : vector<8x32xf32>
    %341 = math.tanh %340 : vector<8x32xf32>
    %342 = arith.mulf %321, %289 : vector<8x32xf32>
    %343 = arith.mulf %308, %341 : vector<8x32xf32>
    %344 = arith.addf %342, %343 : vector<8x32xf32>
    %345 = math.tanh %344 : vector<8x32xf32>
    %346 = arith.mulf %334, %345 : vector<8x32xf32>
    %347 = arith.index_cast %c5_i32 : i32 to index
    %c0_204 = arith.constant 0 : index
    %c0_205 = arith.constant 0 : index
    %348 = vector.load %arg18[%347, %c0_204, %c0_205] : memref<8x8x32xf32, #tpu.memory_space<vmem>>, vector<1x8x32xf32>
    %349 = vector.shape_cast %348 : vector<1x8x32xf32> to vector<8x32xf32>
    %350 = vector.shape_cast %346 : vector<8x32xf32> to vector<1x8x32xf32>
    tpu.vector_store %arg18[%347, %c0_204, %c0_205], %350 {strides = array<i32>} : memref<8x8x32xf32, #tpu.memory_space<vmem>>, vector<1x8x32xf32>,
    %c6_i32 = arith.constant 6 : i32
    %351 = arith.index_cast %c6_i32 : i32 to index
    %c0_206 = arith.constant 0 : index
    %c0_207 = arith.constant 0 : index
    %352 = vector.load %arg14[%351, %c0_206, %c0_207] : memref<8x8x32xf32, #tpu.memory_space<vmem>>, vector<1x8x32xf32>
    %353 = vector.shape_cast %352 : vector<1x8x32xf32> to vector<8x32xf32>
    %c0_208 = arith.constant 0 : index
    %c0_209 = arith.constant 0 : index
    %354 = vector.load %arg4[%c0_208, %c0_209] : memref<32x32xf32, #tpu.memory_space<vmem>>, vector<32x32xf32>
    %cst_210 = arith.constant dense<0.000000e+00> : vector<8x32xf32>
    %355 = tpu.matmul %346, %354, %cst_210 {dimension_numbers = #tpu.dot_dimension_numbers<[1], [0], [0], [1], [0, 0, 1, 1], [], []>} : vector<8x32xf32>, vector<32x32xf32>, vector<8x32xf32> -> vector<8x32xf32>
    %356 = arith.addf %353, %355 : vector<8x32xf32>
    %cst_211 = arith.constant 5.000000e-01 : f32
    %357 = vector.broadcast %cst_211 : f32 to vector<8x32xf32>
    %358 = arith.mulf %357, %356 : vector<8x32xf32>
    %359 = math.tanh %358 : vector<8x32xf32>
    %cst_212 = arith.constant 5.000000e-01 : f32
    %360 = vector.broadcast %cst_212 : f32 to vector<8x32xf32>
    %361 = arith.mulf %360, %359 : vector<8x32xf32>
    %cst_213 = arith.constant 5.000000e-01 : f32
    %362 = vector.broadcast %cst_213 : f32 to vector<8x32xf32>
    %363 = arith.addf %361, %362 : vector<8x32xf32>
    %364 = arith.index_cast %c6_i32 : i32 to index
    %c0_214 = arith.constant 0 : index
    %c0_215 = arith.constant 0 : index
    %365 = vector.load %arg15[%364, %c0_214, %c0_215] : memref<8x8x32xf32, #tpu.memory_space<vmem>>, vector<1x8x32xf32>
    %366 = vector.shape_cast %365 : vector<1x8x32xf32> to vector<8x32xf32>
    %c0_216 = arith.constant 0 : index
    %c0_217 = arith.constant 0 : index
    %367 = vector.load %arg5[%c0_216, %c0_217] : memref<32x32xf32, #tpu.memory_space<vmem>>, vector<32x32xf32>
    %cst_218 = arith.constant dense<0.000000e+00> : vector<8x32xf32>
    %368 = tpu.matmul %346, %367, %cst_218 {dimension_numbers = #tpu.dot_dimension_numbers<[1], [0], [0], [1], [0, 0, 1, 1], [], []>} : vector<8x32xf32>, vector<32x32xf32>, vector<8x32xf32> -> vector<8x32xf32>
    %369 = arith.addf %366, %368 : vector<8x32xf32>
    %cst_219 = arith.constant 5.000000e-01 : f32
    %370 = vector.broadcast %cst_219 : f32 to vector<8x32xf32>
    %371 = arith.mulf %370, %369 : vector<8x32xf32>
    %372 = math.tanh %371 : vector<8x32xf32>
    %cst_220 = arith.constant 5.000000e-01 : f32
    %373 = vector.broadcast %cst_220 : f32 to vector<8x32xf32>
    %374 = arith.mulf %373, %372 : vector<8x32xf32>
    %cst_221 = arith.constant 5.000000e-01 : f32
    %375 = vector.broadcast %cst_221 : f32 to vector<8x32xf32>
    %376 = arith.addf %374, %375 : vector<8x32xf32>
    %377 = arith.index_cast %c6_i32 : i32 to index
    %c0_222 = arith.constant 0 : index
    %c0_223 = arith.constant 0 : index
    %378 = vector.load %arg16[%377, %c0_222, %c0_223] : memref<8x8x32xf32, #tpu.memory_space<vmem>>, vector<1x8x32xf32>
    %379 = vector.shape_cast %378 : vector<1x8x32xf32> to vector<8x32xf32>
    %c0_224 = arith.constant 0 : index
    %c0_225 = arith.constant 0 : index
    %380 = vector.load %arg6[%c0_224, %c0_225] : memref<32x32xf32, #tpu.memory_space<vmem>>, vector<32x32xf32>
    %cst_226 = arith.constant dense<0.000000e+00> : vector<8x32xf32>
    %381 = tpu.matmul %346, %380, %cst_226 {dimension_numbers = #tpu.dot_dimension_numbers<[1], [0], [0], [1], [0, 0, 1, 1], [], []>} : vector<8x32xf32>, vector<32x32xf32>, vector<8x32xf32> -> vector<8x32xf32>
    %382 = arith.addf %379, %381 : vector<8x32xf32>
    %cst_227 = arith.constant 5.000000e-01 : f32
    %383 = vector.broadcast %cst_227 : f32 to vector<8x32xf32>
    %384 = arith.mulf %383, %382 : vector<8x32xf32>
    %385 = math.tanh %384 : vector<8x32xf32>
    %cst_228 = arith.constant 5.000000e-01 : f32
    %386 = vector.broadcast %cst_228 : f32 to vector<8x32xf32>
    %387 = arith.mulf %386, %385 : vector<8x32xf32>
    %cst_229 = arith.constant 5.000000e-01 : f32
    %388 = vector.broadcast %cst_229 : f32 to vector<8x32xf32>
    %389 = arith.addf %387, %388 : vector<8x32xf32>
    %390 = arith.index_cast %c6_i32 : i32 to index
    %c0_230 = arith.constant 0 : index
    %c0_231 = arith.constant 0 : index
    %391 = vector.load %arg17[%390, %c0_230, %c0_231] : memref<8x8x32xf32, #tpu.memory_space<vmem>>, vector<1x8x32xf32>
    %392 = vector.shape_cast %391 : vector<1x8x32xf32> to vector<8x32xf32>
    %c0_232 = arith.constant 0 : index
    %c0_233 = arith.constant 0 : index
    %393 = vector.load %arg7[%c0_232, %c0_233] : memref<32x32xf32, #tpu.memory_space<vmem>>, vector<32x32xf32>
    %cst_234 = arith.constant dense<0.000000e+00> : vector<8x32xf32>
    %394 = tpu.matmul %346, %393, %cst_234 {dimension_numbers = #tpu.dot_dimension_numbers<[1], [0], [0], [1], [0, 0, 1, 1], [], []>} : vector<8x32xf32>, vector<32x32xf32>, vector<8x32xf32> -> vector<8x32xf32>
    %395 = arith.addf %392, %394 : vector<8x32xf32>
    %396 = math.tanh %395 : vector<8x32xf32>
    %397 = arith.mulf %376, %344 : vector<8x32xf32>
    %398 = arith.mulf %363, %396 : vector<8x32xf32>
    %399 = arith.addf %397, %398 : vector<8x32xf32>
    %400 = math.tanh %399 : vector<8x32xf32>
    %401 = arith.mulf %389, %400 : vector<8x32xf32>
    %402 = arith.index_cast %c6_i32 : i32 to index
    %c0_235 = arith.constant 0 : index
    %c0_236 = arith.constant 0 : index
    %403 = vector.load %arg18[%402, %c0_235, %c0_236] : memref<8x8x32xf32, #tpu.memory_space<vmem>>, vector<1x8x32xf32>
    %404 = vector.shape_cast %403 : vector<1x8x32xf32> to vector<8x32xf32>
    %405 = vector.shape_cast %401 : vector<8x32xf32> to vector<1x8x32xf32>
    tpu.vector_store %arg18[%402, %c0_235, %c0_236], %405 {strides = array<i32>} : memref<8x8x32xf32, #tpu.memory_space<vmem>>, vector<1x8x32xf32>,
    %c7_i32 = arith.constant 7 : i32
    %406 = arith.index_cast %c7_i32 : i32 to index
    %c0_237 = arith.constant 0 : index
    %c0_238 = arith.constant 0 : index
    %407 = vector.load %arg14[%406, %c0_237, %c0_238] : memref<8x8x32xf32, #tpu.memory_space<vmem>>, vector<1x8x32xf32>
    %408 = vector.shape_cast %407 : vector<1x8x32xf32> to vector<8x32xf32>
    %c0_239 = arith.constant 0 : index
    %c0_240 = arith.constant 0 : index
    %409 = vector.load %arg4[%c0_239, %c0_240] : memref<32x32xf32, #tpu.memory_space<vmem>>, vector<32x32xf32>
    %cst_241 = arith.constant dense<0.000000e+00> : vector<8x32xf32>
    %410 = tpu.matmul %401, %409, %cst_241 {dimension_numbers = #tpu.dot_dimension_numbers<[1], [0], [0], [1], [0, 0, 1, 1], [], []>} : vector<8x32xf32>, vector<32x32xf32>, vector<8x32xf32> -> vector<8x32xf32>
    %411 = arith.addf %408, %410 : vector<8x32xf32>
    %cst_242 = arith.constant 5.000000e-01 : f32
    %412 = vector.broadcast %cst_242 : f32 to vector<8x32xf32>
    %413 = arith.mulf %412, %411 : vector<8x32xf32>
    %414 = math.tanh %413 : vector<8x32xf32>
    %cst_243 = arith.constant 5.000000e-01 : f32
    %415 = vector.broadcast %cst_243 : f32 to vector<8x32xf32>
    %416 = arith.mulf %415, %414 : vector<8x32xf32>
    %cst_244 = arith.constant 5.000000e-01 : f32
    %417 = vector.broadcast %cst_244 : f32 to vector<8x32xf32>
    %418 = arith.addf %416, %417 : vector<8x32xf32>
    %419 = arith.index_cast %c7_i32 : i32 to index
    %c0_245 = arith.constant 0 : index
    %c0_246 = arith.constant 0 : index
    %420 = vector.load %arg15[%419, %c0_245, %c0_246] : memref<8x8x32xf32, #tpu.memory_space<vmem>>, vector<1x8x32xf32>
    %421 = vector.shape_cast %420 : vector<1x8x32xf32> to vector<8x32xf32>
    %c0_247 = arith.constant 0 : index
    %c0_248 = arith.constant 0 : index
    %422 = vector.load %arg5[%c0_247, %c0_248] : memref<32x32xf32, #tpu.memory_space<vmem>>, vector<32x32xf32>
    %cst_249 = arith.constant dense<0.000000e+00> : vector<8x32xf32>
    %423 = tpu.matmul %401, %422, %cst_249 {dimension_numbers = #tpu.dot_dimension_numbers<[1], [0], [0], [1], [0, 0, 1, 1], [], []>} : vector<8x32xf32>, vector<32x32xf32>, vector<8x32xf32> -> vector<8x32xf32>
    %424 = arith.addf %421, %423 : vector<8x32xf32>
    %cst_250 = arith.constant 5.000000e-01 : f32
    %425 = vector.broadcast %cst_250 : f32 to vector<8x32xf32>
    %426 = arith.mulf %425, %424 : vector<8x32xf32>
    %427 = math.tanh %426 : vector<8x32xf32>
    %cst_251 = arith.constant 5.000000e-01 : f32
    %428 = vector.broadcast %cst_251 : f32 to vector<8x32xf32>
    %429 = arith.mulf %428, %427 : vector<8x32xf32>
    %cst_252 = arith.constant 5.000000e-01 : f32
    %430 = vector.broadcast %cst_252 : f32 to vector<8x32xf32>
    %431 = arith.addf %429, %430 : vector<8x32xf32>
    %432 = arith.index_cast %c7_i32 : i32 to index
    %c0_253 = arith.constant 0 : index
    %c0_254 = arith.constant 0 : index
    %433 = vector.load %arg16[%432, %c0_253, %c0_254] : memref<8x8x32xf32, #tpu.memory_space<vmem>>, vector<1x8x32xf32>
    %434 = vector.shape_cast %433 : vector<1x8x32xf32> to vector<8x32xf32>
    %c0_255 = arith.constant 0 : index
    %c0_256 = arith.constant 0 : index
    %435 = vector.load %arg6[%c0_255, %c0_256] : memref<32x32xf32, #tpu.memory_space<vmem>>, vector<32x32xf32>
    %cst_257 = arith.constant dense<0.000000e+00> : vector<8x32xf32>
    %436 = tpu.matmul %401, %435, %cst_257 {dimension_numbers = #tpu.dot_dimension_numbers<[1], [0], [0], [1], [0, 0, 1, 1], [], []>} : vector<8x32xf32>, vector<32x32xf32>, vector<8x32xf32> -> vector<8x32xf32>
    %437 = arith.addf %434, %436 : vector<8x32xf32>
    %cst_258 = arith.constant 5.000000e-01 : f32
    %438 = vector.broadcast %cst_258 : f32 to vector<8x32xf32>
    %439 = arith.mulf %438, %437 : vector<8x32xf32>
    %440 = math.tanh %439 : vector<8x32xf32>
    %cst_259 = arith.constant 5.000000e-01 : f32
    %441 = vector.broadcast %cst_259 : f32 to vector<8x32xf32>
    %442 = arith.mulf %441, %440 : vector<8x32xf32>
    %cst_260 = arith.constant 5.000000e-01 : f32
    %443 = vector.broadcast %cst_260 : f32 to vector<8x32xf32>
    %444 = arith.addf %442, %443 : vector<8x32xf32>
    %445 = arith.index_cast %c7_i32 : i32 to index
    %c0_261 = arith.constant 0 : index
    %c0_262 = arith.constant 0 : index
    %446 = vector.load %arg17[%445, %c0_261, %c0_262] : memref<8x8x32xf32, #tpu.memory_space<vmem>>, vector<1x8x32xf32>
    %447 = vector.shape_cast %446 : vector<1x8x32xf32> to vector<8x32xf32>
    %c0_263 = arith.constant 0 : index
    %c0_264 = arith.constant 0 : index
    %448 = vector.load %arg7[%c0_263, %c0_264] : memref<32x32xf32, #tpu.memory_space<vmem>>, vector<32x32xf32>
    %cst_265 = arith.constant dense<0.000000e+00> : vector<8x32xf32>
    %449 = tpu.matmul %401, %448, %cst_265 {dimension_numbers = #tpu.dot_dimension_numbers<[1], [0], [0], [1], [0, 0, 1, 1], [], []>} : vector<8x32xf32>, vector<32x32xf32>, vector<8x32xf32> -> vector<8x32xf32>
    %450 = arith.addf %447, %449 : vector<8x32xf32>
    %451 = math.tanh %450 : vector<8x32xf32>
    %452 = arith.mulf %431, %399 : vector<8x32xf32>
    %453 = arith.mulf %418, %451 : vector<8x32xf32>
    %454 = arith.addf %452, %453 : vector<8x32xf32>
    %455 = math.tanh %454 : vector<8x32xf32>
    %456 = arith.mulf %444, %455 : vector<8x32xf32>
    %457 = arith.index_cast %c7_i32 : i32 to index
    %c0_266 = arith.constant 0 : index
    %c0_267 = arith.constant 0 : index
    %458 = vector.load %arg18[%457, %c0_266, %c0_267] : memref<8x8x32xf32, #tpu.memory_space<vmem>>, vector<1x8x32xf32>
    %459 = vector.shape_cast %458 : vector<1x8x32xf32> to vector<8x32xf32>
    %460 = vector.shape_cast %456 : vector<8x32xf32> to vector<1x8x32xf32>
    tpu.vector_store %arg18[%457, %c0_266, %c0_267], %460 {strides = array<i32>} : memref<8x8x32xf32, #tpu.memory_space<vmem>>, vector<1x8x32xf32>,
    %c8_i32 = arith.constant 8 : i32
    %c0_268 = arith.constant 0 : index
    %c0_269 = arith.constant 0 : index
    %c0_270 = arith.constant 0 : index
    %461 = vector.load %arg18[%c0_268, %c0_269, %c0_270] : memref<8x8x32xf32, #tpu.memory_space<vmem>>, vector<8x8x32xf32>
    %462 = vector.shape_cast %461 : vector<8x8x32xf32> to vector<64x32xf32>
    %c0_271 = arith.constant 0 : index
    %c0_272 = arith.constant 0 : index
    %463 = vector.load %arg9[%c0_271, %c0_272] : memref<32x32xf32, #tpu.memory_space<vmem>>, vector<32x32xf32>
    %cst_273 = arith.constant dense<0.000000e+00> : vector<64x32xf32>
    %464 = tpu.matmul %462, %463, %cst_273 {dimension_numbers = #tpu.dot_dimension_numbers<[1], [0], [0], [1], [0, 0, 1, 1], [], []>} : vector<64x32xf32>, vector<32x32xf32>, vector<64x32xf32> -> vector<64x32xf32>
    %465 = vector.shape_cast %464 : vector<64x32xf32> to vector<8x8x32xf32>
    %c0_274 = arith.constant 0 : index
    %c0_275 = arith.constant 0 : index
    %466 = vector.load %arg8[%c0_274, %c0_275] : memref<32x32xf32, #tpu.memory_space<vmem>>, vector<32x32xf32>
    %cst_276 = arith.constant dense<0.000000e+00> : vector<8x32xf32>
    %467 = tpu.matmul %456, %466, %cst_276 {dimension_numbers = #tpu.dot_dimension_numbers<[1], [0], [0], [1], [0, 0, 1, 1], [], []>} : vector<8x32xf32>, vector<32x32xf32>, vector<8x32xf32> -> vector<8x32xf32>
    %468 = vector.shape_cast %467 : vector<8x32xf32> to vector<1x8x32xf32>
    %469 = vector.broadcast %468 : vector<1x8x32xf32> to vector<8x8x32xf32>
    %470 = arith.addf %465, %469 : vector<8x8x32xf32>
    %471 = math.tanh %470 : vector<8x8x32xf32>
    %c0_277 = arith.constant 0 : index
    %c0_278 = arith.constant 0 : index
    %472 = vector.load %arg10[%c0_277, %c0_278] : memref<1x32xf32, #tpu.memory_space<vmem>>, vector<1x32xf32>
    %473 = vector.shape_cast %472 : vector<1x32xf32> to vector<1x1x32xf32>
    %474 = vector.broadcast %473 : vector<1x1x32xf32> to vector<8x8x32xf32>
    %475 = arith.mulf %471, %474 : vector<8x8x32xf32>
    %cst_279 = arith.constant dense<0.000000e+00> : vector<8x8xf32>
    %476 = vector.multi_reduction <add>, %475, %cst_279 [2] : vector<8x8x32xf32> to vector<8x8xf32>
    %477 = tpu.transpose %476, [1, 0] : vector<8x8xf32> -> vector<8x8xf32>
    %cst_280 = arith.constant dense<0xFF800000> : vector<8xf32>
    %478 = vector.multi_reduction <maximumf>, %477, %cst_280 [1] : vector<8x8xf32> to vector<8xf32>
    %479 = vector.shape_cast %478 : vector<8xf32> to vector<8x1xf32>
    %480 = vector.broadcast %479 : vector<8x1xf32> to vector<8x8xf32>
    %481 = arith.subf %477, %480 : vector<8x8xf32>
    %482 = math.exp %481 : vector<8x8xf32>
    %cst_281 = arith.constant dense<0.000000e+00> : vector<8xf32>
    %483 = vector.multi_reduction <add>, %482, %cst_281 [1] : vector<8x8xf32> to vector<8xf32>
    %484 = vector.shape_cast %483 : vector<8xf32> to vector<8x1xf32>
    %485 = vector.broadcast %484 : vector<8x1xf32> to vector<8x8xf32>
    %486 = arith.divf %482, %485 : vector<8x8xf32>
    %487 = tpu.transpose %486, [1, 0] : vector<8x8xf32> -> vector<8x8xf32>
    %488 = vector.shape_cast %487 : vector<8x8xf32> to vector<8x8x1xf32>
    %489 = vector.broadcast %488 : vector<8x8x1xf32> to vector<8x8x32xf32>
    %490 = arith.mulf %489, %461 : vector<8x8x32xf32>
    %cst_282 = arith.constant dense<0.000000e+00> : vector<8x32xf32>
    %491 = vector.multi_reduction <add>, %490, %cst_282 [0] : vector<8x8x32xf32> to vector<8x32xf32>
    %c0_283 = arith.constant 0 : index
    %c0_284 = arith.constant 0 : index
    %492 = vector.load %arg11[%c0_283, %c0_284] : memref<32x128xf32, #tpu.memory_space<vmem>>, vector<32x128xf32>
    %cst_285 = arith.constant dense<0.000000e+00> : vector<8x128xf32>
    %493 = tpu.matmul %491, %492, %cst_285 {dimension_numbers = #tpu.dot_dimension_numbers<[1], [0], [0], [1], [0, 0, 1, 1], [], []>} : vector<8x32xf32>, vector<32x128xf32>, vector<8x128xf32> -> vector<8x128xf32>
    %c0_286 = arith.constant 0 : index
    %c0_287 = arith.constant 0 : index
    %494 = vector.load %arg12[%c0_286, %c0_287] : memref<1x128xf32, #tpu.memory_space<vmem>>, vector<1x128xf32>
    %495 = vector.broadcast %494 : vector<1x128xf32> to vector<8x128xf32>
    %496 = arith.addf %493, %495 : vector<8x128xf32>
    %c0_288 = arith.constant 0 : index
    %c0_289 = arith.constant 0 : index
    %497 = vector.load %arg13[%c0_288, %c0_289] : memref<8x128xf32, #tpu.memory_space<vmem>>, vector<8x128xf32>
    tpu.vector_store %arg13[%c0_288, %c0_289], %496 {strides = array<i32>} : memref<8x128xf32, #tpu.memory_space<vmem>>, vector<8x128xf32>,
    return
  }
  func.func @transform_0(%arg0: i32) -> (i32, i32, i32) {
    %c0_i32 = arith.constant 0 : i32
    %c0_i32_0 = arith.constant 0 : i32
    %c0_i32_1 = arith.constant 0 : i32
    return %c0_i32, %arg0, %c0_i32_0 : i32, i32, i32
  }
  func.func @transform_1(%arg0: i32) -> (i32, i32) {
    %c0_i32 = arith.constant 0 : i32
    %c0_i32_0 = arith.constant 0 : i32
    %c0_i32_1 = arith.constant 0 : i32
    return %c0_i32, %c0_i32_0 : i32, i32
  }
  func.func @transform_2(%arg0: i32) -> (i32, i32) {
    %c0_i32 = arith.constant 0 : i32
    %c0_i32_0 = arith.constant 0 : i32
    %c0_i32_1 = arith.constant 0 : i32
    return %c0_i32, %c0_i32_0 : i32, i32
  }
  func.func @transform_3(%arg0: i32) -> (i32, i32) {
    %c0_i32 = arith.constant 0 : i32
    %c0_i32_0 = arith.constant 0 : i32
    %c0_i32_1 = arith.constant 0 : i32
    return %c0_i32, %c0_i32_0 : i32, i32
  }
  func.func @transform_4(%arg0: i32) -> (i32, i32) {
    %c0_i32 = arith.constant 0 : i32
    %c0_i32_0 = arith.constant 0 : i32
    %c0_i32_1 = arith.constant 0 : i32
    return %c0_i32, %c0_i32_0 : i32, i32
  }
  func.func @transform_5(%arg0: i32) -> (i32, i32) {
    %c0_i32 = arith.constant 0 : i32
    %c0_i32_0 = arith.constant 0 : i32
    %c0_i32_1 = arith.constant 0 : i32
    return %c0_i32, %c0_i32_0 : i32, i32
  }
  func.func @transform_6(%arg0: i32) -> (i32, i32) {
    %c0_i32 = arith.constant 0 : i32
    %c0_i32_0 = arith.constant 0 : i32
    %c0_i32_1 = arith.constant 0 : i32
    return %c0_i32, %c0_i32_0 : i32, i32
  }
  func.func @transform_7(%arg0: i32) -> (i32, i32) {
    %c0_i32 = arith.constant 0 : i32
    %c0_i32_0 = arith.constant 0 : i32
    %c0_i32_1 = arith.constant 0 : i32
    return %c0_i32, %c0_i32_0 : i32, i32
  }
  func.func @transform_8(%arg0: i32) -> (i32, i32) {
    %c0_i32 = arith.constant 0 : i32
    %c0_i32_0 = arith.constant 0 : i32
    %c0_i32_1 = arith.constant 0 : i32
    return %c0_i32, %c0_i32_0 : i32, i32
  }
  func.func @transform_9(%arg0: i32) -> (i32, i32) {
    %c0_i32 = arith.constant 0 : i32
    %c0_i32_0 = arith.constant 0 : i32
    %c0_i32_1 = arith.constant 0 : i32
    return %c0_i32, %c0_i32_0 : i32, i32
  }
  func.func @transform_10(%arg0: i32) -> (i32, i32) {
    %c0_i32 = arith.constant 0 : i32
    %c0_i32_0 = arith.constant 0 : i32
    %c0_i32_1 = arith.constant 0 : i32
    return %c0_i32, %c0_i32_0 : i32, i32
  }
  func.func @transform_11(%arg0: i32) -> (i32, i32) {
    %c0_i32 = arith.constant 0 : i32
    %c0_i32_0 = arith.constant 0 : i32
    %c0_i32_1 = arith.constant 0 : i32
    return %c0_i32, %c0_i32_0 : i32, i32
  }
  func.func @transform_12(%arg0: i32) -> (i32, i32) {
    %c0_i32 = arith.constant 0 : i32
    %c0_i32_0 = arith.constant 0 : i32
    return %arg0, %c0_i32 : i32, i32
  }
}

</mosaic_0001>

<llo_original>
// kernel: net_forward.1
$region0: #{net_forward.1}
  #allocation0 [shape = 'u32[]', space=smem, size = 0x4, offset = 0x4, fixed_abs, tag = 'smem constant byte address 0x4 - core index']
  #allocation1 [shape = 'u32[144,128]{1,0:T(1,128)}', space=vmem, size = 0x12000, scoped, tag = 'internal scratch']
  #allocation2 [shape = 'f32[8,8,32]{2,1,0:T(8,128)}', space=vmem, size = 0x8000, scoped, tag = 'scratch operand']
  #allocation3 [shape = 'f32[8,8,32]{2,1,0:T(8,128)}', space=vmem, size = 0x8000, scoped, tag = 'scratch operand']
  #allocation4 [shape = 'f32[8,8,32]{2,1,0:T(8,128)}', space=vmem, size = 0x8000, scoped, tag = 'scratch operand']
  #allocation5 [shape = 'f32[8,8,32]{2,1,0:T(8,128)}', space=vmem, size = 0x8000, scoped, tag = 'scratch operand']
  #allocation6 [shape = 'f32[8,8,32]{2,1,0:T(8,128)}', space=vmem, size = 0x8000, scoped, tag = 'scratch operand']
  %s0 = inlined_call_operand.vmem [shape: f32[8,16,32], index: 0, kind: input, shape index: {}]
  %s1 = inlined_call_operand.vmem [shape: f32[32,128], index: 1, kind: input, shape index: {}]
  %s2 = inlined_call_operand.vmem [shape: f32[1,128], index: 2, kind: input, shape index: {}]
  %s3 = inlined_call_operand.vmem [shape: f32[32,32], index: 3, kind: input, shape index: {}]
  %s4 = inlined_call_operand.vmem [shape: f32[32,32], index: 4, kind: input, shape index: {}]
  %s5 = inlined_call_operand.vmem [shape: f32[32,32], index: 5, kind: input, shape index: {}]
  %s6 = inlined_call_operand.vmem [shape: f32[32,32], index: 6, kind: input, shape index: {}]
  %s7 = inlined_call_operand.vmem [shape: f32[32,32], index: 7, kind: input, shape index: {}]
  %s8 = inlined_call_operand.vmem [shape: f32[32,32], index: 8, kind: input, shape index: {}]
  %s9 = inlined_call_operand.vmem [shape: f32[1,32], index: 9, kind: input, shape index: {}]
  %s10 = inlined_call_operand.vmem [shape: f32[32,128], index: 10, kind: input, shape index: {}]
  %s11 = inlined_call_operand.vmem [shape: f32[1,128], index: 11, kind: input, shape index: {}]
  %s12 = inlined_call_operand.vmem [shape: f32[16,128], index: 12, kind: output, shape index: {}]
  %s13 = sld [smem:[#allocation0]]
  $region119: #{net_forward.1} parent=0
    _
  %s15 = ssub.s32 1, %s13
  %s16 = scalar_select 0, %s15, %s13
  $region1: #{net_forward.1} parent=0
    #allocation7 [shape = 'u8[65536]{0}', space=vmem, size = 0x10000, scoped, tag = 'input window, operand 0']
    loop: start=0, step=1, limit=4
    $region2: #{net_forward.1} parent=1 // loop_pre_header
      _
    $region3: #{net_forward.1} parent=1 // loop_header
      %s18 = sphi 0, %s22
      %p19 = scmp.ge.s32.totalorder %s18, 4
      %s28 = sphi 0, %s30
      %s31 = sphi 0, %s28
      %s32 = sphi 0, %s31
      %s48 = sphi 0, %s32
      %s52 = sphi 0, %s52
      %s54 = sphi 0, %s52
      %s55 = sphi 0, %s54
      %s69 = sphi 0, %s55
      %s73 = sphi 0, %s73
      %s75 = sphi 0, %s73
      %s76 = sphi 0, %s75
      %s90 = sphi 0, %s76
      %s94 = sphi 0, %s94
      %s96 = sphi 0, %s94
      %s97 = sphi 0, %s96
      %s111 = sphi 0, %s97
      %s115 = sphi 0, %s115
      %s117 = sphi 0, %s115
      %s118 = sphi 0, %s117
      %s132 = sphi 0, %s118
      %s136 = sphi 0, %s136
      %s138 = sphi 0, %s136
      %s139 = sphi 0, %s138
      %s153 = sphi 0, %s139
      %s157 = sphi 0, %s157
      %s159 = sphi 0, %s157
      %s160 = sphi 0, %s159
      %s174 = sphi 0, %s160
      %s178 = sphi 0, %s178
      %s180 = sphi 0, %s178
      %s181 = sphi 0, %s180
      %s195 = sphi 0, %s181
      %s199 = sphi 0, %s199
      %s201 = sphi 0, %s199
      %s202 = sphi 0, %s201
      %s216 = sphi 0, %s202
      %s220 = sphi 0, %s220
      %s222 = sphi 0, %s220
      %s223 = sphi 0, %s222
      %s237 = sphi 0, %s223
      %s241 = sphi 0, %s241
      %s243 = sphi 0, %s241
      %s244 = sphi 0, %s243
      %s258 = sphi 0, %s244
      %s262 = sphi 0, %s262
      %s264 = sphi 0, %s262
      %s265 = sphi 0, %s264
      %s279 = sphi 0, %s265
      %s285 = sphi 0, %s287
      %s288 = sphi 0, %s285
      %s289 = sphi 0, %s288
      %s305 = sphi 0, %s289
    $region4: #{net_forward.1} parent=1 // loop_header_branch
      %21 = sbr.rel (%p19) target = $region8
    $region5: #{net_forward.1} parent=1 // loop_body
      %s23 = ssub.s32 %s18, 1
      %s24 = ssub.s32 %s18, 2
      %s25 = sadd.s32 %s18, 1
      %s26 = ssub.s32 %s18, %s25
      %p27 = scmp.eq.s32.totalorder %s26, 0
      %s29 = sadd.s32 %s28, 1
      %s30 = scalar_select %p27, %s28, %s29
      %p33 = pneg %p27
      %p34 = scmp.eq.s32.totalorder %s18, 1
      %p35 = por %p33, %p34
      %p36 = scmp.ne.s32.totalorder %s28, %s31
      %p37 = scmp.eq.s32.totalorder %s18, 0
      %p38 = por %p36, %p37
      %p39 = scmp.ne.s32.totalorder %s28, %s31
      %p40 = scmp.eq.s32.totalorder %s23, 1
      %p41 = por %p39, %p40
      %p42 = scmp.ne.s32.totalorder %s31, %s32
      %p43 = scmp.eq.s32.totalorder %s23, 0
      %p44 = por %p42, %p43
      %p45 = scmp.ne.s32.totalorder %s31, %s32
      %p46 = scmp.eq.s32.totalorder %s24, 1
      %p47 = por %p45, %p46
      %p49 = scmp.ne.s32.totalorder %s32, %s48
      %p50 = scmp.eq.s32.totalorder %s24, 0
      %p51 = por %p49, %p50
      %s53 = sadd.s32 %s52, 1
      %p56 = scmp.eq.s32.totalorder %s18, 1
      %p57 = scmp.ne.s32.totalorder %s52, %s54
      %p58 = scmp.eq.s32.totalorder %s18, 0
      %p59 = por %p57, %p58
      %p60 = scmp.ne.s32.totalorder %s52, %s54
      %p61 = scmp.eq.s32.totalorder %s23, 1
      %p62 = por %p60, %p61
      %p63 = scmp.ne.s32.totalorder %s54, %s55
      %p64 = scmp.eq.s32.totalorder %s23, 0
      %p65 = por %p63, %p64
      %p66 = scmp.ne.s32.totalorder %s54, %s55
      %p67 = scmp.eq.s32.totalorder %s24, 1
      %p68 = por %p66, %p67
      %p70 = scmp.ne.s32.totalorder %s55, %s69
      %p71 = scmp.eq.s32.totalorder %s24, 0
      %p72 = por %p70, %p71
      %s74 = sadd.s32 %s73, 1
      %p77 = scmp.eq.s32.totalorder %s18, 1
      %p78 = scmp.ne.s32.totalorder %s73, %s75
      %p79 = scmp.eq.s32.totalorder %s18, 0
      %p80 = por %p78, %p79
      %p81 = scmp.ne.s32.totalorder %s73, %s75
      %p82 = scmp.eq.s32.totalorder %s23, 1
      %p83 = por %p81, %p82
      %p84 = scmp.ne.s32.totalorder %s75, %s76
      %p85 = scmp.eq.s32.totalorder %s23, 0
      %p86 = por %p84, %p85
      %p87 = scmp.ne.s32.totalorder %s75, %s76
      %p88 = scmp.eq.s32.totalorder %s24, 1
      %p89 = por %p87, %p88
      %p91 = scmp.ne.s32.totalorder %s76, %s90
      %p92 = scmp.eq.s32.totalorder %s24, 0
      %p93 = por %p91, %p92
      %s95 = sadd.s32 %s94, 1
      %p98 = scmp.eq.s32.totalorder %s18, 1
      %p99 = scmp.ne.s32.totalorder %s94, %s96
      %p100 = scmp.eq.s32.totalorder %s18, 0
      %p101 = por %p99, %p100
      %p102 = scmp.ne.s32.totalorder %s94, %s96
      %p103 = scmp.eq.s32.totalorder %s23, 1
      %p104 = por %p102, %p103
      %p105 = scmp.ne.s32.totalorder %s96, %s97
      %p106 = scmp.eq.s32.totalorder %s23, 0
      %p107 = por %p105, %p106
      %p108 = scmp.ne.s32.totalorder %s96, %s97
      %p109 = scmp.eq.s32.totalorder %s24, 1
      %p110 = por %p108, %p109
      %p112 = scmp.ne.s32.totalorder %s97, %s111
      %p113 = scmp.eq.s32.totalorder %s24, 0
      %p114 = por %p112, %p113
      %s116 = sadd.s32 %s115, 1
      %p119 = scmp.eq.s32.totalorder %s18, 1
      %p120 = scmp.ne.s32.totalorder %s115, %s117
      %p121 = scmp.eq.s32.totalorder %s18, 0
      %p122 = por %p120, %p121
      %p123 = scmp.ne.s32.totalorder %s115, %s117
      %p124 = scmp.eq.s32.totalorder %s23, 1
      %p125 = por %p123, %p124
      %p126 = scmp.ne.s32.totalorder %s117, %s118
      %p127 = scmp.eq.s32.totalorder %s23, 0
      %p128 = por %p126, %p127
      %p129 = scmp.ne.s32.totalorder %s117, %s118
      %p130 = scmp.eq.s32.totalorder %s24, 1
      %p131 = por %p129, %p130
      %p133 = scmp.ne.s32.totalorder %s118, %s132
      %p134 = scmp.eq.s32.totalorder %s24, 0
      %p135 = por %p133, %p134
      %s137 = sadd.s32 %s136, 1
      %p140 = scmp.eq.s32.totalorder %s18, 1
      %p141 = scmp.ne.s32.totalorder %s136, %s138
      %p142 = scmp.eq.s32.totalorder %s18, 0
      %p143 = por %p141, %p142
      %p144 = scmp.ne.s32.totalorder %s136, %s138
      %p145 = scmp.eq.s32.totalorder %s23, 1
      %p146 = por %p144, %p145
      %p147 = scmp.ne.s32.totalorder %s138, %s139
      %p148 = scmp.eq.s32.totalorder %s23, 0
      %p149 = por %p147, %p148
      %p150 = scmp.ne.s32.totalorder %s138, %s139
      %p151 = scmp.eq.s32.totalorder %s24, 1
      %p152 = por %p150, %p151
      %p154 = scmp.ne.s32.totalorder %s139, %s153
      %p155 = scmp.eq.s32.totalorder %s24, 0
      %p156 = por %p154, %p155
      %s158 = sadd.s32 %s157, 1
      %p161 = scmp.eq.s32.totalorder %s18, 1
      %p162 = scmp.ne.s32.totalorder %s157, %s159
      %p163 = scmp.eq.s32.totalorder %s18, 0
      %p164 = por %p162, %p163
      %p165 = scmp.ne.s32.totalorder %s157, %s159
      %p166 = scmp.eq.s32.totalorder %s23, 1
      %p167 = por %p165, %p166
      %p168 = scmp.ne.s32.totalorder %s159, %s160
      %p169 = scmp.eq.s32.totalorder %s23, 0
      %p170 = por %p168, %p169
      %p171 = scmp.ne.s32.totalorder %s159, %s160
      %p172 = scmp.eq.s32.totalorder %s24, 1
      %p173 = por %p171, %p172
      %p175 = scmp.ne.s32.totalorder %s160, %s174
      %p176 = scmp.eq.s32.totalorder %s24, 0
      %p177 = por %p175, %p176
      %s179 = sadd.s32 %s178, 1
      %p182 = scmp.eq.s32.totalorder %s18, 1
      %p183 = scmp.ne.s32.totalorder %s178, %s180
      %p184 = scmp.eq.s32.totalorder %s18, 0
      %p185 = por %p183, %p184
      %p186 = scmp.ne.s32.totalorder %s178, %s180
      %p187 = scmp.eq.s32.totalorder %s23, 1
      %p188 = por %p186, %p187
      %p189 = scmp.ne.s32.totalorder %s180, %s181
      %p190 = scmp.eq.s32.totalorder %s23, 0
      %p191 = por %p189, %p190
      %p192 = scmp.ne.s32.totalorder %s180, %s181
      %p193 = scmp.eq.s32.totalorder %s24, 1
      %p194 = por %p192, %p193
      %p196 = scmp.ne.s32.totalorder %s181, %s195
      %p197 = scmp.eq.s32.totalorder %s24, 0
      %p198 = por %p196, %p197
      %s200 = sadd.s32 %s199, 1
      %p203 = scmp.eq.s32.totalorder %s18, 1
      %p204 = scmp.ne.s32.totalorder %s199, %s201
      %p205 = scmp.eq.s32.totalorder %s18, 0
      %p206 = por %p204, %p205
      %p207 = scmp.ne.s32.totalorder %s199, %s201
      %p208 = scmp.eq.s32.totalorder %s23, 1
      %p209 = por %p207, %p208
      %p210 = scmp.ne.s32.totalorder %s201, %s202
      %p211 = scmp.eq.s32.totalorder %s23, 0
      %p212 = por %p210, %p211
      %p213 = scmp.ne.s32.totalorder %s201, %s202
      %p214 = scmp.eq.s32.totalorder %s24, 1
      %p215 = por %p213, %p214
      %p217 = scmp.ne.s32.totalorder %s202, %s216
      %p218 = scmp.eq.s32.totalorder %s24, 0
      %p219 = por %p217, %p218
      %s221 = sadd.s32 %s220, 1
      %p224 = scmp.eq.s32.totalorder %s18, 1
      %p225 = scmp.ne.s32.totalorder %s220, %s222
      %p226 = scmp.eq.s32.totalorder %s18, 0
      %p227 = por %p225, %p226
      %p228 = scmp.ne.s32.totalorder %s220, %s222
      %p229 = scmp.eq.s32.totalorder %s23, 1
      %p230 = por %p228, %p229
      %p231 = scmp.ne.s32.totalorder %s222, %s223
      %p232 = scmp.eq.s32.totalorder %s23, 0
      %p233 = por %p231, %p232
      %p234 = scmp.ne.s32.totalorder %s222, %s223
      %p235 = scmp.eq.s32.totalorder %s24, 1
      %p236 = por %p234, %p235
      %p238 = scmp.ne.s32.totalorder %s223, %s237
      %p239 = scmp.eq.s32.totalorder %s24, 0
      %p240 = por %p238, %p239
      %s242 = sadd.s32 %s241, 1
      %p245 = scmp.eq.s32.totalorder %s18, 1
      %p246 = scmp.ne.s32.totalorder %s241, %s243
      %p247 = scmp.eq.s32.totalorder %s18, 0
      %p248 = por %p246, %p247
      %p249 = scmp.ne.s32.totalorder %s241, %s243
      %p250 = scmp.eq.s32.totalorder %s23, 1
      %p251 = por %p249, %p250
      %p252 = scmp.ne.s32.totalorder %s243, %s244
      %p253 = scmp.eq.s32.totalorder %s23, 0
      %p254 = por %p252, %p253
      %p255 = scmp.ne.s32.totalorder %s243, %s244
      %p256 = scmp.eq.s32.totalorder %s24, 1
      %p257 = por %p255, %p256
      %p259 = scmp.ne.s32.totalorder %s244, %s258
      %p260 = scmp.eq.s32.totalorder %s24, 0
      %p261 = por %p259, %p260
      %s263 = sadd.s32 %s262, 1
      %p266 = scmp.eq.s32.totalorder %s18, 1
      %p267 = scmp.ne.s32.totalorder %s262, %s264
      %p268 = scmp.eq.s32.totalorder %s18, 0
      %p269 = por %p267, %p268
      %p270 = scmp.ne.s32.totalorder %s262, %s264
      %p271 = scmp.eq.s32.totalorder %s23, 1
      %p272 = por %p270, %p271
      %p273 = scmp.ne.s32.totalorder %s264, %s265
      %p274 = scmp.eq.s32.totalorder %s23, 0
      %p275 = por %p273, %p274
      %p276 = scmp.ne.s32.totalorder %s264, %s265
      %p277 = scmp.eq.s32.totalorder %s24, 1
      %p278 = por %p276, %p277
      %p280 = scmp.ne.s32.totalorder %s265, %s279
      %p281 = scmp.eq.s32.totalorder %s24, 0
      %p282 = por %p280, %p281
      %s283 = ssub.s32 %s18, %s25
      %p284 = scmp.eq.s32.totalorder %s283, 0
      %s286 = sadd.s32 %s285, 1
      %s287 = scalar_select %p284, %s285, %s286
      %p290 = pneg %p284
      %p291 = scmp.eq.s32.totalorder %s18, 1
      %p292 = por %p290, %p291
      %p293 = scmp.ne.s32.totalorder %s285, %s288
      %p294 = scmp.eq.s32.totalorder %s18, 0
      %p295 = por %p293, %p294
      %p296 = scmp.ne.s32.totalorder %s285, %s288
      %p297 = scmp.eq.s32.totalorder %s23, 1
      %p298 = por %p296, %p297
      %p299 = scmp.ne.s32.totalorder %s288, %s289
      %p300 = scmp.eq.s32.totalorder %s23, 0
      %p301 = por %p299, %p300
      %p302 = scmp.ne.s32.totalorder %s288, %s289
      %p303 = scmp.eq.s32.totalorder %s24, 1
      %p304 = por %p302, %p303
      %p306 = scmp.ne.s32.totalorder %s289, %s305
      %p307 = scmp.eq.s32.totalorder %s24, 0
      %p308 = por %p306, %p307
      %p309 = scmp.le.s32.totalorder 1, %s18
      %p310 = scmp.lt.s32.totalorder %s18, 3
      %p311 = pnand %p309, %p310
      %p312 = pneg %p311
      // Predicated region
      $region9: #{net_forward.1} parent=5 // pred_check
        _
      $region10: #{net_forward.1} parent=5 // pred_check_branch
        %314 = sbr.rel (%p311) target = $region12
      $region11: #{net_forward.1} parent=5 // pred_region
        %s315 = ssub.s32 %s18, 1
        // Predicated region
        $region13: #{net_forward.1} parent=11 // pred_check
          %p316 = pneg %p65
        $region14: #{net_forward.1} parent=11 // pred_check_branch
          %318 = sbr.rel (%p316) target = $region16
        $region15: #{net_forward.1} parent=11 // pred_region
          _
        $region16: #{net_forward.1} parent=11 // pred_fallthru
          _
        // Predicated region
        $region17: #{net_forward.1} parent=11 // pred_check
          %p319 = pneg %p86
        $region18: #{net_forward.1} parent=11 // pred_check_branch
          %321 = sbr.rel (%p319) target = $region20
        $region19: #{net_forward.1} parent=11 // pred_region
          _
        $region20: #{net_forward.1} parent=11 // pred_fallthru
          _
        // Predicated region
        $region21: #{net_forward.1} parent=11 // pred_check
          %p322 = pneg %p107
        $region22: #{net_forward.1} parent=11 // pred_check_branch
          %324 = sbr.rel (%p322) target = $region24
        $region23: #{net_forward.1} parent=11 // pred_region
          _
        $region24: #{net_forward.1} parent=11 // pred_fallthru
          _
        // Predicated region
        $region25: #{net_forward.1} parent=11 // pred_check
          %p325 = pneg %p128
        $region26: #{net_forward.1} parent=11 // pred_check_branch
          %327 = sbr.rel (%p325) target = $region28
        $region27: #{net_forward.1} parent=11 // pred_region
          _
        $region28: #{net_forward.1} parent=11 // pred_fallthru
          _
        // Predicated region
        $region29: #{net_forward.1} parent=11 // pred_check
          %p328 = pneg %p149
        $region30: #{net_forward.1} parent=11 // pred_check_branch
          %330 = sbr.rel (%p328) target = $region32
        $region31: #{net_forward.1} parent=11 // pred_region
          _
        $region32: #{net_forward.1} parent=11 // pred_fallthru
          _
        // Predicated region
        $region33: #{net_forward.1} parent=11 // pred_check
          %p331 = pneg %p170
        $region34: #{net_forward.1} parent=11 // pred_check_branch
          %333 = sbr.rel (%p331) target = $region36
        $region35: #{net_forward.1} parent=11 // pred_region
          _
        $region36: #{net_forward.1} parent=11 // pred_fallthru
          _
        // Predicated region
        $region37: #{net_forward.1} parent=11 // pred_check
          %p334 = pneg %p191
        $region38: #{net_forward.1} parent=11 // pred_check_branch
          %336 = sbr.rel (%p334) target = $region40
        $region39: #{net_forward.1} parent=11 // pred_region
          _
        $region40: #{net_forward.1} parent=11 // pred_fallthru
          _
        // Predicated region
        $region41: #{net_forward.1} parent=11 // pred_check
          %p337 = pneg %p212
        $region42: #{net_forward.1} parent=11 // pred_check_branch
          %339 = sbr.rel (%p337) target = $region44
        $region43: #{net_forward.1} parent=11 // pred_region
          _
        $region44: #{net_forward.1} parent=11 // pred_fallthru
          _
        // Predicated region
        $region45: #{net_forward.1} parent=11 // pred_check
          %p340 = pneg %p233
        $region46: #{net_forward.1} parent=11 // pred_check_branch
          %342 = sbr.rel (%p340) target = $region48
        $region47: #{net_forward.1} parent=11 // pred_region
          _
        $region48: #{net_forward.1} parent=11 // pred_fallthru
          _
        // Predicated region
        $region49: #{net_forward.1} parent=11 // pred_check
          %p343 = pneg %p254
        $region50: #{net_forward.1} parent=11 // pred_check_branch
          %345 = sbr.rel (%p343) target = $region52
        $region51: #{net_forward.1} parent=11 // pred_region
          _
        $region52: #{net_forward.1} parent=11 // pred_fallthru
          _
        // Predicated region
        $region53: #{net_forward.1} parent=11 // pred_check
          %p346 = pneg %p275
        $region54: #{net_forward.1} parent=11 // pred_check_branch
          %348 = sbr.rel (%p346) target = $region56
        $region55: #{net_forward.1} parent=11 // pred_region
          _
        $region56: #{net_forward.1} parent=11 // pred_fallthru
          _
      $region12: #{net_forward.1} parent=5 // pred_fallthru
        _
      %p349 = scmp.lt.s32.totalorder %s18, 2
      // Predicated region
      $region57: #{net_forward.1} parent=5 // pred_check
        %p350 = pneg %p349
      $region58: #{net_forward.1} parent=5 // pred_check_branch
        %352 = sbr.rel (%p350) target = $region60
      $region59: #{net_forward.1} parent=5 // pred_region
        // Predicated region
        $region61: #{net_forward.1} parent=59 // pred_check
          %p353 = pneg %p38
        $region62: #{net_forward.1} parent=59 // pred_check_branch
          %355 = sbr.rel (%p353) target = $region64
        $region63: #{net_forward.1} parent=59 // pred_region
          %s356 = sand.u32 %s28, 1
          %s357 = sand.u32 %s28, 1
          %s358 = smul.addr %s357, 64
          %s359 = scalar_lea.vmem [#allocation7], %s358
          %s360 = smul.addr %s18, 8
          %s361 = scalar_lea.vmem %s0, %s360
          // Predicated region
          $region65: #{net_forward.1} parent=63 // pred_check
            _
          $region66: #{net_forward.1} parent=63 // pred_check_branch
            %363 = sbr.rel (0) target = $region68
          $region67: #{net_forward.1} parent=63 // pred_region
            // Predicated region
            $region69: #{net_forward.1} parent=67 // pred_check
              _
            $region70: #{net_forward.1} parent=67 // pred_check_branch
              %365 = sbr.rel (0) target = $region72
            $region71: #{net_forward.1} parent=67 // pred_region
              // Predicated region
              $region84: #{net_forward.1} parent=71 // pred_check
                _
              $region85: #{net_forward.1} parent=71 // pred_check_branch
                %394 = sbr.rel (0) target = $region87
              $region86: #{net_forward.1} parent=71 // pred_region
                loop: start=0, step=1, limit=1
                $region88: #{net_forward.1} parent=86 // loop_pre_header
                  _
                $region89: #{net_forward.1} parent=86 // loop_header
                  %s396 = sphi 0, %s400
                  %p397 = scmp.ge.s32.totalorder %s396, 1
                  %s401 = sphi %s361, %s361
                  %s402 = sphi %s359, %s359
                $region90: #{net_forward.1} parent=86 // loop_header_branch
                  %399 = sbr.rel (%p397) target = $region94
                $region91: #{net_forward.1} parent=86 // loop_body
                  %v403 = vld [vmem:[%s401] sm:$0xff]
                  %404 = vst [vmem:[%s402] sm:$0xff] %v403
                  %v405 = vld [vmem:[%s401 + $0x10] sm:$0xff]
                  %406 = vst [vmem:[%s402 + $0x8] sm:$0xff] %v405
                  %v407 = vld [vmem:[%s401 + $0x20] sm:$0xff]
                  %408 = vst [vmem:[%s402 + $0x10] sm:$0xff] %v407
                  %v409 = vld [vmem:[%s401 + $0x30] sm:$0xff]
                  %410 = vst [vmem:[%s402 + $0x18] sm:$0xff] %v409
                  %v411 = vld [vmem:[%s401 + $0x40] sm:$0xff]
                  %412 = vst [vmem:[%s402 + $0x20] sm:$0xff] %v411
                  %v413 = vld [vmem:[%s401 + $0x50] sm:$0xff]
                  %414 = vst [vmem:[%s402 + $0x28] sm:$0xff] %v413
                  %v415 = vld [vmem:[%s401 + $0x60] sm:$0xff]
                  %416 = vst [vmem:[%s402 + $0x30] sm:$0xff] %v415
                  %v417 = vld [vmem:[%s401 + $0x70] sm:$0xff]
                  %418 = vst [vmem:[%s402 + $0x38] sm:$0xff] %v417
                $region92: #{net_forward.1} parent=86 // loop_footer
                  %s400 = sadd.s32 1, %s396
                $region93: #{net_forward.1} parent=86 // loop_footer_branch
                  %395 = sbr.rel target = $region89
                $region94: #{net_forward.1} parent=86 // loop_exit
                  _
              $region87: #{net_forward.1} parent=71 // pred_fallthru
                _
              // Predicated region
              $region95: #{net_forward.1} parent=71 // pred_check
                _
              $region96: #{net_forward.1} parent=71 // pred_check_branch
                %420 = sbr.rel target = $region98
              $region97: #{net_forward.1} parent=71 // pred_region
                _
              $region98: #{net_forward.1} parent=71 // pred_fallthru
                _
            $region72: #{net_forward.1} parent=67 // pred_fallthru
              _
            // Predicated region
            $region73: #{net_forward.1} parent=67 // pred_check
              _
            $region74: #{net_forward.1} parent=67 // pred_check_branch
              %367 = sbr.rel target = $region76
            $region75: #{net_forward.1} parent=67 // pred_region
              loop: start=0, step=1, limit=1
              $region77: #{net_forward.1} parent=75 // loop_pre_header
                _
              $region78: #{net_forward.1} parent=75 // loop_header
                %s370 = sphi 0, %s374
                %p371 = scmp.ge.s32.totalorder %s370, 1
                %s375 = sphi %s361, %s361
                %s376 = sphi %s359, %s359
              $region79: #{net_forward.1} parent=75 // loop_header_branch
                %373 = sbr.rel (%p371) target = $region83
              $region80: #{net_forward.1} parent=75 // loop_body
                %v377 = vld [vmem:[%s375] sm:$0xff]
                %378 = vst [vmem:[%s376] sm:$0xff] %v377
                %v379 = vld [vmem:[%s375 + $0x10] sm:$0xff]
                %380 = vst [vmem:[%s376 + $0x8] sm:$0xff] %v379
                %v381 = vld [vmem:[%s375 + $0x20] sm:$0xff]
                %382 = vst [vmem:[%s376 + $0x10] sm:$0xff] %v381
                %v383 = vld [vmem:[%s375 + $0x30] sm:$0xff]
                %384 = vst [vmem:[%s376 + $0x18] sm:$0xff] %v383
                %v385 = vld [vmem:[%s375 + $0x40] sm:$0xff]
                %386 = vst [vmem:[%s376 + $0x20] sm:$0xff] %v385
                %v387 = vld [vmem:[%s375 + $0x50] sm:$0xff]
                %388 = vst [vmem:[%s376 + $0x28] sm:$0xff] %v387
                %v389 = vld [vmem:[%s375 + $0x60] sm:$0xff]
                %390 = vst [vmem:[%s376 + $0x30] sm:$0xff] %v389
                %v391 = vld [vmem:[%s375 + $0x70] sm:$0xff]
                %392 = vst [vmem:[%s376 + $0x38] sm:$0xff] %v391
              $region81: #{net_forward.1} parent=75 // loop_footer
                %s374 = sadd.s32 1, %s370
              $region82: #{net_forward.1} parent=75 // loop_footer_branch
                %369 = sbr.rel target = $region78
              $region83: #{net_forward.1} parent=75 // loop_exit
                _
            $region76: #{net_forward.1} parent=67 // pred_fallthru
              _
          $region68: #{net_forward.1} parent=63 // pred_fallthru
            _
          %421 = vnop
        $region64: #{net_forward.1} parent=59 // pred_fallthru
          _
      $region60: #{net_forward.1} parent=5 // pred_fallthru
        _
      %p422 = scmp.le.s32.totalorder 1, %s18
      %p423 = scmp.lt.s32.totalorder %s18, 3
      %p424 = pnand %p422, %p423
      %p425 = pneg %p424
      // Predicated region
      $region99: #{net_forward.1} parent=5 // pred_check
        _
      $region100: #{net_forward.1} parent=5 // pred_check_branch
        %427 = sbr.rel (%p424) target = $region102
      $region101: #{net_forward.1} parent=5 // pred_region
        %s428 = ssub.s32 %s18, 1
        %s429 = sand.u32 %s31, 1
        %s430 = sand.u32 %s31, 1
        %s431 = smul.addr %s430, 64
        %s432 = scalar_lea.vmem [#allocation7], %s431
        // Predicated region
        $region103: #{net_forward.1} parent=101 // pred_check
          %p433 = pneg %p44
        $region104: #{net_forward.1} parent=101 // pred_check_branch
          %435 = sbr.rel (%p433) target = $region106
        $region105: #{net_forward.1} parent=101 // pred_region
          _
        $region106: #{net_forward.1} parent=101 // pred_fallthru
          _
        %s436 = sand.u32 %s31, 1
        %s437 = sand.u32 %s31, 1
        %s438 = smul.addr %s437, 64
        %s439 = scalar_lea.vmem [#allocation7], %s438
        %p440 = pneg %p44
        %p441 = pneg %p41
        %p442 = pneg %p65
        %p443 = pneg %p62
        %p444 = pneg %p86
        %p445 = pneg %p83
        %p446 = pneg %p107
        %p447 = pneg %p104
        %p448 = pneg %p128
        %p449 = pneg %p125
        %p450 = pneg %p149
        %p451 = pneg %p146
        %p452 = pneg %p170
        %p453 = pneg %p167
        %p454 = pneg %p191
        %p455 = pneg %p188
        %p456 = pneg %p212
        %p457 = pneg %p209
        %p458 = pneg %p233
        %p459 = pneg %p230
        %p460 = pneg %p254
        %p461 = pneg %p251
        %p462 = pneg %p275
        %p463 = pneg %p272
        %p464 = pneg %p301
        %p465 = pneg %p298
        %p466 = scmp.lt.s32.totalorder %s23, 1
        %s467 = scalar_select %p466, %s23, 1
        %s468 = smul.addr %s467, 8
        %s469 = scalar_lea.vmem %s12, %s468
        %p470 = scmp.lt.s32.totalorder %s23, 1
        %s471 = scalar_select %p470, %s23, 1
        %s472 = smul.addr %s471, 8
        %s473 = scalar_lea.vmem %s12, %s472
        %v474 = vld [vmem:[%s432] sm:$0xff]
        %v475 = vld [vmem:[%s432 + $0x8] sm:$0xff]
        %v476 = vld [vmem:[%s432 + $0x10] sm:$0xff]
        %v477 = vld [vmem:[%s432 + $0x18] sm:$0xff]
        %v478 = vld [vmem:[%s432 + $0x20] sm:$0xff]
        %v479 = vld [vmem:[%s432 + $0x28] sm:$0xff]
        %v480 = vld [vmem:[%s432 + $0x30] sm:$0xff]
        %v481 = vld [vmem:[%s432 + $0x38] sm:$0xff]
        %v482 = vld [vmem:[%s1] sm:$0xff]
        %v483 = vld [vmem:[%s1 + $0x8] sm:$0xff]
        %v484 = vld [vmem:[%s1 + $0x10] sm:$0xff]
        %v485 = vld [vmem:[%s1 + $0x18] sm:$0xff]
        %v486 = vld [vmem:[%s2] sm:$0x1]
        %v488 = vlaneseq
        %v489 = vshrl.u32 %v488, 7
        %v490 = vsub.s32 0, %v489
        %v491 = vrot.slane %v486, %v490
        %vm493 = vcmask 261120
        %v495 = vsel %vm493, %v474, 0
        %v498 = vsel %vm493, %v475, 0
        %v501 = vsel %vm493, %v476, 0
        %v504 = vsel %vm493, %v477, 0
        %v507 = vsel %vm493, %v478, 0
        %v510 = vsel %vm493, %v479, 0
        %v513 = vsel %vm493, %v480, 0
        %v516 = vsel %vm493, %v481, 0
        %518 = vmatprep.subr.mxu0 0.0
        %519 = vmatpush1.msra.mxu0 %v482
        %520 = vmatprep.subr.mxu0 0.0
        %521 = vmatpush1.msra.mxu0 %v483
        %522 = vmatprep.subr.mxu0 0.0
        %523 = vmatpush1.msra.mxu0 %v484
        %524 = vmatprep.subr.mxu0 0.0
        %525 = vmatpush1.msra.mxu0 %v485
        %526 = vmatprep.subr.mxu0 0.0
        %527 = vmatpush1.msra.mxu0 0.0
        %528 = vmatprep.subr.mxu0 0.0
        %529 = vmatpush1.msra.mxu0 0.0
        %530 = vmatprep.subr.mxu0 0.0
        %531 = vmatpush1.msra.mxu0 0.0
        %532 = vmatprep.subr.mxu0 0.0
        %533 = vmatpush1.msra.mxu0 0.0
        %534 = vmatprep.subr.mxu0 0.0
        %535 = vmatpush1.msra.mxu0 0.0
        %536 = vmatprep.subr.mxu0 0.0
        %537 = vmatpush1.msra.mxu0 0.0
        %538 = vmatprep.subr.mxu0 0.0
        %539 = vmatpush1.msra.mxu0 0.0
        %540 = vmatprep.subr.mxu0 0.0
        %541 = vmatpush1.msra.mxu0 0.0
        %542 = vmatprep.subr.mxu0 0.0
        %543 = vmatpush1.msra.mxu0 0.0
        %544 = vmatprep.subr.mxu0 0.0
        %545 = vmatpush1.msra.mxu0 0.0
        %546 = vmatprep.subr.mxu0 0.0
        %547 = vmatpush1.msra.mxu0 0.0
        %548 = vmatprep.subr.mxu0 0.0
        %549 = vmatpush1.msra.mxu0 0.0
        %550 = vmatprep.subr.mxu0 0.0
        %551 = vmatpush1.msra.mxu0 0.0
        %552 = vmatprep.subr.mxu0 0.0
        %553 = vmatpush1.msra.mxu0 0.0
        %554 = vmatprep.subr.mxu0 0.0
        %555 = vmatpush1.msra.mxu0 0.0
        %556 = vmatprep.subr.mxu0 0.0
        %557 = vmatpush1.msra.mxu0 0.0
        %558 = vmatprep.subr.mxu0 0.0
        %559 = vmatpush1.msra.mxu0 0.0
        %560 = vmatprep.subr.mxu0 0.0
        %561 = vmatpush1.msra.mxu0 0.0
        %562 = vmatprep.subr.mxu0 0.0
        %563 = vmatpush1.msra.mxu0 0.0
        %564 = vmatprep.subr.mxu0 0.0
        %565 = vmatpush1.msra.mxu0 0.0
        %566 = vmatprep.subr.mxu0 0.0
        %567 = vmatpush1.msra.mxu0 0.0
        %568 = vmatprep.subr.mxu0 0.0
        %569 = vmatpush1.msra.mxu0 0.0
        %570 = vmatprep.subr.mxu0 0.0
        %571 = vmatpush1.msra.mxu0 0.0
        %572 = vmatprep.subr.mxu0 0.0
        %573 = vmatpush1.msra.mxu0 0.0
        %574 = vmatprep.subr.mxu0 0.0
        %575 = vmatpush1.msra.mxu0 0.0
        %576 = vmatprep.subr.mxu0 0.0
        %577 = vmatpush1.msra.mxu0 0.0
        %578 = vmatprep.subr.mxu0 0.0
        %579 = vmatpush1.msra.mxu0 0.0
        %580 = vmatprep.subr.mxu0 0.0
        %581 = vmatpush1.msra.mxu0 0.0
        %582 = vmatprep.mubr.f32.mxu0 0.0
        %583 = vmatmul.mubr.f32.gmra.mrb[0].mxu0 %v495
        %v584 = vpop.f32.mrb[0].mxu0
        %v585 = vadd.f32 %v491, %v584
        %v586 = vpop.f32.mrb[0].mxu0
        %587 = vmatprep.mubr.f32.mxu0 0.0
        %588 = vmatmul.mubr.f32.gmra.mrb[0].mxu0 %v498
        %v589 = vpop.f32.mrb[0].mxu0
        %v590 = vadd.f32 %v491, %v589
        %v591 = vpop.f32.mrb[0].mxu0
        %592 = vmatprep.mubr.f32.mxu0 0.0
        %593 = vmatmul.mubr.f32.gmra.mrb[0].mxu0 %v501
        %v594 = vpop.f32.mrb[0].mxu0
        %v595 = vadd.f32 %v491, %v594
        %v596 = vpop.f32.mrb[0].mxu0
        %597 = vmatprep.mubr.f32.mxu0 0.0
        %598 = vmatmul.mubr.f32.gmra.mrb[0].mxu0 %v504
        %v599 = vpop.f32.mrb[0].mxu0
        %v600 = vadd.f32 %v491, %v599
        %v601 = vpop.f32.mrb[0].mxu0
        %602 = vmatprep.mubr.f32.mxu0 0.0
        %603 = vmatmul.mubr.f32.gmra.mrb[0].mxu0 %v507
        %v604 = vpop.f32.mrb[0].mxu0
        %v605 = vadd.f32 %v491, %v604
        %v606 = vpop.f32.mrb[0].mxu0
        %607 = vmatprep.mubr.f32.mxu0 0.0
        %608 = vmatmul.mubr.f32.gmra.mrb[0].mxu0 %v510
        %v609 = vpop.f32.mrb[0].mxu0
        %v610 = vadd.f32 %v491, %v609
        %v611 = vpop.f32.mrb[0].mxu0
        %612 = vmatprep.mubr.f32.mxu0 0.0
        %613 = vmatmul.mubr.f32.gmra.mrb[0].mxu0 %v513
        %v614 = vpop.f32.mrb[0].mxu0
        %v615 = vadd.f32 %v491, %v614
        %v616 = vpop.f32.mrb[0].mxu0
        %617 = vmatprep.mubr.f32.mxu0 0.0
        %618 = vmatmul.mubr.f32.gmra.mrb[0].mxu0 %v516
        %v619 = vpop.f32.mrb[0].mxu0
        %v620 = vadd.f32 %v491, %v619
        %v621 = vpop.f32.mrb[0].mxu0
        %622 = vdwg.mxu0
        %623 = vst.msk [vmem:[#allocation2] sm:$0xff] %vm493, %v585
        %624 = vst.msk [vmem:[#allocation2 + $0x8] sm:$0xff] %vm493, %v590
        %625 = vst.msk [vmem:[#allocation2 + $0x10] sm:$0xff] %vm493, %v595
        %626 = vst.msk [vmem:[#allocation2 + $0x18] sm:$0xff] %vm493, %v600
        %627 = vst.msk [vmem:[#allocation2 + $0x20] sm:$0xff] %vm493, %v605
        %628 = vst.msk [vmem:[#allocation2 + $0x28] sm:$0xff] %vm493, %v610
        %629 = vst.msk [vmem:[#allocation2 + $0x30] sm:$0xff] %vm493, %v615
        %630 = vst.msk [vmem:[#allocation2 + $0x38] sm:$0xff] %vm493, %v620
        %639 = vrot.lane.b32.xlu0 %v585, 96
        %v640 = vpop.permute.xlu0 %639
        %641 = vrot.lane.b32.xlu0 %v590, 96
        %v642 = vpop.permute.xlu0 %641
        %643 = vrot.lane.b32.xlu0 %v595, 96
        %v644 = vpop.permute.xlu0 %643
        %645 = vrot.lane.b32.xlu0 %v600, 96
        %v646 = vpop.permute.xlu0 %645
        %647 = vrot.lane.b32.xlu0 %v605, 96
        %v648 = vpop.permute.xlu0 %647
        %649 = vrot.lane.b32.xlu0 %v610, 96
        %v650 = vpop.permute.xlu0 %649
        %651 = vrot.lane.b32.xlu0 %v615, 96
        %v652 = vpop.permute.xlu0 %651
        %653 = vrot.lane.b32.xlu0 %v620, 96
        %v654 = vpop.permute.xlu0 %653
        %663 = vst.msk [vmem:[#allocation3] sm:$0xff] %vm493, %v640
        %664 = vst.msk [vmem:[#allocation3 + $0x8] sm:$0xff] %vm493, %v642
        %665 = vst.msk [vmem:[#allocation3 + $0x10] sm:$0xff] %vm493, %v644
        %666 = vst.msk [vmem:[#allocation3 + $0x18] sm:$0xff] %vm493, %v646
        %667 = vst.msk [vmem:[#allocation3 + $0x20] sm:$0xff] %vm493, %v648
        %668 = vst.msk [vmem:[#allocation3 + $0x28] sm:$0xff] %vm493, %v650
        %669 = vst.msk [vmem:[#allocation3 + $0x30] sm:$0xff] %vm493, %v652
        %670 = vst.msk [vmem:[#allocation3 + $0x38] sm:$0xff] %vm493, %v654
        %671 = vrot.lane.b32.xlu0 %v585, 64
        %v672 = vpop.permute.xlu0 %671
        %673 = vrot.lane.b32.xlu0 %v590, 64
        %v674 = vpop.permute.xlu0 %673
        %675 = vrot.lane.b32.xlu0 %v595, 64
        %v676 = vpop.permute.xlu0 %675
        %677 = vrot.lane.b32.xlu0 %v600, 64
        %v678 = vpop.permute.xlu0 %677
        %679 = vrot.lane.b32.xlu0 %v605, 64
        %v680 = vpop.permute.xlu0 %679
        %681 = vrot.lane.b32.xlu0 %v610, 64
        %v682 = vpop.permute.xlu0 %681
        %683 = vrot.lane.b32.xlu0 %v615, 64
        %v684 = vpop.permute.xlu0 %683
        %685 = vrot.lane.b32.xlu0 %v620, 64
        %v686 = vpop.permute.xlu0 %685
        %695 = vst.msk [vmem:[#allocation4] sm:$0xff] %vm493, %v672
        %696 = vst.msk [vmem:[#allocation4 + $0x8] sm:$0xff] %vm493, %v674
        %697 = vst.msk [vmem:[#allocation4 + $0x10] sm:$0xff] %vm493, %v676
        %698 = vst.msk [vmem:[#allocation4 + $0x18] sm:$0xff] %vm493, %v678
        %699 = vst.msk [vmem:[#allocation4 + $0x20] sm:$0xff] %vm493, %v680
        %700 = vst.msk [vmem:[#allocation4 + $0x28] sm:$0xff] %vm493, %v682
        %701 = vst.msk [vmem:[#allocation4 + $0x30] sm:$0xff] %vm493, %v684
        %702 = vst.msk [vmem:[#allocation4 + $0x38] sm:$0xff] %vm493, %v686
        %703 = vrot.lane.b32.xlu0 %v585, 32
        %v704 = vpop.permute.xlu0 %703
        %705 = vrot.lane.b32.xlu0 %v590, 32
        %v706 = vpop.permute.xlu0 %705
        %707 = vrot.lane.b32.xlu0 %v595, 32
        %v708 = vpop.permute.xlu0 %707
        %709 = vrot.lane.b32.xlu0 %v600, 32
        %v710 = vpop.permute.xlu0 %709
        %711 = vrot.lane.b32.xlu0 %v605, 32
        %v712 = vpop.permute.xlu0 %711
        %713 = vrot.lane.b32.xlu0 %v610, 32
        %v714 = vpop.permute.xlu0 %713
        %715 = vrot.lane.b32.xlu0 %v615, 32
        %v716 = vpop.permute.xlu0 %715
        %717 = vrot.lane.b32.xlu0 %v620, 32
        %v718 = vpop.permute.xlu0 %717
        %727 = vst.msk [vmem:[#allocation5] sm:$0xff] %vm493, %v704
        %728 = vst.msk [vmem:[#allocation5 + $0x8] sm:$0xff] %vm493, %v706
        %729 = vst.msk [vmem:[#allocation5 + $0x10] sm:$0xff] %vm493, %v708
        %730 = vst.msk [vmem:[#allocation5 + $0x18] sm:$0xff] %vm493, %v710
        %731 = vst.msk [vmem:[#allocation5 + $0x20] sm:$0xff] %vm493, %v712
        %732 = vst.msk [vmem:[#allocation5 + $0x28] sm:$0xff] %vm493, %v714
        %733 = vst.msk [vmem:[#allocation5 + $0x30] sm:$0xff] %vm493, %v716
        %734 = vst.msk [vmem:[#allocation5 + $0x38] sm:$0xff] %vm493, %v718
        %v735 = vld [vmem:[#allocation2] sm:$0xff]
        %v736 = vld [vmem:[%s3] sm:$0xff]
        %v737 = vld [vmem:[%s3 + $0x8] sm:$0xff]
        %v738 = vld [vmem:[%s3 + $0x10] sm:$0xff]
        %v739 = vld [vmem:[%s3 + $0x18] sm:$0xff]
        %v741 = vsel %vm493, 0.0, 0
        %743 = vmatprep.subr.mxu0 0.0
        %744 = vmatpush1.msra.mxu0 %v736
        %745 = vmatprep.subr.mxu0 0.0
        %746 = vmatpush1.msra.mxu0 %v737
        %747 = vmatprep.subr.mxu0 0.0
        %748 = vmatpush1.msra.mxu0 %v738
        %749 = vmatprep.subr.mxu0 0.0
        %750 = vmatpush1.msra.mxu0 %v739
        %751 = vmatprep.subr.mxu0 0.0
        %752 = vmatpush1.msra.mxu0 0.0
        %753 = vmatprep.subr.mxu0 0.0
        %754 = vmatpush1.msra.mxu0 0.0
        %755 = vmatprep.subr.mxu0 0.0
        %756 = vmatpush1.msra.mxu0 0.0
        %757 = vmatprep.subr.mxu0 0.0
        %758 = vmatpush1.msra.mxu0 0.0
        %759 = vmatprep.subr.mxu0 0.0
        %760 = vmatpush1.msra.mxu0 0.0
        %761 = vmatprep.subr.mxu0 0.0
        %762 = vmatpush1.msra.mxu0 0.0
        %763 = vmatprep.subr.mxu0 0.0
        %764 = vmatpush1.msra.mxu0 0.0
        %765 = vmatprep.subr.mxu0 0.0
        %766 = vmatpush1.msra.mxu0 0.0
        %767 = vmatprep.subr.mxu0 0.0
        %768 = vmatpush1.msra.mxu0 0.0
        %769 = vmatprep.subr.mxu0 0.0
        %770 = vmatpush1.msra.mxu0 0.0
        %771 = vmatprep.subr.mxu0 0.0
        %772 = vmatpush1.msra.mxu0 0.0
        %773 = vmatprep.subr.mxu0 0.0
        %774 = vmatpush1.msra.mxu0 0.0
        %775 = vmatprep.subr.mxu0 0.0
        %776 = vmatpush1.msra.mxu0 0.0
        %777 = vmatprep.subr.mxu0 0.0
        %778 = vmatpush1.msra.mxu0 0.0
        %779 = vmatprep.subr.mxu0 0.0
        %780 = vmatpush1.msra.mxu0 0.0
        %781 = vmatprep.subr.mxu0 0.0
        %782 = vmatpush1.msra.mxu0 0.0
        %783 = vmatprep.subr.mxu0 0.0
        %784 = vmatpush1.msra.mxu0 0.0
        %785 = vmatprep.subr.mxu0 0.0
        %786 = vmatpush1.msra.mxu0 0.0
        %787 = vmatprep.subr.mxu0 0.0
        %788 = vmatpush1.msra.mxu0 0.0
        %789 = vmatprep.subr.mxu0 0.0
        %790 = vmatpush1.msra.mxu0 0.0
        %791 = vmatprep.subr.mxu0 0.0
        %792 = vmatpush1.msra.mxu0 0.0
        %793 = vmatprep.subr.mxu0 0.0
        %794 = vmatpush1.msra.mxu0 0.0
        %795 = vmatprep.subr.mxu0 0.0
        %796 = vmatpush1.msra.mxu0 0.0
        %797 = vmatprep.subr.mxu0 0.0
        %798 = vmatpush1.msra.mxu0 0.0
        %799 = vmatprep.subr.mxu0 0.0
        %800 = vmatpush1.msra.mxu0 0.0
        %801 = vmatprep.subr.mxu0 0.0
        %802 = vmatpush1.msra.mxu0 0.0
        %803 = vmatprep.subr.mxu0 0.0
        %804 = vmatpush1.msra.mxu0 0.0
        %805 = vmatprep.subr.mxu0 0.0
        %806 = vmatpush1.msra.mxu0 0.0
        %807 = vmatprep.mubr.f32.mxu0 0.0
        %808 = vmatmul.mubr.f32.gmra.mrb[0].mxu0 %v741
        %v809 = vpop.f32.mrb[0].mxu0
        %v810 = vadd.f32 0.0, %v809
        %v811 = vpop.f32.mrb[0].mxu0
        %812 = vdwg.mxu0
        %v813 = vadd.f32 %v735, %v810
        %v814 = vmul.f32 %v813, 0.5
        %v815 = vtanh.pop %v814
        %v816 = vmul.f32 %v815, 0.5
        %v817 = vadd.f32 %v816, 0.5
        %v818 = vld [vmem:[#allocation3] sm:$0xff]
        %v819 = vld [vmem:[%s4] sm:$0xff]
        %v820 = vld [vmem:[%s4 + $0x8] sm:$0xff]
        %v821 = vld [vmem:[%s4 + $0x10] sm:$0xff]
        %v822 = vld [vmem:[%s4 + $0x18] sm:$0xff]
        %823 = vmatprep.subr.mxu0 0.0
        %824 = vmatpush1.msra.mxu0 %v819
        %825 = vmatprep.subr.mxu0 0.0
        %826 = vmatpush1.msra.mxu0 %v820
        %827 = vmatprep.subr.mxu0 0.0
        %828 = vmatpush1.msra.mxu0 %v821
        %829 = vmatprep.subr.mxu0 0.0
        %830 = vmatpush1.msra.mxu0 %v822
        %831 = vmatprep.subr.mxu0 0.0
        %832 = vmatpush1.msra.mxu0 0.0
        %833 = vmatprep.subr.mxu0 0.0
        %834 = vmatpush1.msra.mxu0 0.0
        %835 = vmatprep.subr.mxu0 0.0
        %836 = vmatpush1.msra.mxu0 0.0
        %837 = vmatprep.subr.mxu0 0.0
        %838 = vmatpush1.msra.mxu0 0.0
        %839 = vmatprep.subr.mxu0 0.0
        %840 = vmatpush1.msra.mxu0 0.0
        %841 = vmatprep.subr.mxu0 0.0
        %842 = vmatpush1.msra.mxu0 0.0
        %843 = vmatprep.subr.mxu0 0.0
        %844 = vmatpush1.msra.mxu0 0.0
        %845 = vmatprep.subr.mxu0 0.0
        %846 = vmatpush1.msra.mxu0 0.0
        %847 = vmatprep.subr.mxu0 0.0
        %848 = vmatpush1.msra.mxu0 0.0
        %849 = vmatprep.subr.mxu0 0.0
        %850 = vmatpush1.msra.mxu0 0.0
        %851 = vmatprep.subr.mxu0 0.0
        %852 = vmatpush1.msra.mxu0 0.0
        %853 = vmatprep.subr.mxu0 0.0
        %854 = vmatpush1.msra.mxu0 0.0
        %855 = vmatprep.subr.mxu0 0.0
        %856 = vmatpush1.msra.mxu0 0.0
        %857 = vmatprep.subr.mxu0 0.0
        %858 = vmatpush1.msra.mxu0 0.0
        %859 = vmatprep.subr.mxu0 0.0
        %860 = vmatpush1.msra.mxu0 0.0
        %861 = vmatprep.subr.mxu0 0.0
        %862 = vmatpush1.msra.mxu0 0.0
        %863 = vmatprep.subr.mxu0 0.0
        %864 = vmatpush1.msra.mxu0 0.0
        %865 = vmatprep.subr.mxu0 0.0
        %866 = vmatpush1.msra.mxu0 0.0
        %867 = vmatprep.subr.mxu0 0.0
        %868 = vmatpush1.msra.mxu0 0.0
        %869 = vmatprep.subr.mxu0 0.0
        %870 = vmatpush1.msra.mxu0 0.0
        %871 = vmatprep.subr.mxu0 0.0
        %872 = vmatpush1.msra.mxu0 0.0
        %873 = vmatprep.subr.mxu0 0.0
        %874 = vmatpush1.msra.mxu0 0.0
        %875 = vmatprep.subr.mxu0 0.0
        %876 = vmatpush1.msra.mxu0 0.0
        %877 = vmatprep.subr.mxu0 0.0
        %878 = vmatpush1.msra.mxu0 0.0
        %879 = vmatprep.subr.mxu0 0.0
        %880 = vmatpush1.msra.mxu0 0.0
        %881 = vmatprep.subr.mxu0 0.0
        %882 = vmatpush1.msra.mxu0 0.0
        %883 = vmatprep.subr.mxu0 0.0
        %884 = vmatpush1.msra.mxu0 0.0
        %885 = vmatprep.subr.mxu0 0.0
        %886 = vmatpush1.msra.mxu0 0.0
        %887 = vmatprep.mubr.f32.mxu0 0.0
        %888 = vmatmul.mubr.f32.gmra.mrb[0].mxu0 %v741
        %v889 = vpop.f32.mrb[0].mxu0
        %v890 = vadd.f32 0.0, %v889
        %v891 = vpop.f32.mrb[0].mxu0
        %892 = vdwg.mxu0
        %v893 = vadd.f32 %v818, %v890
        %v894 = vmul.f32 %v893, 0.5
        %v895 = vtanh.pop %v894
        %v896 = vmul.f32 %v895, 0.5
        %v897 = vadd.f32 %v896, 0.5
        %v898 = vld [vmem:[#allocation4] sm:$0xff]
        %v899 = vld [vmem:[%s5] sm:$0xff]
        %v900 = vld [vmem:[%s5 + $0x8] sm:$0xff]
        %v901 = vld [vmem:[%s5 + $0x10] sm:$0xff]
        %v902 = vld [vmem:[%s5 + $0x18] sm:$0xff]
        %903 = vmatprep.subr.mxu0 0.0
        %904 = vmatpush1.msra.mxu0 %v899
        %905 = vmatprep.subr.mxu0 0.0
        %906 = vmatpush1.msra.mxu0 %v900
        %907 = vmatprep.subr.mxu0 0.0
        %908 = vmatpush1.msra.mxu0 %v901
        %909 = vmatprep.subr.mxu0 0.0
        %910 = vmatpush1.msra.mxu0 %v902
        %911 = vmatprep.subr.mxu0 0.0
        %912 = vmatpush1.msra.mxu0 0.0
        %913 = vmatprep.subr.mxu0 0.0
        %914 = vmatpush1.msra.mxu0 0.0
        %915 = vmatprep.subr.mxu0 0.0
        %916 = vmatpush1.msra.mxu0 0.0
        %917 = vmatprep.subr.mxu0 0.0
        %918 = vmatpush1.msra.mxu0 0.0
        %919 = vmatprep.subr.mxu0 0.0
        %920 = vmatpush1.msra.mxu0 0.0
        %921 = vmatprep.subr.mxu0 0.0
        %922 = vmatpush1.msra.mxu0 0.0
        %923 = vmatprep.subr.mxu0 0.0
        %924 = vmatpush1.msra.mxu0 0.0
        %925 = vmatprep.subr.mxu0 0.0
        %926 = vmatpush1.msra.mxu0 0.0
        %927 = vmatprep.subr.mxu0 0.0
        %928 = vmatpush1.msra.mxu0 0.0
        %929 = vmatprep.subr.mxu0 0.0
        %930 = vmatpush1.msra.mxu0 0.0
        %931 = vmatprep.subr.mxu0 0.0
        %932 = vmatpush1.msra.mxu0 0.0
        %933 = vmatprep.subr.mxu0 0.0
        %934 = vmatpush1.msra.mxu0 0.0
        %935 = vmatprep.subr.mxu0 0.0
        %936 = vmatpush1.msra.mxu0 0.0
        %937 = vmatprep.subr.mxu0 0.0
        %938 = vmatpush1.msra.mxu0 0.0
        %939 = vmatprep.subr.mxu0 0.0
        %940 = vmatpush1.msra.mxu0 0.0
        %941 = vmatprep.subr.mxu0 0.0
        %942 = vmatpush1.msra.mxu0 0.0
        %943 = vmatprep.subr.mxu0 0.0
        %944 = vmatpush1.msra.mxu0 0.0
        %945 = vmatprep.subr.mxu0 0.0
        %946 = vmatpush1.msra.mxu0 0.0
        %947 = vmatprep.subr.mxu0 0.0
        %948 = vmatpush1.msra.mxu0 0.0
        %949 = vmatprep.subr.mxu0 0.0
        %950 = vmatpush1.msra.mxu0 0.0
        %951 = vmatprep.subr.mxu0 0.0
        %952 = vmatpush1.msra.mxu0 0.0
        %953 = vmatprep.subr.mxu0 0.0
        %954 = vmatpush1.msra.mxu0 0.0
        %955 = vmatprep.subr.mxu0 0.0
        %956 = vmatpush1.msra.mxu0 0.0
        %957 = vmatprep.subr.mxu0 0.0
        %958 = vmatpush1.msra.mxu0 0.0
        %959 = vmatprep.subr.mxu0 0.0
        %960 = vmatpush1.msra.mxu0 0.0
        %961 = vmatprep.subr.mxu0 0.0
        %962 = vmatpush1.msra.mxu0 0.0
        %963 = vmatprep.subr.mxu0 0.0
        %964 = vmatpush1.msra.mxu0 0.0
        %965 = vmatprep.subr.mxu0 0.0
        %966 = vmatpush1.msra.mxu0 0.0
        %967 = vmatprep.mubr.f32.mxu0 0.0
        %968 = vmatmul.mubr.f32.gmra.mrb[0].mxu0 %v741
        %v969 = vpop.f32.mrb[0].mxu0
        %v970 = vadd.f32 0.0, %v969
        %v971 = vpop.f32.mrb[0].mxu0
        %972 = vdwg.mxu0
        %v973 = vadd.f32 %v898, %v970
        %v974 = vmul.f32 %v973, 0.5
        %v975 = vtanh.pop %v974
        %v976 = vmul.f32 %v975, 0.5
        %v977 = vadd.f32 %v976, 0.5
        %v978 = vld [vmem:[#allocation5] sm:$0xff]
        %v979 = vld [vmem:[%s6] sm:$0xff]
        %v980 = vld [vmem:[%s6 + $0x8] sm:$0xff]
        %v981 = vld [vmem:[%s6 + $0x10] sm:$0xff]
        %v982 = vld [vmem:[%s6 + $0x18] sm:$0xff]
        %983 = vmatprep.subr.mxu0 0.0
        %984 = vmatpush1.msra.mxu0 %v979
        %985 = vmatprep.subr.mxu0 0.0
        %986 = vmatpush1.msra.mxu0 %v980
        %987 = vmatprep.subr.mxu0 0.0
        %988 = vmatpush1.msra.mxu0 %v981
        %989 = vmatprep.subr.mxu0 0.0
        %990 = vmatpush1.msra.mxu0 %v982
        %991 = vmatprep.subr.mxu0 0.0
        %992 = vmatpush1.msra.mxu0 0.0
        %993 = vmatprep.subr.mxu0 0.0
        %994 = vmatpush1.msra.mxu0 0.0
        %995 = vmatprep.subr.mxu0 0.0
        %996 = vmatpush1.msra.mxu0 0.0
        %997 = vmatprep.subr.mxu0 0.0
        %998 = vmatpush1.msra.mxu0 0.0
        %999 = vmatprep.subr.mxu0 0.0
        %1000 = vmatpush1.msra.mxu0 0.0
        %1001 = vmatprep.subr.mxu0 0.0
        %1002 = vmatpush1.msra.mxu0 0.0
        %1003 = vmatprep.subr.mxu0 0.0
        %1004 = vmatpush1.msra.mxu0 0.0
        %1005 = vmatprep.subr.mxu0 0.0
        %1006 = vmatpush1.msra.mxu0 0.0
        %1007 = vmatprep.subr.mxu0 0.0
        %1008 = vmatpush1.msra.mxu0 0.0
        %1009 = vmatprep.subr.mxu0 0.0
        %1010 = vmatpush1.msra.mxu0 0.0
        %1011 = vmatprep.subr.mxu0 0.0
        %1012 = vmatpush1.msra.mxu0 0.0
        %1013 = vmatprep.subr.mxu0 0.0
        %1014 = vmatpush1.msra.mxu0 0.0
        %1015 = vmatprep.subr.mxu0 0.0
        %1016 = vmatpush1.msra.mxu0 0.0
        %1017 = vmatprep.subr.mxu0 0.0
        %1018 = vmatpush1.msra.mxu0 0.0
        %1019 = vmatprep.subr.mxu0 0.0
        %1020 = vmatpush1.msra.mxu0 0.0
        %1021 = vmatprep.subr.mxu0 0.0
        %1022 = vmatpush1.msra.mxu0 0.0
        %1023 = vmatprep.subr.mxu0 0.0
        %1024 = vmatpush1.msra.mxu0 0.0
        %1025 = vmatprep.subr.mxu0 0.0
        %1026 = vmatpush1.msra.mxu0 0.0
        %1027 = vmatprep.subr.mxu0 0.0
        %1028 = vmatpush1.msra.mxu0 0.0
        %1029 = vmatprep.subr.mxu0 0.0
        %1030 = vmatpush1.msra.mxu0 0.0
        %1031 = vmatprep.subr.mxu0 0.0
        %1032 = vmatpush1.msra.mxu0 0.0
        %1033 = vmatprep.subr.mxu0 0.0
        %1034 = vmatpush1.msra.mxu0 0.0
        %1035 = vmatprep.subr.mxu0 0.0
        %1036 = vmatpush1.msra.mxu0 0.0
        %1037 = vmatprep.subr.mxu0 0.0
        %1038 = vmatpush1.msra.mxu0 0.0
        %1039 = vmatprep.subr.mxu0 0.0
        %1040 = vmatpush1.msra.mxu0 0.0
        %1041 = vmatprep.subr.mxu0 0.0
        %1042 = vmatpush1.msra.mxu0 0.0
        %1043 = vmatprep.subr.mxu0 0.0
        %1044 = vmatpush1.msra.mxu0 0.0
        %1045 = vmatprep.subr.mxu0 0.0
        %1046 = vmatpush1.msra.mxu0 0.0
        %1047 = vmatprep.mubr.f32.mxu0 0.0
        %1048 = vmatmul.mubr.f32.gmra.mrb[0].mxu0 %v741
        %v1049 = vpop.f32.mrb[0].mxu0
        %v1050 = vadd.f32 0.0, %v1049
        %v1051 = vpop.f32.mrb[0].mxu0
        %1052 = vdwg.mxu0
        %v1053 = vadd.f32 %v978, %v1050
        %v1054 = vtanh.pop %v1053
        %v1055 = vmul.f32 %v897, 0.0
        %v1056 = vmul.f32 %v817, %v1054
        %v1057 = vadd.f32 %v1055, %v1056
        %v1058 = vtanh.pop %v1057
        %v1059 = vmul.f32 %v977, %v1058
        %1060 = vst.msk [vmem:[#allocation6] sm:$0xff] %vm493, %v1059
        %s1061 = scalar_lea.vmem [#allocation2], 8
        %v1062 = vld [vmem:[%s1061] sm:$0xff]
        %v1063 = vld [vmem:[%s3] sm:$0xff]
        %v1064 = vld [vmem:[%s3 + $0x8] sm:$0xff]
        %v1065 = vld [vmem:[%s3 + $0x10] sm:$0xff]
        %v1066 = vld [vmem:[%s3 + $0x18] sm:$0xff]
        %v1068 = vsel %vm493, %v1059, 0
        %1070 = vmatprep.subr.mxu0 0.0
        %1071 = vmatpush1.msra.mxu0 %v1063
        %1072 = vmatprep.subr.mxu0 0.0
        %1073 = vmatpush1.msra.mxu0 %v1064
        %1074 = vmatprep.subr.mxu0 0.0
        %1075 = vmatpush1.msra.mxu0 %v1065
        %1076 = vmatprep.subr.mxu0 0.0
        %1077 = vmatpush1.msra.mxu0 %v1066
        %1078 = vmatprep.subr.mxu0 0.0
        %1079 = vmatpush1.msra.mxu0 0.0
        %1080 = vmatprep.subr.mxu0 0.0
        %1081 = vmatpush1.msra.mxu0 0.0
        %1082 = vmatprep.subr.mxu0 0.0
        %1083 = vmatpush1.msra.mxu0 0.0
        %1084 = vmatprep.subr.mxu0 0.0
        %1085 = vmatpush1.msra.mxu0 0.0
        %1086 = vmatprep.subr.mxu0 0.0
        %1087 = vmatpush1.msra.mxu0 0.0
        %1088 = vmatprep.subr.mxu0 0.0
        %1089 = vmatpush1.msra.mxu0 0.0
        %1090 = vmatprep.subr.mxu0 0.0
        %1091 = vmatpush1.msra.mxu0 0.0
        %1092 = vmatprep.subr.mxu0 0.0
        %1093 = vmatpush1.msra.mxu0 0.0
        %1094 = vmatprep.subr.mxu0 0.0
        %1095 = vmatpush1.msra.mxu0 0.0
        %1096 = vmatprep.subr.mxu0 0.0
        %1097 = vmatpush1.msra.mxu0 0.0
        %1098 = vmatprep.subr.mxu0 0.0
        %1099 = vmatpush1.msra.mxu0 0.0
        %1100 = vmatprep.subr.mxu0 0.0
        %1101 = vmatpush1.msra.mxu0 0.0
        %1102 = vmatprep.subr.mxu0 0.0
        %1103 = vmatpush1.msra.mxu0 0.0
        %1104 = vmatprep.subr.mxu0 0.0
        %1105 = vmatpush1.msra.mxu0 0.0
        %1106 = vmatprep.subr.mxu0 0.0
        %1107 = vmatpush1.msra.mxu0 0.0
        %1108 = vmatprep.subr.mxu0 0.0
        %1109 = vmatpush1.msra.mxu0 0.0
        %1110 = vmatprep.subr.mxu0 0.0
        %1111 = vmatpush1.msra.mxu0 0.0
        %1112 = vmatprep.subr.mxu0 0.0
        %1113 = vmatpush1.msra.mxu0 0.0
        %1114 = vmatprep.subr.mxu0 0.0
        %1115 = vmatpush1.msra.mxu0 0.0
        %1116 = vmatprep.subr.mxu0 0.0
        %1117 = vmatpush1.msra.mxu0 0.0
        %1118 = vmatprep.subr.mxu0 0.0
        %1119 = vmatpush1.msra.mxu0 0.0
        %1120 = vmatprep.subr.mxu0 0.0
        %1121 = vmatpush1.msra.mxu0 0.0
        %1122 = vmatprep.subr.mxu0 0.0
        %1123 = vmatpush1.msra.mxu0 0.0
        %1124 = vmatprep.subr.mxu0 0.0
        %1125 = vmatpush1.msra.mxu0 0.0
        %1126 = vmatprep.subr.mxu0 0.0
        %1127 = vmatpush1.msra.mxu0 0.0
        %1128 = vmatprep.subr.mxu0 0.0
        %1129 = vmatpush1.msra.mxu0 0.0
        %1130 = vmatprep.subr.mxu0 0.0
        %1131 = vmatpush1.msra.mxu0 0.0
        %1132 = vmatprep.subr.mxu0 0.0
        %1133 = vmatpush1.msra.mxu0 0.0
        %1134 = vmatprep.mubr.f32.mxu0 0.0
        %1135 = vmatmul.mubr.f32.gmra.mrb[0].mxu0 %v1068
        %v1136 = vpop.f32.mrb[0].mxu0
        %v1137 = vadd.f32 0.0, %v1136
        %v1138 = vpop.f32.mrb[0].mxu0
        %1139 = vdwg.mxu0
        %v1140 = vadd.f32 %v1062, %v1137
        %v1141 = vmul.f32 %v1140, 0.5
        %v1142 = vtanh.pop %v1141
        %v1143 = vmul.f32 %v1142, 0.5
        %v1144 = vadd.f32 %v1143, 0.5
        %s1145 = scalar_lea.vmem [#allocation3], 8
        %v1146 = vld [vmem:[%s1145] sm:$0xff]
        %v1147 = vld [vmem:[%s4] sm:$0xff]
        %v1148 = vld [vmem:[%s4 + $0x8] sm:$0xff]
        %v1149 = vld [vmem:[%s4 + $0x10] sm:$0xff]
        %v1150 = vld [vmem:[%s4 + $0x18] sm:$0xff]
        %1151 = vmatprep.subr.mxu0 0.0
        %1152 = vmatpush1.msra.mxu0 %v1147
        %1153 = vmatprep.subr.mxu0 0.0
        %1154 = vmatpush1.msra.mxu0 %v1148
        %1155 = vmatprep.subr.mxu0 0.0
        %1156 = vmatpush1.msra.mxu0 %v1149
        %1157 = vmatprep.subr.mxu0 0.0
        %1158 = vmatpush1.msra.mxu0 %v1150
        %1159 = vmatprep.subr.mxu0 0.0
        %1160 = vmatpush1.msra.mxu0 0.0
        %1161 = vmatprep.subr.mxu0 0.0
        %1162 = vmatpush1.msra.mxu0 0.0
        %1163 = vmatprep.subr.mxu0 0.0
        %1164 = vmatpush1.msra.mxu0 0.0
        %1165 = vmatprep.subr.mxu0 0.0
        %1166 = vmatpush1.msra.mxu0 0.0
        %1167 = vmatprep.subr.mxu0 0.0
        %1168 = vmatpush1.msra.mxu0 0.0
        %1169 = vmatprep.subr.mxu0 0.0
        %1170 = vmatpush1.msra.mxu0 0.0
        %1171 = vmatprep.subr.mxu0 0.0
        %1172 = vmatpush1.msra.mxu0 0.0
        %1173 = vmatprep.subr.mxu0 0.0
        %1174 = vmatpush1.msra.mxu0 0.0
        %1175 = vmatprep.subr.mxu0 0.0
        %1176 = vmatpush1.msra.mxu0 0.0
        %1177 = vmatprep.subr.mxu0 0.0
        %1178 = vmatpush1.msra.mxu0 0.0
        %1179 = vmatprep.subr.mxu0 0.0
        %1180 = vmatpush1.msra.mxu0 0.0
        %1181 = vmatprep.subr.mxu0 0.0
        %1182 = vmatpush1.msra.mxu0 0.0
        %1183 = vmatprep.subr.mxu0 0.0
        %1184 = vmatpush1.msra.mxu0 0.0
        %1185 = vmatprep.subr.mxu0 0.0
        %1186 = vmatpush1.msra.mxu0 0.0
        %1187 = vmatprep.subr.mxu0 0.0
        %1188 = vmatpush1.msra.mxu0 0.0
        %1189 = vmatprep.subr.mxu0 0.0
        %1190 = vmatpush1.msra.mxu0 0.0
        %1191 = vmatprep.subr.mxu0 0.0
        %1192 = vmatpush1.msra.mxu0 0.0
        %1193 = vmatprep.subr.mxu0 0.0
        %1194 = vmatpush1.msra.mxu0 0.0
        %1195 = vmatprep.subr.mxu0 0.0
        %1196 = vmatpush1.msra.mxu0 0.0
        %1197 = vmatprep.subr.mxu0 0.0
        %1198 = vmatpush1.msra.mxu0 0.0
        %1199 = vmatprep.subr.mxu0 0.0
        %1200 = vmatpush1.msra.mxu0 0.0
        %1201 = vmatprep.subr.mxu0 0.0
        %1202 = vmatpush1.msra.mxu0 0.0
        %1203 = vmatprep.subr.mxu0 0.0
        %1204 = vmatpush1.msra.mxu0 0.0
        %1205 = vmatprep.subr.mxu0 0.0
        %1206 = vmatpush1.msra.mxu0 0.0
        %1207 = vmatprep.subr.mxu0 0.0
        %1208 = vmatpush1.msra.mxu0 0.0
        %1209 = vmatprep.subr.mxu0 0.0
        %1210 = vmatpush1.msra.mxu0 0.0
        %1211 = vmatprep.subr.mxu0 0.0
        %1212 = vmatpush1.msra.mxu0 0.0
        %1213 = vmatprep.subr.mxu0 0.0
        %1214 = vmatpush1.msra.mxu0 0.0
        %1215 = vmatprep.mubr.f32.mxu0 0.0
        %1216 = vmatmul.mubr.f32.gmra.mrb[0].mxu0 %v1068
        %v1217 = vpop.f32.mrb[0].mxu0
        %v1218 = vadd.f32 0.0, %v1217
        %v1219 = vpop.f32.mrb[0].mxu0
        %1220 = vdwg.mxu0
        %v1221 = vadd.f32 %v1146, %v1218
        %v1222 = vmul.f32 %v1221, 0.5
        %v1223 = vtanh.pop %v1222
        %v1224 = vmul.f32 %v1223, 0.5
        %v1225 = vadd.f32 %v1224, 0.5
        %s1226 = scalar_lea.vmem [#allocation4], 8
        %v1227 = vld [vmem:[%s1226] sm:$0xff]
        %v1228 = vld [vmem:[%s5] sm:$0xff]
        %v1229 = vld [vmem:[%s5 + $0x8] sm:$0xff]
        %v1230 = vld [vmem:[%s5 + $0x10] sm:$0xff]
        %v1231 = vld [vmem:[%s5 + $0x18] sm:$0xff]
        %1232 = vmatprep.subr.mxu0 0.0
        %1233 = vmatpush1.msra.mxu0 %v1228
        %1234 = vmatprep.subr.mxu0 0.0
        %1235 = vmatpush1.msra.mxu0 %v1229
        %1236 = vmatprep.subr.mxu0 0.0
        %1237 = vmatpush1.msra.mxu0 %v1230
        %1238 = vmatprep.subr.mxu0 0.0
        %1239 = vmatpush1.msra.mxu0 %v1231
        %1240 = vmatprep.subr.mxu0 0.0
        %1241 = vmatpush1.msra.mxu0 0.0
        %1242 = vmatprep.subr.mxu0 0.0
        %1243 = vmatpush1.msra.mxu0 0.0
        %1244 = vmatprep.subr.mxu0 0.0
        %1245 = vmatpush1.msra.mxu0 0.0
        %1246 = vmatprep.subr.mxu0 0.0
        %1247 = vmatpush1.msra.mxu0 0.0
        %1248 = vmatprep.subr.mxu0 0.0
        %1249 = vmatpush1.msra.mxu0 0.0
        %1250 = vmatprep.subr.mxu0 0.0
        %1251 = vmatpush1.msra.mxu0 0.0
        %1252 = vmatprep.subr.mxu0 0.0
        %1253 = vmatpush1.msra.mxu0 0.0
        %1254 = vmatprep.subr.mxu0 0.0
        %1255 = vmatpush1.msra.mxu0 0.0
        %1256 = vmatprep.subr.mxu0 0.0
        %1257 = vmatpush1.msra.mxu0 0.0
        %1258 = vmatprep.subr.mxu0 0.0
        %1259 = vmatpush1.msra.mxu0 0.0
        %1260 = vmatprep.subr.mxu0 0.0
        %1261 = vmatpush1.msra.mxu0 0.0
        %1262 = vmatprep.subr.mxu0 0.0
        %1263 = vmatpush1.msra.mxu0 0.0
        %1264 = vmatprep.subr.mxu0 0.0
        %1265 = vmatpush1.msra.mxu0 0.0
        %1266 = vmatprep.subr.mxu0 0.0
        %1267 = vmatpush1.msra.mxu0 0.0
        %1268 = vmatprep.subr.mxu0 0.0
        %1269 = vmatpush1.msra.mxu0 0.0
        %1270 = vmatprep.subr.mxu0 0.0
        %1271 = vmatpush1.msra.mxu0 0.0
        %1272 = vmatprep.subr.mxu0 0.0
        %1273 = vmatpush1.msra.mxu0 0.0
        %1274 = vmatprep.subr.mxu0 0.0
        %1275 = vmatpush1.msra.mxu0 0.0
        %1276 = vmatprep.subr.mxu0 0.0
        %1277 = vmatpush1.msra.mxu0 0.0
        %1278 = vmatprep.subr.mxu0 0.0
        %1279 = vmatpush1.msra.mxu0 0.0
        %1280 = vmatprep.subr.mxu0 0.0
        %1281 = vmatpush1.msra.mxu0 0.0
        %1282 = vmatprep.subr.mxu0 0.0
        %1283 = vmatpush1.msra.mxu0 0.0
        %1284 = vmatprep.subr.mxu0 0.0
        %1285 = vmatpush1.msra.mxu0 0.0
        %1286 = vmatprep.subr.mxu0 0.0
        %1287 = vmatpush1.msra.mxu0 0.0
        %1288 = vmatprep.subr.mxu0 0.0
        %1289 = vmatpush1.msra.mxu0 0.0
        %1290 = vmatprep.subr.mxu0 0.0
        %1291 = vmatpush1.msra.mxu0 0.0
        %1292 = vmatprep.subr.mxu0 0.0
        %1293 = vmatpush1.msra.mxu0 0.0
        %1294 = vmatprep.subr.mxu0 0.0
        %1295 = vmatpush1.msra.mxu0 0.0
        %1296 = vmatprep.mubr.f32.mxu0 0.0
        %1297 = vmatmul.mubr.f32.gmra.mrb[0].mxu0 %v1068
        %v1298 = vpop.f32.mrb[0].mxu0
        %v1299 = vadd.f32 0.0, %v1298
        %v1300 = vpop.f32.mrb[0].mxu0
        %1301 = vdwg.mxu0
        %v1302 = vadd.f32 %v1227, %v1299
        %v1303 = vmul.f32 %v1302, 0.5
        %v1304 = vtanh.pop %v1303
        %v1305 = vmul.f32 %v1304, 0.5
        %v1306 = vadd.f32 %v1305, 0.5
        %s1307 = scalar_lea.vmem [#allocation5], 8
        %v1308 = vld [vmem:[%s1307] sm:$0xff]
        %v1309 = vld [vmem:[%s6] sm:$0xff]
        %v1310 = vld [vmem:[%s6 + $0x8] sm:$0xff]
        %v1311 = vld [vmem:[%s6 + $0x10] sm:$0xff]
        %v1312 = vld [vmem:[%s6 + $0x18] sm:$0xff]
        %1313 = vmatprep.subr.mxu0 0.0
        %1314 = vmatpush1.msra.mxu0 %v1309
        %1315 = vmatprep.subr.mxu0 0.0
        %1316 = vmatpush1.msra.mxu0 %v1310
        %1317 = vmatprep.subr.mxu0 0.0
        %1318 = vmatpush1.msra.mxu0 %v1311
        %1319 = vmatprep.subr.mxu0 0.0
        %1320 = vmatpush1.msra.mxu0 %v1312
        %1321 = vmatprep.subr.mxu0 0.0
        %1322 = vmatpush1.msra.mxu0 0.0
        %1323 = vmatprep.subr.mxu0 0.0
        %1324 = vmatpush1.msra.mxu0 0.0
        %1325 = vmatprep.subr.mxu0 0.0
        %1326 = vmatpush1.msra.mxu0 0.0
        %1327 = vmatprep.subr.mxu0 0.0
        %1328 = vmatpush1.msra.mxu0 0.0
        %1329 = vmatprep.subr.mxu0 0.0
        %1330 = vmatpush1.msra.mxu0 0.0
        %1331 = vmatprep.subr.mxu0 0.0
        %1332 = vmatpush1.msra.mxu0 0.0
        %1333 = vmatprep.subr.mxu0 0.0
        %1334 = vmatpush1.msra.mxu0 0.0
        %1335 = vmatprep.subr.mxu0 0.0
        %1336 = vmatpush1.msra.mxu0 0.0
        %1337 = vmatprep.subr.mxu0 0.0
        %1338 = vmatpush1.msra.mxu0 0.0
        %1339 = vmatprep.subr.mxu0 0.0
        %1340 = vmatpush1.msra.mxu0 0.0
        %1341 = vmatprep.subr.mxu0 0.0
        %1342 = vmatpush1.msra.mxu0 0.0
        %1343 = vmatprep.subr.mxu0 0.0
        %1344 = vmatpush1.msra.mxu0 0.0
        %1345 = vmatprep.subr.mxu0 0.0
        %1346 = vmatpush1.msra.mxu0 0.0
        %1347 = vmatprep.subr.mxu0 0.0
        %1348 = vmatpush1.msra.mxu0 0.0
        %1349 = vmatprep.subr.mxu0 0.0
        %1350 = vmatpush1.msra.mxu0 0.0
        %1351 = vmatprep.subr.mxu0 0.0
        %1352 = vmatpush1.msra.mxu0 0.0
        %1353 = vmatprep.subr.mxu0 0.0
        %1354 = vmatpush1.msra.mxu0 0.0
        %1355 = vmatprep.subr.mxu0 0.0
        %1356 = vmatpush1.msra.mxu0 0.0
        %1357 = vmatprep.subr.mxu0 0.0
        %1358 = vmatpush1.msra.mxu0 0.0
        %1359 = vmatprep.subr.mxu0 0.0
        %1360 = vmatpush1.msra.mxu0 0.0
        %1361 = vmatprep.subr.mxu0 0.0
        %1362 = vmatpush1.msra.mxu0 0.0
        %1363 = vmatprep.subr.mxu0 0.0
        %1364 = vmatpush1.msra.mxu0 0.0
        %1365 = vmatprep.subr.mxu0 0.0
        %1366 = vmatpush1.msra.mxu0 0.0
        %1367 = vmatprep.subr.mxu0 0.0
        %1368 = vmatpush1.msra.mxu0 0.0
        %1369 = vmatprep.subr.mxu0 0.0
        %1370 = vmatpush1.msra.mxu0 0.0
        %1371 = vmatprep.subr.mxu0 0.0
        %1372 = vmatpush1.msra.mxu0 0.0
        %1373 = vmatprep.subr.mxu0 0.0
        %1374 = vmatpush1.msra.mxu0 0.0
        %1375 = vmatprep.subr.mxu0 0.0
        %1376 = vmatpush1.msra.mxu0 0.0
        %1377 = vmatprep.mubr.f32.mxu0 0.0
        %1378 = vmatmul.mubr.f32.gmra.mrb[0].mxu0 %v1068
        %v1379 = vpop.f32.mrb[0].mxu0
        %v1380 = vadd.f32 0.0, %v1379
        %v1381 = vpop.f32.mrb[0].mxu0
        %1382 = vdwg.mxu0
        %v1383 = vadd.f32 %v1308, %v1380
        %v1384 = vtanh.pop %v1383
        %v1385 = vmul.f32 %v1225, %v1057
        %v1386 = vmul.f32 %v1144, %v1384
        %v1387 = vadd.f32 %v1385, %v1386
        %v1388 = vtanh.pop %v1387
        %v1389 = vmul.f32 %v1306, %v1388
        %s1390 = scalar_lea.vmem [#allocation6], 8
        %1391 = vst.msk [vmem:[%s1390] sm:$0xff] %vm493, %v1389
        %s1392 = scalar_lea.vmem [#allocation2], 16
        %v1393 = vld [vmem:[%s1392] sm:$0xff]
        %v1394 = vld [vmem:[%s3] sm:$0xff]
        %v1395 = vld [vmem:[%s3 + $0x8] sm:$0xff]
        %v1396 = vld [vmem:[%s3 + $0x10] sm:$0xff]
        %v1397 = vld [vmem:[%s3 + $0x18] sm:$0xff]
        %v1399 = vsel %vm493, %v1389, 0
        %1401 = vmatprep.subr.mxu0 0.0
        %1402 = vmatpush1.msra.mxu0 %v1394
        %1403 = vmatprep.subr.mxu0 0.0
        %1404 = vmatpush1.msra.mxu0 %v1395
        %1405 = vmatprep.subr.mxu0 0.0
        %1406 = vmatpush1.msra.mxu0 %v1396
        %1407 = vmatprep.subr.mxu0 0.0
        %1408 = vmatpush1.msra.mxu0 %v1397
        %1409 = vmatprep.subr.mxu0 0.0
        %1410 = vmatpush1.msra.mxu0 0.0
        %1411 = vmatprep.subr.mxu0 0.0
        %1412 = vmatpush1.msra.mxu0 0.0
        %1413 = vmatprep.subr.mxu0 0.0
        %1414 = vmatpush1.msra.mxu0 0.0
        %1415 = vmatprep.subr.mxu0 0.0
        %1416 = vmatpush1.msra.mxu0 0.0
        %1417 = vmatprep.subr.mxu0 0.0
        %1418 = vmatpush1.msra.mxu0 0.0
        %1419 = vmatprep.subr.mxu0 0.0
        %1420 = vmatpush1.msra.mxu0 0.0
        %1421 = vmatprep.subr.mxu0 0.0
        %1422 = vmatpush1.msra.mxu0 0.0
        %1423 = vmatprep.subr.mxu0 0.0
        %1424 = vmatpush1.msra.mxu0 0.0
        %1425 = vmatprep.subr.mxu0 0.0
        %1426 = vmatpush1.msra.mxu0 0.0
        %1427 = vmatprep.subr.mxu0 0.0
        %1428 = vmatpush1.msra.mxu0 0.0
        %1429 = vmatprep.subr.mxu0 0.0
        %1430 = vmatpush1.msra.mxu0 0.0
        %1431 = vmatprep.subr.mxu0 0.0
        %1432 = vmatpush1.msra.mxu0 0.0
        %1433 = vmatprep.subr.mxu0 0.0
        %1434 = vmatpush1.msra.mxu0 0.0
        %1435 = vmatprep.subr.mxu0 0.0
        %1436 = vmatpush1.msra.mxu0 0.0
        %1437 = vmatprep.subr.mxu0 0.0
        %1438 = vmatpush1.msra.mxu0 0.0
        %1439 = vmatprep.subr.mxu0 0.0
        %1440 = vmatpush1.msra.mxu0 0.0
        %1441 = vmatprep.subr.mxu0 0.0
        %1442 = vmatpush1.msra.mxu0 0.0
        %1443 = vmatprep.subr.mxu0 0.0
        %1444 = vmatpush1.msra.mxu0 0.0
        %1445 = vmatprep.subr.mxu0 0.0
        %1446 = vmatpush1.msra.mxu0 0.0
        %1447 = vmatprep.subr.mxu0 0.0
        %1448 = vmatpush1.msra.mxu0 0.0
        %1449 = vmatprep.subr.mxu0 0.0
        %1450 = vmatpush1.msra.mxu0 0.0
        %1451 = vmatprep.subr.mxu0 0.0
        %1452 = vmatpush1.msra.mxu0 0.0
        %1453 = vmatprep.subr.mxu0 0.0
        %1454 = vmatpush1.msra.mxu0 0.0
        %1455 = vmatprep.subr.mxu0 0.0
        %1456 = vmatpush1.msra.mxu0 0.0
        %1457 = vmatprep.subr.mxu0 0.0
        %1458 = vmatpush1.msra.mxu0 0.0
        %1459 = vmatprep.subr.mxu0 0.0
        %1460 = vmatpush1.msra.mxu0 0.0
        %1461 = vmatprep.subr.mxu0 0.0
        %1462 = vmatpush1.msra.mxu0 0.0
        %1463 = vmatprep.subr.mxu0 0.0
        %1464 = vmatpush1.msra.mxu0 0.0
        %1465 = vmatprep.mubr.f32.mxu0 0.0
        %1466 = vmatmul.mubr.f32.gmra.mrb[0].mxu0 %v1399
        %v1467 = vpop.f32.mrb[0].mxu0
        %v1468 = vadd.f32 0.0, %v1467
        %v1469 = vpop.f32.mrb[0].mxu0
        %1470 = vdwg.mxu0
        %v1471 = vadd.f32 %v1393, %v1468
        %v1472 = vmul.f32 %v1471, 0.5
        %v1473 = vtanh.pop %v1472
        %v1474 = vmul.f32 %v1473, 0.5
        %v1475 = vadd.f32 %v1474, 0.5
        %s1476 = scalar_lea.vmem [#allocation3], 16
        %v1477 = vld [vmem:[%s1476] sm:$0xff]
        %v1478 = vld [vmem:[%s4] sm:$0xff]
        %v1479 = vld [vmem:[%s4 + $0x8] sm:$0xff]
        %v1480 = vld [vmem:[%s4 + $0x10] sm:$0xff]
        %v1481 = vld [vmem:[%s4 + $0x18] sm:$0xff]
        %1482 = vmatprep.subr.mxu0 0.0
        %1483 = vmatpush1.msra.mxu0 %v1478
        %1484 = vmatprep.subr.mxu0 0.0
        %1485 = vmatpush1.msra.mxu0 %v1479
        %1486 = vmatprep.subr.mxu0 0.0
        %1487 = vmatpush1.msra.mxu0 %v1480
        %1488 = vmatprep.subr.mxu0 0.0
        %1489 = vmatpush1.msra.mxu0 %v1481
        %1490 = vmatprep.subr.mxu0 0.0
        %1491 = vmatpush1.msra.mxu0 0.0
        %1492 = vmatprep.subr.mxu0 0.0
        %1493 = vmatpush1.msra.mxu0 0.0
        %1494 = vmatprep.subr.mxu0 0.0
        %1495 = vmatpush1.msra.mxu0 0.0
        %1496 = vmatprep.subr.mxu0 0.0
        %1497 = vmatpush1.msra.mxu0 0.0
        %1498 = vmatprep.subr.mxu0 0.0
        %1499 = vmatpush1.msra.mxu0 0.0
        %1500 = vmatprep.subr.mxu0 0.0
        %1501 = vmatpush1.msra.mxu0 0.0
        %1502 = vmatprep.subr.mxu0 0.0
        %1503 = vmatpush1.msra.mxu0 0.0
        %1504 = vmatprep.subr.mxu0 0.0
        %1505 = vmatpush1.msra.mxu0 0.0
        %1506 = vmatprep.subr.mxu0 0.0
        %1507 = vmatpush1.msra.mxu0 0.0
        %1508 = vmatprep.subr.mxu0 0.0
        %1509 = vmatpush1.msra.mxu0 0.0
        %1510 = vmatprep.subr.mxu0 0.0
        %1511 = vmatpush1.msra.mxu0 0.0
        %1512 = vmatprep.subr.mxu0 0.0
        %1513 = vmatpush1.msra.mxu0 0.0
        %1514 = vmatprep.subr.mxu0 0.0
        %1515 = vmatpush1.msra.mxu0 0.0
        %1516 = vmatprep.subr.mxu0 0.0
        %1517 = vmatpush1.msra.mxu0 0.0
        %1518 = vmatprep.subr.mxu0 0.0
        %1519 = vmatpush1.msra.mxu0 0.0
        %1520 = vmatprep.subr.mxu0 0.0
        %1521 = vmatpush1.msra.mxu0 0.0
        %1522 = vmatprep.subr.mxu0 0.0
        %1523 = vmatpush1.msra.mxu0 0.0
        %1524 = vmatprep.subr.mxu0 0.0
        %1525 = vmatpush1.msra.mxu0 0.0
        %1526 = vmatprep.subr.mxu0 0.0
        %1527 = vmatpush1.msra.mxu0 0.0
        %1528 = vmatprep.subr.mxu0 0.0
        %1529 = vmatpush1.msra.mxu0 0.0
        %1530 = vmatprep.subr.mxu0 0.0
        %1531 = vmatpush1.msra.mxu0 0.0
        %1532 = vmatprep.subr.mxu0 0.0
        %1533 = vmatpush1.msra.mxu0 0.0
        %1534 = vmatprep.subr.mxu0 0.0
        %1535 = vmatpush1.msra.mxu0 0.0
        %1536 = vmatprep.subr.mxu0 0.0
        %1537 = vmatpush1.msra.mxu0 0.0
        %1538 = vmatprep.subr.mxu0 0.0
        %1539 = vmatpush1.msra.mxu0 0.0
        %1540 = vmatprep.subr.mxu0 0.0
        %1541 = vmatpush1.msra.mxu0 0.0
        %1542 = vmatprep.subr.mxu0 0.0
        %1543 = vmatpush1.msra.mxu0 0.0
        %1544 = vmatprep.subr.mxu0 0.0
        %1545 = vmatpush1.msra.mxu0 0.0
        %1546 = vmatprep.mubr.f32.mxu0 0.0
        %1547 = vmatmul.mubr.f32.gmra.mrb[0].mxu0 %v1399
        %v1548 = vpop.f32.mrb[0].mxu0
        %v1549 = vadd.f32 0.0, %v1548
        %v1550 = vpop.f32.mrb[0].mxu0
        %1551 = vdwg.mxu0
        %v1552 = vadd.f32 %v1477, %v1549
        %v1553 = vmul.f32 %v1552, 0.5
        %v1554 = vtanh.pop %v1553
        %v1555 = vmul.f32 %v1554, 0.5
        %v1556 = vadd.f32 %v1555, 0.5
        %s1557 = scalar_lea.vmem [#allocation4], 16
        %v1558 = vld [vmem:[%s1557] sm:$0xff]
        %v1559 = vld [vmem:[%s5] sm:$0xff]
        %v1560 = vld [vmem:[%s5 + $0x8] sm:$0xff]
        %v1561 = vld [vmem:[%s5 + $0x10] sm:$0xff]
        %v1562 = vld [vmem:[%s5 + $0x18] sm:$0xff]
        %1563 = vmatprep.subr.mxu0 0.0
        %1564 = vmatpush1.msra.mxu0 %v1559
        %1565 = vmatprep.subr.mxu0 0.0
        %1566 = vmatpush1.msra.mxu0 %v1560
        %1567 = vmatprep.subr.mxu0 0.0
        %1568 = vmatpush1.msra.mxu0 %v1561
        %1569 = vmatprep.subr.mxu0 0.0
        %1570 = vmatpush1.msra.mxu0 %v1562
        %1571 = vmatprep.subr.mxu0 0.0
        %1572 = vmatpush1.msra.mxu0 0.0
        %1573 = vmatprep.subr.mxu0 0.0
        %1574 = vmatpush1.msra.mxu0 0.0
        %1575 = vmatprep.subr.mxu0 0.0
        %1576 = vmatpush1.msra.mxu0 0.0
        %1577 = vmatprep.subr.mxu0 0.0
        %1578 = vmatpush1.msra.mxu0 0.0
        %1579 = vmatprep.subr.mxu0 0.0
        %1580 = vmatpush1.msra.mxu0 0.0
        %1581 = vmatprep.subr.mxu0 0.0
        %1582 = vmatpush1.msra.mxu0 0.0
        %1583 = vmatprep.subr.mxu0 0.0
        %1584 = vmatpush1.msra.mxu0 0.0
        %1585 = vmatprep.subr.mxu0 0.0
        %1586 = vmatpush1.msra.mxu0 0.0
        %1587 = vmatprep.subr.mxu0 0.0
        %1588 = vmatpush1.msra.mxu0 0.0
        %1589 = vmatprep.subr.mxu0 0.0
        %1590 = vmatpush1.msra.mxu0 0.0
        %1591 = vmatprep.subr.mxu0 0.0
        %1592 = vmatpush1.msra.mxu0 0.0
        %1593 = vmatprep.subr.mxu0 0.0
        %1594 = vmatpush1.msra.mxu0 0.0
        %1595 = vmatprep.subr.mxu0 0.0
        %1596 = vmatpush1.msra.mxu0 0.0
        %1597 = vmatprep.subr.mxu0 0.0
        %1598 = vmatpush1.msra.mxu0 0.0
        %1599 = vmatprep.subr.mxu0 0.0
        %1600 = vmatpush1.msra.mxu0 0.0
        %1601 = vmatprep.subr.mxu0 0.0
        %1602 = vmatpush1.msra.mxu0 0.0
        %1603 = vmatprep.subr.mxu0 0.0
        %1604 = vmatpush1.msra.mxu0 0.0
        %1605 = vmatprep.subr.mxu0 0.0
        %1606 = vmatpush1.msra.mxu0 0.0
        %1607 = vmatprep.subr.mxu0 0.0
        %1608 = vmatpush1.msra.mxu0 0.0
        %1609 = vmatprep.subr.mxu0 0.0
        %1610 = vmatpush1.msra.mxu0 0.0
        %1611 = vmatprep.subr.mxu0 0.0
        %1612 = vmatpush1.msra.mxu0 0.0
        %1613 = vmatprep.subr.mxu0 0.0
        %1614 = vmatpush1.msra.mxu0 0.0
        %1615 = vmatprep.subr.mxu0 0.0
        %1616 = vmatpush1.msra.mxu0 0.0
        %1617 = vmatprep.subr.mxu0 0.0
        %1618 = vmatpush1.msra.mxu0 0.0
        %1619 = vmatprep.subr.mxu0 0.0
        %1620 = vmatpush1.msra.mxu0 0.0
        %1621 = vmatprep.subr.mxu0 0.0
        %1622 = vmatpush1.msra.mxu0 0.0
        %1623 = vmatprep.subr.mxu0 0.0
        %1624 = vmatpush1.msra.mxu0 0.0
        %1625 = vmatprep.subr.mxu0 0.0
        %1626 = vmatpush1.msra.mxu0 0.0
        %1627 = vmatprep.mubr.f32.mxu0 0.0
        %1628 = vmatmul.mubr.f32.gmra.mrb[0].mxu0 %v1399
        %v1629 = vpop.f32.mrb[0].mxu0
        %v1630 = vadd.f32 0.0, %v1629
        %v1631 = vpop.f32.mrb[0].mxu0
        %1632 = vdwg.mxu0
        %v1633 = vadd.f32 %v1558, %v1630
        %v1634 = vmul.f32 %v1633, 0.5
        %v1635 = vtanh.pop %v1634
        %v1636 = vmul.f32 %v1635, 0.5
        %v1637 = vadd.f32 %v1636, 0.5
        %s1638 = scalar_lea.vmem [#allocation5], 16
        %v1639 = vld [vmem:[%s1638] sm:$0xff]
        %v1640 = vld [vmem:[%s6] sm:$0xff]
        %v1641 = vld [vmem:[%s6 + $0x8] sm:$0xff]
        %v1642 = vld [vmem:[%s6 + $0x10] sm:$0xff]
        %v1643 = vld [vmem:[%s6 + $0x18] sm:$0xff]
        %1644 = vmatprep.subr.mxu0 0.0
        %1645 = vmatpush1.msra.mxu0 %v1640
        %1646 = vmatprep.subr.mxu0 0.0
        %1647 = vmatpush1.msra.mxu0 %v1641
        %1648 = vmatprep.subr.mxu0 0.0
        %1649 = vmatpush1.msra.mxu0 %v1642
        %1650 = vmatprep.subr.mxu0 0.0
        %1651 = vmatpush1.msra.mxu0 %v1643
        %1652 = vmatprep.subr.mxu0 0.0
        %1653 = vmatpush1.msra.mxu0 0.0
        %1654 = vmatprep.subr.mxu0 0.0
        %1655 = vmatpush1.msra.mxu0 0.0
        %1656 = vmatprep.subr.mxu0 0.0
        %1657 = vmatpush1.msra.mxu0 0.0
        %1658 = vmatprep.subr.mxu0 0.0
        %1659 = vmatpush1.msra.mxu0 0.0
        %1660 = vmatprep.subr.mxu0 0.0
        %1661 = vmatpush1.msra.mxu0 0.0
        %1662 = vmatprep.subr.mxu0 0.0
        %1663 = vmatpush1.msra.mxu0 0.0
        %1664 = vmatprep.subr.mxu0 0.0
        %1665 = vmatpush1.msra.mxu0 0.0
        %1666 = vmatprep.subr.mxu0 0.0
        %1667 = vmatpush1.msra.mxu0 0.0
        %1668 = vmatprep.subr.mxu0 0.0
        %1669 = vmatpush1.msra.mxu0 0.0
        %1670 = vmatprep.subr.mxu0 0.0
        %1671 = vmatpush1.msra.mxu0 0.0
        %1672 = vmatprep.subr.mxu0 0.0
        %1673 = vmatpush1.msra.mxu0 0.0
        %1674 = vmatprep.subr.mxu0 0.0
        %1675 = vmatpush1.msra.mxu0 0.0
        %1676 = vmatprep.subr.mxu0 0.0
        %1677 = vmatpush1.msra.mxu0 0.0
        %1678 = vmatprep.subr.mxu0 0.0
        %1679 = vmatpush1.msra.mxu0 0.0
        %1680 = vmatprep.subr.mxu0 0.0
        %1681 = vmatpush1.msra.mxu0 0.0
        %1682 = vmatprep.subr.mxu0 0.0
        %1683 = vmatpush1.msra.mxu0 0.0
        %1684 = vmatprep.subr.mxu0 0.0
        %1685 = vmatpush1.msra.mxu0 0.0
        %1686 = vmatprep.subr.mxu0 0.0
        %1687 = vmatpush1.msra.mxu0 0.0
        %1688 = vmatprep.subr.mxu0 0.0
        %1689 = vmatpush1.msra.mxu0 0.0
        %1690 = vmatprep.subr.mxu0 0.0
        %1691 = vmatpush1.msra.mxu0 0.0
        %1692 = vmatprep.subr.mxu0 0.0
        %1693 = vmatpush1.msra.mxu0 0.0
        %1694 = vmatprep.subr.mxu0 0.0
        %1695 = vmatpush1.msra.mxu0 0.0
        %1696 = vmatprep.subr.mxu0 0.0
        %1697 = vmatpush1.msra.mxu0 0.0
        %1698 = vmatprep.subr.mxu0 0.0
        %1699 = vmatpush1.msra.mxu0 0.0
        %1700 = vmatprep.subr.mxu0 0.0
        %1701 = vmatpush1.msra.mxu0 0.0
        %1702 = vmatprep.subr.mxu0 0.0
        %1703 = vmatpush1.msra.mxu0 0.0
        %1704 = vmatprep.subr.mxu0 0.0
        %1705 = vmatpush1.msra.mxu0 0.0
        %1706 = vmatprep.subr.mxu0 0.0
        %1707 = vmatpush1.msra.mxu0 0.0
        %1708 = vmatprep.mubr.f32.mxu0 0.0
        %1709 = vmatmul.mubr.f32.gmra.mrb[0].mxu0 %v1399
        %v1710 = vpop.f32.mrb[0].mxu0
        %v1711 = vadd.f32 0.0, %v1710
        %v1712 = vpop.f32.mrb[0].mxu0
        %1713 = vdwg.mxu0
        %v1714 = vadd.f32 %v1639, %v1711
        %v1715 = vtanh.pop %v1714
        %v1716 = vmul.f32 %v1556, %v1387
        %v1717 = vmul.f32 %v1475, %v1715
        %v1718 = vadd.f32 %v1716, %v1717
        %v1719 = vtanh.pop %v1718
        %v1720 = vmul.f32 %v1637, %v1719
        %s1721 = scalar_lea.vmem [#allocation6], 16
        %1722 = vst.msk [vmem:[%s1721] sm:$0xff] %vm493, %v1720
        %s1723 = scalar_lea.vmem [#allocation2], 24
        %v1724 = vld [vmem:[%s1723] sm:$0xff]
        %v1725 = vld [vmem:[%s3] sm:$0xff]
        %v1726 = vld [vmem:[%s3 + $0x8] sm:$0xff]
        %v1727 = vld [vmem:[%s3 + $0x10] sm:$0xff]
        %v1728 = vld [vmem:[%s3 + $0x18] sm:$0xff]
        %v1730 = vsel %vm493, %v1720, 0
        %1732 = vmatprep.subr.mxu0 0.0
        %1733 = vmatpush1.msra.mxu0 %v1725
        %1734 = vmatprep.subr.mxu0 0.0
        %1735 = vmatpush1.msra.mxu0 %v1726
        %1736 = vmatprep.subr.mxu0 0.0
        %1737 = vmatpush1.msra.mxu0 %v1727
        %1738 = vmatprep.subr.mxu0 0.0
        %1739 = vmatpush1.msra.mxu0 %v1728
        %1740 = vmatprep.subr.mxu0 0.0
        %1741 = vmatpush1.msra.mxu0 0.0
        %1742 = vmatprep.subr.mxu0 0.0
        %1743 = vmatpush1.msra.mxu0 0.0
        %1744 = vmatprep.subr.mxu0 0.0
        %1745 = vmatpush1.msra.mxu0 0.0
        %1746 = vmatprep.subr.mxu0 0.0
        %1747 = vmatpush1.msra.mxu0 0.0
        %1748 = vmatprep.subr.mxu0 0.0
        %1749 = vmatpush1.msra.mxu0 0.0
        %1750 = vmatprep.subr.mxu0 0.0
        %1751 = vmatpush1.msra.mxu0 0.0
        %1752 = vmatprep.subr.mxu0 0.0
        %1753 = vmatpush1.msra.mxu0 0.0
        %1754 = vmatprep.subr.mxu0 0.0
        %1755 = vmatpush1.msra.mxu0 0.0
        %1756 = vmatprep.subr.mxu0 0.0
        %1757 = vmatpush1.msra.mxu0 0.0
        %1758 = vmatprep.subr.mxu0 0.0
        %1759 = vmatpush1.msra.mxu0 0.0
        %1760 = vmatprep.subr.mxu0 0.0
        %1761 = vmatpush1.msra.mxu0 0.0
        %1762 = vmatprep.subr.mxu0 0.0
        %1763 = vmatpush1.msra.mxu0 0.0
        %1764 = vmatprep.subr.mxu0 0.0
        %1765 = vmatpush1.msra.mxu0 0.0
        %1766 = vmatprep.subr.mxu0 0.0
        %1767 = vmatpush1.msra.mxu0 0.0
        %1768 = vmatprep.subr.mxu0 0.0
        %1769 = vmatpush1.msra.mxu0 0.0
        %1770 = vmatprep.subr.mxu0 0.0
        %1771 = vmatpush1.msra.mxu0 0.0
        %1772 = vmatprep.subr.mxu0 0.0
        %1773 = vmatpush1.msra.mxu0 0.0
        %1774 = vmatprep.subr.mxu0 0.0
        %1775 = vmatpush1.msra.mxu0 0.0
        %1776 = vmatprep.subr.mxu0 0.0
        %1777 = vmatpush1.msra.mxu0 0.0
        %1778 = vmatprep.subr.mxu0 0.0
        %1779 = vmatpush1.msra.mxu0 0.0
        %1780 = vmatprep.subr.mxu0 0.0
        %1781 = vmatpush1.msra.mxu0 0.0
        %1782 = vmatprep.subr.mxu0 0.0
        %1783 = vmatpush1.msra.mxu0 0.0
        %1784 = vmatprep.subr.mxu0 0.0
        %1785 = vmatpush1.msra.mxu0 0.0
        %1786 = vmatprep.subr.mxu0 0.0
        %1787 = vmatpush1.msra.mxu0 0.0
        %1788 = vmatprep.subr.mxu0 0.0
        %1789 = vmatpush1.msra.mxu0 0.0
        %1790 = vmatprep.subr.mxu0 0.0
        %1791 = vmatpush1.msra.mxu0 0.0
        %1792 = vmatprep.subr.mxu0 0.0
        %1793 = vmatpush1.msra.mxu0 0.0
        %1794 = vmatprep.subr.mxu0 0.0
        %1795 = vmatpush1.msra.mxu0 0.0
        %1796 = vmatprep.mubr.f32.mxu0 0.0
        %1797 = vmatmul.mubr.f32.gmra.mrb[0].mxu0 %v1730
        %v1798 = vpop.f32.mrb[0].mxu0
        %v1799 = vadd.f32 0.0, %v1798
        %v1800 = vpop.f32.mrb[0].mxu0
        %1801 = vdwg.mxu0
        %v1802 = vadd.f32 %v1724, %v1799
        %v1803 = vmul.f32 %v1802, 0.5
        %v1804 = vtanh.pop %v1803
        %v1805 = vmul.f32 %v1804, 0.5
        %v1806 = vadd.f32 %v1805, 0.5
        %s1807 = scalar_lea.vmem [#allocation3], 24
        %v1808 = vld [vmem:[%s1807] sm:$0xff]
        %v1809 = vld [vmem:[%s4] sm:$0xff]
        %v1810 = vld [vmem:[%s4 + $0x8] sm:$0xff]
        %v1811 = vld [vmem:[%s4 + $0x10] sm:$0xff]
        %v1812 = vld [vmem:[%s4 + $0x18] sm:$0xff]
        %1813 = vmatprep.subr.mxu0 0.0
        %1814 = vmatpush1.msra.mxu0 %v1809
        %1815 = vmatprep.subr.mxu0 0.0
        %1816 = vmatpush1.msra.mxu0 %v1810
        %1817 = vmatprep.subr.mxu0 0.0
        %1818 = vmatpush1.msra.mxu0 %v1811
        %1819 = vmatprep.subr.mxu0 0.0
        %1820 = vmatpush1.msra.mxu0 %v1812
        %1821 = vmatprep.subr.mxu0 0.0
        %1822 = vmatpush1.msra.mxu0 0.0
        %1823 = vmatprep.subr.mxu0 0.0
        %1824 = vmatpush1.msra.mxu0 0.0
        %1825 = vmatprep.subr.mxu0 0.0
        %1826 = vmatpush1.msra.mxu0 0.0
        %1827 = vmatprep.subr.mxu0 0.0
        %1828 = vmatpush1.msra.mxu0 0.0
        %1829 = vmatprep.subr.mxu0 0.0
        %1830 = vmatpush1.msra.mxu0 0.0
        %1831 = vmatprep.subr.mxu0 0.0
        %1832 = vmatpush1.msra.mxu0 0.0
        %1833 = vmatprep.subr.mxu0 0.0
        %1834 = vmatpush1.msra.mxu0 0.0
        %1835 = vmatprep.subr.mxu0 0.0
        %1836 = vmatpush1.msra.mxu0 0.0
        %1837 = vmatprep.subr.mxu0 0.0
        %1838 = vmatpush1.msra.mxu0 0.0
        %1839 = vmatprep.subr.mxu0 0.0
        %1840 = vmatpush1.msra.mxu0 0.0
        %1841 = vmatprep.subr.mxu0 0.0
        %1842 = vmatpush1.msra.mxu0 0.0
        %1843 = vmatprep.subr.mxu0 0.0
        %1844 = vmatpush1.msra.mxu0 0.0
        %1845 = vmatprep.subr.mxu0 0.0
        %1846 = vmatpush1.msra.mxu0 0.0
        %1847 = vmatprep.subr.mxu0 0.0
        %1848 = vmatpush1.msra.mxu0 0.0
        %1849 = vmatprep.subr.mxu0 0.0
        %1850 = vmatpush1.msra.mxu0 0.0
        %1851 = vmatprep.subr.mxu0 0.0
        %1852 = vmatpush1.msra.mxu0 0.0
        %1853 = vmatprep.subr.mxu0 0.0
        %1854 = vmatpush1.msra.mxu0 0.0
        %1855 = vmatprep.subr.mxu0 0.0
        %1856 = vmatpush1.msra.mxu0 0.0
        %1857 = vmatprep.subr.mxu0 0.0
        %1858 = vmatpush1.msra.mxu0 0.0
        %1859 = vmatprep.subr.mxu0 0.0
        %1860 = vmatpush1.msra.mxu0 0.0
        %1861 = vmatprep.subr.mxu0 0.0
        %1862 = vmatpush1.msra.mxu0 0.0
        %1863 = vmatprep.subr.mxu0 0.0
        %1864 = vmatpush1.msra.mxu0 0.0
        %1865 = vmatprep.subr.mxu0 0.0
        %1866 = vmatpush1.msra.mxu0 0.0
        %1867 = vmatprep.subr.mxu0 0.0
        %1868 = vmatpush1.msra.mxu0 0.0
        %1869 = vmatprep.subr.mxu0 0.0
        %1870 = vmatpush1.msra.mxu0 0.0
        %1871 = vmatprep.subr.mxu0 0.0
        %1872 = vmatpush1.msra.mxu0 0.0
        %1873 = vmatprep.subr.mxu0 0.0
        %1874 = vmatpush1.msra.mxu0 0.0
        %1875 = vmatprep.subr.mxu0 0.0
        %1876 = vmatpush1.msra.mxu0 0.0
        %1877 = vmatprep.mubr.f32.mxu0 0.0
        %1878 = vmatmul.mubr.f32.gmra.mrb[0].mxu0 %v1730
        %v1879 = vpop.f32.mrb[0].mxu0
        %v1880 = vadd.f32 0.0, %v1879
        %v1881 = vpop.f32.mrb[0].mxu0
        %1882 = vdwg.mxu0
        %v1883 = vadd.f32 %v1808, %v1880
        %v1884 = vmul.f32 %v1883, 0.5
        %v1885 = vtanh.pop %v1884
        %v1886 = vmul.f32 %v1885, 0.5
        %v1887 = vadd.f32 %v1886, 0.5
        %s1888 = scalar_lea.vmem [#allocation4], 24
        %v1889 = vld [vmem:[%s1888] sm:$0xff]
        %v1890 = vld [vmem:[%s5] sm:$0xff]
        %v1891 = vld [vmem:[%s5 + $0x8] sm:$0xff]
        %v1892 = vld [vmem:[%s5 + $0x10] sm:$0xff]
        %v1893 = vld [vmem:[%s5 + $0x18] sm:$0xff]
        %1894 = vmatprep.subr.mxu0 0.0
        %1895 = vmatpush1.msra.mxu0 %v1890
        %1896 = vmatprep.subr.mxu0 0.0
        %1897 = vmatpush1.msra.mxu0 %v1891
        %1898 = vmatprep.subr.mxu0 0.0
        %1899 = vmatpush1.msra.mxu0 %v1892
        %1900 = vmatprep.subr.mxu0 0.0
        %1901 = vmatpush1.msra.mxu0 %v1893
        %1902 = vmatprep.subr.mxu0 0.0
        %1903 = vmatpush1.msra.mxu0 0.0
        %1904 = vmatprep.subr.mxu0 0.0
        %1905 = vmatpush1.msra.mxu0 0.0
        %1906 = vmatprep.subr.mxu0 0.0
        %1907 = vmatpush1.msra.mxu0 0.0
        %1908 = vmatprep.subr.mxu0 0.0
        %1909 = vmatpush1.msra.mxu0 0.0
        %1910 = vmatprep.subr.mxu0 0.0
        %1911 = vmatpush1.msra.mxu0 0.0
        %1912 = vmatprep.subr.mxu0 0.0
        %1913 = vmatpush1.msra.mxu0 0.0
        %1914 = vmatprep.subr.mxu0 0.0
        %1915 = vmatpush1.msra.mxu0 0.0
        %1916 = vmatprep.subr.mxu0 0.0
        %1917 = vmatpush1.msra.mxu0 0.0
        %1918 = vmatprep.subr.mxu0 0.0
        %1919 = vmatpush1.msra.mxu0 0.0
        %1920 = vmatprep.subr.mxu0 0.0
        %1921 = vmatpush1.msra.mxu0 0.0
        %1922 = vmatprep.subr.mxu0 0.0
        %1923 = vmatpush1.msra.mxu0 0.0
        %1924 = vmatprep.subr.mxu0 0.0
        %1925 = vmatpush1.msra.mxu0 0.0
        %1926 = vmatprep.subr.mxu0 0.0
        %1927 = vmatpush1.msra.mxu0 0.0
        %1928 = vmatprep.subr.mxu0 0.0
        %1929 = vmatpush1.msra.mxu0 0.0
        %1930 = vmatprep.subr.mxu0 0.0
        %1931 = vmatpush1.msra.mxu0 0.0
        %1932 = vmatprep.subr.mxu0 0.0
        %1933 = vmatpush1.msra.mxu0 0.0
        %1934 = vmatprep.subr.mxu0 0.0
        %1935 = vmatpush1.msra.mxu0 0.0
        %1936 = vmatprep.subr.mxu0 0.0
        %1937 = vmatpush1.msra.mxu0 0.0
        %1938 = vmatprep.subr.mxu0 0.0
        %1939 = vmatpush1.msra.mxu0 0.0
        %1940 = vmatprep.subr.mxu0 0.0
        %1941 = vmatpush1.msra.mxu0 0.0
        %1942 = vmatprep.subr.mxu0 0.0
        %1943 = vmatpush1.msra.mxu0 0.0
        %1944 = vmatprep.subr.mxu0 0.0
        %1945 = vmatpush1.msra.mxu0 0.0
        %1946 = vmatprep.subr.mxu0 0.0
        %1947 = vmatpush1.msra.mxu0 0.0
        %1948 = vmatprep.subr.mxu0 0.0
        %1949 = vmatpush1.msra.mxu0 0.0
        %1950 = vmatprep.subr.mxu0 0.0
        %1951 = vmatpush1.msra.mxu0 0.0
        %1952 = vmatprep.subr.mxu0 0.0
        %1953 = vmatpush1.msra.mxu0 0.0
        %1954 = vmatprep.subr.mxu0 0.0
        %1955 = vmatpush1.msra.mxu0 0.0
        %1956 = vmatprep.subr.mxu0 0.0
        %1957 = vmatpush1.msra.mxu0 0.0
        %1958 = vmatprep.mubr.f32.mxu0 0.0
        %1959 = vmatmul.mubr.f32.gmra.mrb[0].mxu0 %v1730
        %v1960 = vpop.f32.mrb[0].mxu0
        %v1961 = vadd.f32 0.0, %v1960
        %v1962 = vpop.f32.mrb[0].mxu0
        %1963 = vdwg.mxu0
        %v1964 = vadd.f32 %v1889, %v1961
        %v1965 = vmul.f32 %v1964, 0.5
        %v1966 = vtanh.pop %v1965
        %v1967 = vmul.f32 %v1966, 0.5
        %v1968 = vadd.f32 %v1967, 0.5
        %s1969 = scalar_lea.vmem [#allocation5], 24
        %v1970 = vld [vmem:[%s1969] sm:$0xff]
        %v1971 = vld [vmem:[%s6] sm:$0xff]
        %v1972 = vld [vmem:[%s6 + $0x8] sm:$0xff]
        %v1973 = vld [vmem:[%s6 + $0x10] sm:$0xff]
        %v1974 = vld [vmem:[%s6 + $0x18] sm:$0xff]
        %1975 = vmatprep.subr.mxu0 0.0
        %1976 = vmatpush1.msra.mxu0 %v1971
        %1977 = vmatprep.subr.mxu0 0.0
        %1978 = vmatpush1.msra.mxu0 %v1972
        %1979 = vmatprep.subr.mxu0 0.0
        %1980 = vmatpush1.msra.mxu0 %v1973
        %1981 = vmatprep.subr.mxu0 0.0
        %1982 = vmatpush1.msra.mxu0 %v1974
        %1983 = vmatprep.subr.mxu0 0.0
        %1984 = vmatpush1.msra.mxu0 0.0
        %1985 = vmatprep.subr.mxu0 0.0
        %1986 = vmatpush1.msra.mxu0 0.0
        %1987 = vmatprep.subr.mxu0 0.0
        %1988 = vmatpush1.msra.mxu0 0.0
        %1989 = vmatprep.subr.mxu0 0.0
        %1990 = vmatpush1.msra.mxu0 0.0
        %1991 = vmatprep.subr.mxu0 0.0
        %1992 = vmatpush1.msra.mxu0 0.0
        %1993 = vmatprep.subr.mxu0 0.0
        %1994 = vmatpush1.msra.mxu0 0.0
        %1995 = vmatprep.subr.mxu0 0.0
        %1996 = vmatpush1.msra.mxu0 0.0
        %1997 = vmatprep.subr.mxu0 0.0
        %1998 = vmatpush1.msra.mxu0 0.0
        %1999 = vmatprep.subr.mxu0 0.0
        %2000 = vmatpush1.msra.mxu0 0.0
        %2001 = vmatprep.subr.mxu0 0.0
        %2002 = vmatpush1.msra.mxu0 0.0
        %2003 = vmatprep.subr.mxu0 0.0
        %2004 = vmatpush1.msra.mxu0 0.0
        %2005 = vmatprep.subr.mxu0 0.0
        %2006 = vmatpush1.msra.mxu0 0.0
        %2007 = vmatprep.subr.mxu0 0.0
        %2008 = vmatpush1.msra.mxu0 0.0
        %2009 = vmatprep.subr.mxu0 0.0
        %2010 = vmatpush1.msra.mxu0 0.0
        %2011 = vmatprep.subr.mxu0 0.0
        %2012 = vmatpush1.msra.mxu0 0.0
        %2013 = vmatprep.subr.mxu0 0.0
        %2014 = vmatpush1.msra.mxu0 0.0
        %2015 = vmatprep.subr.mxu0 0.0
        %2016 = vmatpush1.msra.mxu0 0.0
        %2017 = vmatprep.subr.mxu0 0.0
        %2018 = vmatpush1.msra.mxu0 0.0
        %2019 = vmatprep.subr.mxu0 0.0
        %2020 = vmatpush1.msra.mxu0 0.0
        %2021 = vmatprep.subr.mxu0 0.0
        %2022 = vmatpush1.msra.mxu0 0.0
        %2023 = vmatprep.subr.mxu0 0.0
        %2024 = vmatpush1.msra.mxu0 0.0
        %2025 = vmatprep.subr.mxu0 0.0
        %2026 = vmatpush1.msra.mxu0 0.0
        %2027 = vmatprep.subr.mxu0 0.0
        %2028 = vmatpush1.msra.mxu0 0.0
        %2029 = vmatprep.subr.mxu0 0.0
        %2030 = vmatpush1.msra.mxu0 0.0
        %2031 = vmatprep.subr.mxu0 0.0
        %2032 = vmatpush1.msra.mxu0 0.0
        %2033 = vmatprep.subr.mxu0 0.0
        %2034 = vmatpush1.msra.mxu0 0.0
        %2035 = vmatprep.subr.mxu0 0.0
        %2036 = vmatpush1.msra.mxu0 0.0
        %2037 = vmatprep.subr.mxu0 0.0
        %2038 = vmatpush1.msra.mxu0 0.0
        %2039 = vmatprep.mubr.f32.mxu0 0.0
        %2040 = vmatmul.mubr.f32.gmra.mrb[0].mxu0 %v1730
        %v2041 = vpop.f32.mrb[0].mxu0
        %v2042 = vadd.f32 0.0, %v2041
        %v2043 = vpop.f32.mrb[0].mxu0
        %2044 = vdwg.mxu0
        %v2045 = vadd.f32 %v1970, %v2042
        %v2046 = vtanh.pop %v2045
        %v2047 = vmul.f32 %v1887, %v1718
        %v2048 = vmul.f32 %v1806, %v2046
        %v2049 = vadd.f32 %v2047, %v2048
        %v2050 = vtanh.pop %v2049
        %v2051 = vmul.f32 %v1968, %v2050
        %s2052 = scalar_lea.vmem [#allocation6], 24
        %2053 = vst.msk [vmem:[%s2052] sm:$0xff] %vm493, %v2051
        %s2054 = scalar_lea.vmem [#allocation2], 32
        %v2055 = vld [vmem:[%s2054] sm:$0xff]
        %v2056 = vld [vmem:[%s3] sm:$0xff]
        %v2057 = vld [vmem:[%s3 + $0x8] sm:$0xff]
        %v2058 = vld [vmem:[%s3 + $0x10] sm:$0xff]
        %v2059 = vld [vmem:[%s3 + $0x18] sm:$0xff]
        %v2061 = vsel %vm493, %v2051, 0
        %2063 = vmatprep.subr.mxu0 0.0
        %2064 = vmatpush1.msra.mxu0 %v2056
        %2065 = vmatprep.subr.mxu0 0.0
        %2066 = vmatpush1.msra.mxu0 %v2057
        %2067 = vmatprep.subr.mxu0 0.0
        %2068 = vmatpush1.msra.mxu0 %v2058
        %2069 = vmatprep.subr.mxu0 0.0
        %2070 = vmatpush1.msra.mxu0 %v2059
        %2071 = vmatprep.subr.mxu0 0.0
        %2072 = vmatpush1.msra.mxu0 0.0
        %2073 = vmatprep.subr.mxu0 0.0
        %2074 = vmatpush1.msra.mxu0 0.0
        %2075 = vmatprep.subr.mxu0 0.0
        %2076 = vmatpush1.msra.mxu0 0.0
        %2077 = vmatprep.subr.mxu0 0.0
        %2078 = vmatpush1.msra.mxu0 0.0
        %2079 = vmatprep.subr.mxu0 0.0
        %2080 = vmatpush1.msra.mxu0 0.0
        %2081 = vmatprep.subr.mxu0 0.0
        %2082 = vmatpush1.msra.mxu0 0.0
        %2083 = vmatprep.subr.mxu0 0.0
        %2084 = vmatpush1.msra.mxu0 0.0
        %2085 = vmatprep.subr.mxu0 0.0
        %2086 = vmatpush1.msra.mxu0 0.0
        %2087 = vmatprep.subr.mxu0 0.0
        %2088 = vmatpush1.msra.mxu0 0.0
        %2089 = vmatprep.subr.mxu0 0.0
        %2090 = vmatpush1.msra.mxu0 0.0
        %2091 = vmatprep.subr.mxu0 0.0
        %2092 = vmatpush1.msra.mxu0 0.0
        %2093 = vmatprep.subr.mxu0 0.0
        %2094 = vmatpush1.msra.mxu0 0.0
        %2095 = vmatprep.subr.mxu0 0.0
        %2096 = vmatpush1.msra.mxu0 0.0
        %2097 = vmatprep.subr.mxu0 0.0
        %2098 = vmatpush1.msra.mxu0 0.0
        %2099 = vmatprep.subr.mxu0 0.0
        %2100 = vmatpush1.msra.mxu0 0.0
        %2101 = vmatprep.subr.mxu0 0.0
        %2102 = vmatpush1.msra.mxu0 0.0
        %2103 = vmatprep.subr.mxu0 0.0
        %2104 = vmatpush1.msra.mxu0 0.0
        %2105 = vmatprep.subr.mxu0 0.0
        %2106 = vmatpush1.msra.mxu0 0.0
        %2107 = vmatprep.subr.mxu0 0.0
        %2108 = vmatpush1.msra.mxu0 0.0
        %2109 = vmatprep.subr.mxu0 0.0
        %2110 = vmatpush1.msra.mxu0 0.0
        %2111 = vmatprep.subr.mxu0 0.0
        %2112 = vmatpush1.msra.mxu0 0.0
        %2113 = vmatprep.subr.mxu0 0.0
        %2114 = vmatpush1.msra.mxu0 0.0
        %2115 = vmatprep.subr.mxu0 0.0
        %2116 = vmatpush1.msra.mxu0 0.0
        %2117 = vmatprep.subr.mxu0 0.0
        %2118 = vmatpush1.msra.mxu0 0.0
        %2119 = vmatprep.subr.mxu0 0.0
        %2120 = vmatpush1.msra.mxu0 0.0
        %2121 = vmatprep.subr.mxu0 0.0
        %2122 = vmatpush1.msra.mxu0 0.0
        %2123 = vmatprep.subr.mxu0 0.0
        %2124 = vmatpush1.msra.mxu0 0.0
        %2125 = vmatprep.subr.mxu0 0.0
        %2126 = vmatpush1.msra.mxu0 0.0
        %2127 = vmatprep.mubr.f32.mxu0 0.0
        %2128 = vmatmul.mubr.f32.gmra.mrb[0].mxu0 %v2061
        %v2129 = vpop.f32.mrb[0].mxu0
        %v2130 = vadd.f32 0.0, %v2129
        %v2131 = vpop.f32.mrb[0].mxu0
        %2132 = vdwg.mxu0
        %v2133 = vadd.f32 %v2055, %v2130
        %v2134 = vmul.f32 %v2133, 0.5
        %v2135 = vtanh.pop %v2134
        %v2136 = vmul.f32 %v2135, 0.5
        %v2137 = vadd.f32 %v2136, 0.5
        %s2138 = scalar_lea.vmem [#allocation3], 32
        %v2139 = vld [vmem:[%s2138] sm:$0xff]
        %v2140 = vld [vmem:[%s4] sm:$0xff]
        %v2141 = vld [vmem:[%s4 + $0x8] sm:$0xff]
        %v2142 = vld [vmem:[%s4 + $0x10] sm:$0xff]
        %v2143 = vld [vmem:[%s4 + $0x18] sm:$0xff]
        %2144 = vmatprep.subr.mxu0 0.0
        %2145 = vmatpush1.msra.mxu0 %v2140
        %2146 = vmatprep.subr.mxu0 0.0
        %2147 = vmatpush1.msra.mxu0 %v2141
        %2148 = vmatprep.subr.mxu0 0.0
        %2149 = vmatpush1.msra.mxu0 %v2142
        %2150 = vmatprep.subr.mxu0 0.0
        %2151 = vmatpush1.msra.mxu0 %v2143
        %2152 = vmatprep.subr.mxu0 0.0
        %2153 = vmatpush1.msra.mxu0 0.0
        %2154 = vmatprep.subr.mxu0 0.0
        %2155 = vmatpush1.msra.mxu0 0.0
        %2156 = vmatprep.subr.mxu0 0.0
        %2157 = vmatpush1.msra.mxu0 0.0
        %2158 = vmatprep.subr.mxu0 0.0
        %2159 = vmatpush1.msra.mxu0 0.0
        %2160 = vmatprep.subr.mxu0 0.0
        %2161 = vmatpush1.msra.mxu0 0.0
        %2162 = vmatprep.subr.mxu0 0.0
        %2163 = vmatpush1.msra.mxu0 0.0
        %2164 = vmatprep.subr.mxu0 0.0
        %2165 = vmatpush1.msra.mxu0 0.0
        %2166 = vmatprep.subr.mxu0 0.0
        %2167 = vmatpush1.msra.mxu0 0.0
        %2168 = vmatprep.subr.mxu0 0.0
        %2169 = vmatpush1.msra.mxu0 0.0
        %2170 = vmatprep.subr.mxu0 0.0
        %2171 = vmatpush1.msra.mxu0 0.0
        %2172 = vmatprep.subr.mxu0 0.0
        %2173 = vmatpush1.msra.mxu0 0.0
        %2174 = vmatprep.subr.mxu0 0.0
        %2175 = vmatpush1.msra.mxu0 0.0
        %2176 = vmatprep.subr.mxu0 0.0
        %2177 = vmatpush1.msra.mxu0 0.0
        %2178 = vmatprep.subr.mxu0 0.0
        %2179 = vmatpush1.msra.mxu0 0.0
        %2180 = vmatprep.subr.mxu0 0.0
        %2181 = vmatpush1.msra.mxu0 0.0
        %2182 = vmatprep.subr.mxu0 0.0
        %2183 = vmatpush1.msra.mxu0 0.0
        %2184 = vmatprep.subr.mxu0 0.0
        %2185 = vmatpush1.msra.mxu0 0.0
        %2186 = vmatprep.subr.mxu0 0.0
        %2187 = vmatpush1.msra.mxu0 0.0
        %2188 = vmatprep.subr.mxu0 0.0
        %2189 = vmatpush1.msra.mxu0 0.0
        %2190 = vmatprep.subr.mxu0 0.0
        %2191 = vmatpush1.msra.mxu0 0.0
        %2192 = vmatprep.subr.mxu0 0.0
        %2193 = vmatpush1.msra.mxu0 0.0
        %2194 = vmatprep.subr.mxu0 0.0
        %2195 = vmatpush1.msra.mxu0 0.0
        %2196 = vmatprep.subr.mxu0 0.0
        %2197 = vmatpush1.msra.mxu0 0.0
        %2198 = vmatprep.subr.mxu0 0.0
        %2199 = vmatpush1.msra.mxu0 0.0
        %2200 = vmatprep.subr.mxu0 0.0
        %2201 = vmatpush1.msra.mxu0 0.0
        %2202 = vmatprep.subr.mxu0 0.0
        %2203 = vmatpush1.msra.mxu0 0.0
        %2204 = vmatprep.subr.mxu0 0.0
        %2205 = vmatpush1.msra.mxu0 0.0
        %2206 = vmatprep.subr.mxu0 0.0
        %2207 = vmatpush1.msra.mxu0 0.0
        %2208 = vmatprep.mubr.f32.mxu0 0.0
        %2209 = vmatmul.mubr.f32.gmra.mrb[0].mxu0 %v2061
        %v2210 = vpop.f32.mrb[0].mxu0
        %v2211 = vadd.f32 0.0, %v2210
        %v2212 = vpop.f32.mrb[0].mxu0
        %2213 = vdwg.mxu0
        %v2214 = vadd.f32 %v2139, %v2211
        %v2215 = vmul.f32 %v2214, 0.5
        %v2216 = vtanh.pop %v2215
        %v2217 = vmul.f32 %v2216, 0.5
        %v2218 = vadd.f32 %v2217, 0.5
        %s2219 = scalar_lea.vmem [#allocation4], 32
        %v2220 = vld [vmem:[%s2219] sm:$0xff]
        %v2221 = vld [vmem:[%s5] sm:$0xff]
        %v2222 = vld [vmem:[%s5 + $0x8] sm:$0xff]
        %v2223 = vld [vmem:[%s5 + $0x10] sm:$0xff]
        %v2224 = vld [vmem:[%s5 + $0x18] sm:$0xff]
        %2225 = vmatprep.subr.mxu0 0.0
        %2226 = vmatpush1.msra.mxu0 %v2221
        %2227 = vmatprep.subr.mxu0 0.0
        %2228 = vmatpush1.msra.mxu0 %v2222
        %2229 = vmatprep.subr.mxu0 0.0
        %2230 = vmatpush1.msra.mxu0 %v2223
        %2231 = vmatprep.subr.mxu0 0.0
        %2232 = vmatpush1.msra.mxu0 %v2224
        %2233 = vmatprep.subr.mxu0 0.0
        %2234 = vmatpush1.msra.mxu0 0.0
        %2235 = vmatprep.subr.mxu0 0.0
        %2236 = vmatpush1.msra.mxu0 0.0
        %2237 = vmatprep.subr.mxu0 0.0
        %2238 = vmatpush1.msra.mxu0 0.0
        %2239 = vmatprep.subr.mxu0 0.0
        %2240 = vmatpush1.msra.mxu0 0.0
        %2241 = vmatprep.subr.mxu0 0.0
        %2242 = vmatpush1.msra.mxu0 0.0
        %2243 = vmatprep.subr.mxu0 0.0
        %2244 = vmatpush1.msra.mxu0 0.0
        %2245 = vmatprep.subr.mxu0 0.0
        %2246 = vmatpush1.msra.mxu0 0.0
        %2247 = vmatprep.subr.mxu0 0.0
        %2248 = vmatpush1.msra.mxu0 0.0
        %2249 = vmatprep.subr.mxu0 0.0
        %2250 = vmatpush1.msra.mxu0 0.0
        %2251 = vmatprep.subr.mxu0 0.0
        %2252 = vmatpush1.msra.mxu0 0.0
        %2253 = vmatprep.subr.mxu0 0.0
        %2254 = vmatpush1.msra.mxu0 0.0
        %2255 = vmatprep.subr.mxu0 0.0
        %2256 = vmatpush1.msra.mxu0 0.0
        %2257 = vmatprep.subr.mxu0 0.0
        %2258 = vmatpush1.msra.mxu0 0.0
        %2259 = vmatprep.subr.mxu0 0.0
        %2260 = vmatpush1.msra.mxu0 0.0
        %2261 = vmatprep.subr.mxu0 0.0
        %2262 = vmatpush1.msra.mxu0 0.0
        %2263 = vmatprep.subr.mxu0 0.0
        %2264 = vmatpush1.msra.mxu0 0.0
        %2265 = vmatprep.subr.mxu0 0.0
        %2266 = vmatpush1.msra.mxu0 0.0
        %2267 = vmatprep.subr.mxu0 0.0
        %2268 = vmatpush1.msra.mxu0 0.0
        %2269 = vmatprep.subr.mxu0 0.0
        %2270 = vmatpush1.msra.mxu0 0.0
        %2271 = vmatprep.subr.mxu0 0.0
        %2272 = vmatpush1.msra.mxu0 0.0
        %2273 = vmatprep.subr.mxu0 0.0
        %2274 = vmatpush1.msra.mxu0 0.0
        %2275 = vmatprep.subr.mxu0 0.0
        %2276 = vmatpush1.msra.mxu0 0.0
        %2277 = vmatprep.subr.mxu0 0.0
        %2278 = vmatpush1.msra.mxu0 0.0
        %2279 = vmatprep.subr.mxu0 0.0
        %2280 = vmatpush1.msra.mxu0 0.0
        %2281 = vmatprep.subr.mxu0 0.0
        %2282 = vmatpush1.msra.mxu0 0.0
        %2283 = vmatprep.subr.mxu0 0.0
        %2284 = vmatpush1.msra.mxu0 0.0
        %2285 = vmatprep.subr.mxu0 0.0
        %2286 = vmatpush1.msra.mxu0 0.0
        %2287 = vmatprep.subr.mxu0 0.0
        %2288 = vmatpush1.msra.mxu0 0.0
        %2289 = vmatprep.mubr.f32.mxu0 0.0
        %2290 = vmatmul.mubr.f32.gmra.mrb[0].mxu0 %v2061
        %v2291 = vpop.f32.mrb[0].mxu0
        %v2292 = vadd.f32 0.0, %v2291
        %v2293 = vpop.f32.mrb[0].mxu0
        %2294 = vdwg.mxu0
        %v2295 = vadd.f32 %v2220, %v2292
        %v2296 = vmul.f32 %v2295, 0.5
        %v2297 = vtanh.pop %v2296
        %v2298 = vmul.f32 %v2297, 0.5
        %v2299 = vadd.f32 %v2298, 0.5
        %s2300 = scalar_lea.vmem [#allocation5], 32
        %v2301 = vld [vmem:[%s2300] sm:$0xff]
        %v2302 = vld [vmem:[%s6] sm:$0xff]
        %v2303 = vld [vmem:[%s6 + $0x8] sm:$0xff]
        %v2304 = vld [vmem:[%s6 + $0x10] sm:$0xff]
        %v2305 = vld [vmem:[%s6 + $0x18] sm:$0xff]
        %2306 = vmatprep.subr.mxu0 0.0
        %2307 = vmatpush1.msra.mxu0 %v2302
        %2308 = vmatprep.subr.mxu0 0.0
        %2309 = vmatpush1.msra.mxu0 %v2303
        %2310 = vmatprep.subr.mxu0 0.0
        %2311 = vmatpush1.msra.mxu0 %v2304
        %2312 = vmatprep.subr.mxu0 0.0
        %2313 = vmatpush1.msra.mxu0 %v2305
        %2314 = vmatprep.subr.mxu0 0.0
        %2315 = vmatpush1.msra.mxu0 0.0
        %2316 = vmatprep.subr.mxu0 0.0
        %2317 = vmatpush1.msra.mxu0 0.0
        %2318 = vmatprep.subr.mxu0 0.0
        %2319 = vmatpush1.msra.mxu0 0.0
        %2320 = vmatprep.subr.mxu0 0.0
        %2321 = vmatpush1.msra.mxu0 0.0
        %2322 = vmatprep.subr.mxu0 0.0
        %2323 = vmatpush1.msra.mxu0 0.0
        %2324 = vmatprep.subr.mxu0 0.0
        %2325 = vmatpush1.msra.mxu0 0.0
        %2326 = vmatprep.subr.mxu0 0.0
        %2327 = vmatpush1.msra.mxu0 0.0
        %2328 = vmatprep.subr.mxu0 0.0
        %2329 = vmatpush1.msra.mxu0 0.0
        %2330 = vmatprep.subr.mxu0 0.0
        %2331 = vmatpush1.msra.mxu0 0.0
        %2332 = vmatprep.subr.mxu0 0.0
        %2333 = vmatpush1.msra.mxu0 0.0
        %2334 = vmatprep.subr.mxu0 0.0
        %2335 = vmatpush1.msra.mxu0 0.0
        %2336 = vmatprep.subr.mxu0 0.0
        %2337 = vmatpush1.msra.mxu0 0.0
        %2338 = vmatprep.subr.mxu0 0.0
        %2339 = vmatpush1.msra.mxu0 0.0
        %2340 = vmatprep.subr.mxu0 0.0
        %2341 = vmatpush1.msra.mxu0 0.0
        %2342 = vmatprep.subr.mxu0 0.0
        %2343 = vmatpush1.msra.mxu0 0.0
        %2344 = vmatprep.subr.mxu0 0.0
        %2345 = vmatpush1.msra.mxu0 0.0
        %2346 = vmatprep.subr.mxu0 0.0
        %2347 = vmatpush1.msra.mxu0 0.0
        %2348 = vmatprep.subr.mxu0 0.0
        %2349 = vmatpush1.msra.mxu0 0.0
        %2350 = vmatprep.subr.mxu0 0.0
        %2351 = vmatpush1.msra.mxu0 0.0
        %2352 = vmatprep.subr.mxu0 0.0
        %2353 = vmatpush1.msra.mxu0 0.0
        %2354 = vmatprep.subr.mxu0 0.0
        %2355 = vmatpush1.msra.mxu0 0.0
        %2356 = vmatprep.subr.mxu0 0.0
        %2357 = vmatpush1.msra.mxu0 0.0
        %2358 = vmatprep.subr.mxu0 0.0
        %2359 = vmatpush1.msra.mxu0 0.0
        %2360 = vmatprep.subr.mxu0 0.0
        %2361 = vmatpush1.msra.mxu0 0.0
        %2362 = vmatprep.subr.mxu0 0.0
        %2363 = vmatpush1.msra.mxu0 0.0
        %2364 = vmatprep.subr.mxu0 0.0
        %2365 = vmatpush1.msra.mxu0 0.0
        %2366 = vmatprep.subr.mxu0 0.0
        %2367 = vmatpush1.msra.mxu0 0.0
        %2368 = vmatprep.subr.mxu0 0.0
        %2369 = vmatpush1.msra.mxu0 0.0
        %2370 = vmatprep.mubr.f32.mxu0 0.0
        %2371 = vmatmul.mubr.f32.gmra.mrb[0].mxu0 %v2061
        %v2372 = vpop.f32.mrb[0].mxu0
        %v2373 = vadd.f32 0.0, %v2372
        %v2374 = vpop.f32.mrb[0].mxu0
        %2375 = vdwg.mxu0
        %v2376 = vadd.f32 %v2301, %v2373
        %v2377 = vtanh.pop %v2376
        %v2378 = vmul.f32 %v2218, %v2049
        %v2379 = vmul.f32 %v2137, %v2377
        %v2380 = vadd.f32 %v2378, %v2379
        %v2381 = vtanh.pop %v2380
        %v2382 = vmul.f32 %v2299, %v2381
        %s2383 = scalar_lea.vmem [#allocation6], 32
        %2384 = vst.msk [vmem:[%s2383] sm:$0xff] %vm493, %v2382
        %s2385 = scalar_lea.vmem [#allocation2], 40
        %v2386 = vld [vmem:[%s2385] sm:$0xff]
        %v2387 = vld [vmem:[%s3] sm:$0xff]
        %v2388 = vld [vmem:[%s3 + $0x8] sm:$0xff]
        %v2389 = vld [vmem:[%s3 + $0x10] sm:$0xff]
        %v2390 = vld [vmem:[%s3 + $0x18] sm:$0xff]
        %v2392 = vsel %vm493, %v2382, 0
        %2394 = vmatprep.subr.mxu0 0.0
        %2395 = vmatpush1.msra.mxu0 %v2387
        %2396 = vmatprep.subr.mxu0 0.0
        %2397 = vmatpush1.msra.mxu0 %v2388
        %2398 = vmatprep.subr.mxu0 0.0
        %2399 = vmatpush1.msra.mxu0 %v2389
        %2400 = vmatprep.subr.mxu0 0.0
        %2401 = vmatpush1.msra.mxu0 %v2390
        %2402 = vmatprep.subr.mxu0 0.0
        %2403 = vmatpush1.msra.mxu0 0.0
        %2404 = vmatprep.subr.mxu0 0.0
        %2405 = vmatpush1.msra.mxu0 0.0
        %2406 = vmatprep.subr.mxu0 0.0
        %2407 = vmatpush1.msra.mxu0 0.0
        %2408 = vmatprep.subr.mxu0 0.0
        %2409 = vmatpush1.msra.mxu0 0.0
        %2410 = vmatprep.subr.mxu0 0.0
        %2411 = vmatpush1.msra.mxu0 0.0
        %2412 = vmatprep.subr.mxu0 0.0
        %2413 = vmatpush1.msra.mxu0 0.0
        %2414 = vmatprep.subr.mxu0 0.0
        %2415 = vmatpush1.msra.mxu0 0.0
        %2416 = vmatprep.subr.mxu0 0.0
        %2417 = vmatpush1.msra.mxu0 0.0
        %2418 = vmatprep.subr.mxu0 0.0
        %2419 = vmatpush1.msra.mxu0 0.0
        %2420 = vmatprep.subr.mxu0 0.0
        %2421 = vmatpush1.msra.mxu0 0.0
        %2422 = vmatprep.subr.mxu0 0.0
        %2423 = vmatpush1.msra.mxu0 0.0
        %2424 = vmatprep.subr.mxu0 0.0
        %2425 = vmatpush1.msra.mxu0 0.0
        %2426 = vmatprep.subr.mxu0 0.0
        %2427 = vmatpush1.msra.mxu0 0.0
        %2428 = vmatprep.subr.mxu0 0.0
        %2429 = vmatpush1.msra.mxu0 0.0
        %2430 = vmatprep.subr.mxu0 0.0
        %2431 = vmatpush1.msra.mxu0 0.0
        %2432 = vmatprep.subr.mxu0 0.0
        %2433 = vmatpush1.msra.mxu0 0.0
        %2434 = vmatprep.subr.mxu0 0.0
        %2435 = vmatpush1.msra.mxu0 0.0
        %2436 = vmatprep.subr.mxu0 0.0
        %2437 = vmatpush1.msra.mxu0 0.0
        %2438 = vmatprep.subr.mxu0 0.0
        %2439 = vmatpush1.msra.mxu0 0.0
        %2440 = vmatprep.subr.mxu0 0.0
        %2441 = vmatpush1.msra.mxu0 0.0
        %2442 = vmatprep.subr.mxu0 0.0
        %2443 = vmatpush1.msra.mxu0 0.0
        %2444 = vmatprep.subr.mxu0 0.0
        %2445 = vmatpush1.msra.mxu0 0.0
        %2446 = vmatprep.subr.mxu0 0.0
        %2447 = vmatpush1.msra.mxu0 0.0
        %2448 = vmatprep.subr.mxu0 0.0
        %2449 = vmatpush1.msra.mxu0 0.0
        %2450 = vmatprep.subr.mxu0 0.0
        %2451 = vmatpush1.msra.mxu0 0.0
        %2452 = vmatprep.subr.mxu0 0.0
        %2453 = vmatpush1.msra.mxu0 0.0
        %2454 = vmatprep.subr.mxu0 0.0
        %2455 = vmatpush1.msra.mxu0 0.0
        %2456 = vmatprep.subr.mxu0 0.0
        %2457 = vmatpush1.msra.mxu0 0.0
        %2458 = vmatprep.mubr.f32.mxu0 0.0
        %2459 = vmatmul.mubr.f32.gmra.mrb[0].mxu0 %v2392
        %v2460 = vpop.f32.mrb[0].mxu0
        %v2461 = vadd.f32 0.0, %v2460
        %v2462 = vpop.f32.mrb[0].mxu0
        %2463 = vdwg.mxu0
        %v2464 = vadd.f32 %v2386, %v2461
        %v2465 = vmul.f32 %v2464, 0.5
        %v2466 = vtanh.pop %v2465
        %v2467 = vmul.f32 %v2466, 0.5
        %v2468 = vadd.f32 %v2467, 0.5
        %s2469 = scalar_lea.vmem [#allocation3], 40
        %v2470 = vld [vmem:[%s2469] sm:$0xff]
        %v2471 = vld [vmem:[%s4] sm:$0xff]
        %v2472 = vld [vmem:[%s4 + $0x8] sm:$0xff]
        %v2473 = vld [vmem:[%s4 + $0x10] sm:$0xff]
        %v2474 = vld [vmem:[%s4 + $0x18] sm:$0xff]
        %2475 = vmatprep.subr.mxu0 0.0
        %2476 = vmatpush1.msra.mxu0 %v2471
        %2477 = vmatprep.subr.mxu0 0.0
        %2478 = vmatpush1.msra.mxu0 %v2472
        %2479 = vmatprep.subr.mxu0 0.0
        %2480 = vmatpush1.msra.mxu0 %v2473
        %2481 = vmatprep.subr.mxu0 0.0
        %2482 = vmatpush1.msra.mxu0 %v2474
        %2483 = vmatprep.subr.mxu0 0.0
        %2484 = vmatpush1.msra.mxu0 0.0
        %2485 = vmatprep.subr.mxu0 0.0
        %2486 = vmatpush1.msra.mxu0 0.0
        %2487 = vmatprep.subr.mxu0 0.0
        %2488 = vmatpush1.msra.mxu0 0.0
        %2489 = vmatprep.subr.mxu0 0.0
        %2490 = vmatpush1.msra.mxu0 0.0
        %2491 = vmatprep.subr.mxu0 0.0
        %2492 = vmatpush1.msra.mxu0 0.0
        %2493 = vmatprep.subr.mxu0 0.0
        %2494 = vmatpush1.msra.mxu0 0.0
        %2495 = vmatprep.subr.mxu0 0.0
        %2496 = vmatpush1.msra.mxu0 0.0
        %2497 = vmatprep.subr.mxu0 0.0
        %2498 = vmatpush1.msra.mxu0 0.0
        %2499 = vmatprep.subr.mxu0 0.0
        %2500 = vmatpush1.msra.mxu0 0.0
        %2501 = vmatprep.subr.mxu0 0.0
        %2502 = vmatpush1.msra.mxu0 0.0
        %2503 = vmatprep.subr.mxu0 0.0
        %2504 = vmatpush1.msra.mxu0 0.0
        %2505 = vmatprep.subr.mxu0 0.0
        %2506 = vmatpush1.msra.mxu0 0.0
        %2507 = vmatprep.subr.mxu0 0.0
        %2508 = vmatpush1.msra.mxu0 0.0
        %2509 = vmatprep.subr.mxu0 0.0
        %2510 = vmatpush1.msra.mxu0 0.0
        %2511 = vmatprep.subr.mxu0 0.0
        %2512 = vmatpush1.msra.mxu0 0.0
        %2513 = vmatprep.subr.mxu0 0.0
        %2514 = vmatpush1.msra.mxu0 0.0
        %2515 = vmatprep.subr.mxu0 0.0
        %2516 = vmatpush1.msra.mxu0 0.0
        %2517 = vmatprep.subr.mxu0 0.0
        %2518 = vmatpush1.msra.mxu0 0.0
        %2519 = vmatprep.subr.mxu0 0.0
        %2520 = vmatpush1.msra.mxu0 0.0
        %2521 = vmatprep.subr.mxu0 0.0
        %2522 = vmatpush1.msra.mxu0 0.0
        %2523 = vmatprep.subr.mxu0 0.0
        %2524 = vmatpush1.msra.mxu0 0.0
        %2525 = vmatprep.subr.mxu0 0.0
        %2526 = vmatpush1.msra.mxu0 0.0
        %2527 = vmatprep.subr.mxu0 0.0
        %2528 = vmatpush1.msra.mxu0 0.0
        %2529 = vmatprep.subr.mxu0 0.0
        %2530 = vmatpush1.msra.mxu0 0.0
        %2531 = vmatprep.subr.mxu0 0.0
        %2532 = vmatpush1.msra.mxu0 0.0
        %2533 = vmatprep.subr.mxu0 0.0
        %2534 = vmatpush1.msra.mxu0 0.0
        %2535 = vmatprep.subr.mxu0 0.0
        %2536 = vmatpush1.msra.mxu0 0.0
        %2537 = vmatprep.subr.mxu0 0.0
        %2538 = vmatpush1.msra.mxu0 0.0
        %2539 = vmatprep.mubr.f32.mxu0 0.0
        %2540 = vmatmul.mubr.f32.gmra.mrb[0].mxu0 %v2392
        %v2541 = vpop.f32.mrb[0].mxu0
        %v2542 = vadd.f32 0.0, %v2541
        %v2543 = vpop.f32.mrb[0].mxu0
        %2544 = vdwg.mxu0
        %v2545 = vadd.f32 %v2470, %v2542
        %v2546 = vmul.f32 %v2545, 0.5
        %v2547 = vtanh.pop %v2546
        %v2548 = vmul.f32 %v2547, 0.5
        %v2549 = vadd.f32 %v2548, 0.5
        %s2550 = scalar_lea.vmem [#allocation4], 40
        %v2551 = vld [vmem:[%s2550] sm:$0xff]
        %v2552 = vld [vmem:[%s5] sm:$0xff]
        %v2553 = vld [vmem:[%s5 + $0x8] sm:$0xff]
        %v2554 = vld [vmem:[%s5 + $0x10] sm:$0xff]
        %v2555 = vld [vmem:[%s5 + $0x18] sm:$0xff]
        %2556 = vmatprep.subr.mxu0 0.0
        %2557 = vmatpush1.msra.mxu0 %v2552
        %2558 = vmatprep.subr.mxu0 0.0
        %2559 = vmatpush1.msra.mxu0 %v2553
        %2560 = vmatprep.subr.mxu0 0.0
        %2561 = vmatpush1.msra.mxu0 %v2554
        %2562 = vmatprep.subr.mxu0 0.0
        %2563 = vmatpush1.msra.mxu0 %v2555
        %2564 = vmatprep.subr.mxu0 0.0
        %2565 = vmatpush1.msra.mxu0 0.0
        %2566 = vmatprep.subr.mxu0 0.0
        %2567 = vmatpush1.msra.mxu0 0.0
        %2568 = vmatprep.subr.mxu0 0.0
        %2569 = vmatpush1.msra.mxu0 0.0
        %2570 = vmatprep.subr.mxu0 0.0
        %2571 = vmatpush1.msra.mxu0 0.0
        %2572 = vmatprep.subr.mxu0 0.0
        %2573 = vmatpush1.msra.mxu0 0.0
        %2574 = vmatprep.subr.mxu0 0.0
        %2575 = vmatpush1.msra.mxu0 0.0
        %2576 = vmatprep.subr.mxu0 0.0
        %2577 = vmatpush1.msra.mxu0 0.0
        %2578 = vmatprep.subr.mxu0 0.0
        %2579 = vmatpush1.msra.mxu0 0.0
        %2580 = vmatprep.subr.mxu0 0.0
        %2581 = vmatpush1.msra.mxu0 0.0
        %2582 = vmatprep.subr.mxu0 0.0
        %2583 = vmatpush1.msra.mxu0 0.0
        %2584 = vmatprep.subr.mxu0 0.0
        %2585 = vmatpush1.msra.mxu0 0.0
        %2586 = vmatprep.subr.mxu0 0.0
        %2587 = vmatpush1.msra.mxu0 0.0
        %2588 = vmatprep.subr.mxu0 0.0
        %2589 = vmatpush1.msra.mxu0 0.0
        %2590 = vmatprep.subr.mxu0 0.0
        %2591 = vmatpush1.msra.mxu0 0.0
        %2592 = vmatprep.subr.mxu0 0.0
        %2593 = vmatpush1.msra.mxu0 0.0
        %2594 = vmatprep.subr.mxu0 0.0
        %2595 = vmatpush1.msra.mxu0 0.0
        %2596 = vmatprep.subr.mxu0 0.0
        %2597 = vmatpush1.msra.mxu0 0.0
        %2598 = vmatprep.subr.mxu0 0.0
        %2599 = vmatpush1.msra.mxu0 0.0
        %2600 = vmatprep.subr.mxu0 0.0
        %2601 = vmatpush1.msra.mxu0 0.0
        %2602 = vmatprep.subr.mxu0 0.0
        %2603 = vmatpush1.msra.mxu0 0.0
        %2604 = vmatprep.subr.mxu0 0.0
        %2605 = vmatpush1.msra.mxu0 0.0
        %2606 = vmatprep.subr.mxu0 0.0
        %2607 = vmatpush1.msra.mxu0 0.0
        %2608 = vmatprep.subr.mxu0 0.0
        %2609 = vmatpush1.msra.mxu0 0.0
        %2610 = vmatprep.subr.mxu0 0.0
        %2611 = vmatpush1.msra.mxu0 0.0
        %2612 = vmatprep.subr.mxu0 0.0
        %2613 = vmatpush1.msra.mxu0 0.0
        %2614 = vmatprep.subr.mxu0 0.0
        %2615 = vmatpush1.msra.mxu0 0.0
        %2616 = vmatprep.subr.mxu0 0.0
        %2617 = vmatpush1.msra.mxu0 0.0
        %2618 = vmatprep.subr.mxu0 0.0
        %2619 = vmatpush1.msra.mxu0 0.0
        %2620 = vmatprep.mubr.f32.mxu0 0.0
        %2621 = vmatmul.mubr.f32.gmra.mrb[0].mxu0 %v2392
        %v2622 = vpop.f32.mrb[0].mxu0
        %v2623 = vadd.f32 0.0, %v2622
        %v2624 = vpop.f32.mrb[0].mxu0
        %2625 = vdwg.mxu0
        %v2626 = vadd.f32 %v2551, %v2623
        %v2627 = vmul.f32 %v2626, 0.5
        %v2628 = vtanh.pop %v2627
        %v2629 = vmul.f32 %v2628, 0.5
        %v2630 = vadd.f32 %v2629, 0.5
        %s2631 = scalar_lea.vmem [#allocation5], 40
        %v2632 = vld [vmem:[%s2631] sm:$0xff]
        %v2633 = vld [vmem:[%s6] sm:$0xff]
        %v2634 = vld [vmem:[%s6 + $0x8] sm:$0xff]
        %v2635 = vld [vmem:[%s6 + $0x10] sm:$0xff]
        %v2636 = vld [vmem:[%s6 + $0x18] sm:$0xff]
        %2637 = vmatprep.subr.mxu0 0.0
        %2638 = vmatpush1.msra.mxu0 %v2633
        %2639 = vmatprep.subr.mxu0 0.0
        %2640 = vmatpush1.msra.mxu0 %v2634
        %2641 = vmatprep.subr.mxu0 0.0
        %2642 = vmatpush1.msra.mxu0 %v2635
        %2643 = vmatprep.subr.mxu0 0.0
        %2644 = vmatpush1.msra.mxu0 %v2636
        %2645 = vmatprep.subr.mxu0 0.0
        %2646 = vmatpush1.msra.mxu0 0.0
        %2647 = vmatprep.subr.mxu0 0.0
        %2648 = vmatpush1.msra.mxu0 0.0
        %2649 = vmatprep.subr.mxu0 0.0
        %2650 = vmatpush1.msra.mxu0 0.0
        %2651 = vmatprep.subr.mxu0 0.0
        %2652 = vmatpush1.msra.mxu0 0.0
        %2653 = vmatprep.subr.mxu0 0.0
        %2654 = vmatpush1.msra.mxu0 0.0
        %2655 = vmatprep.subr.mxu0 0.0
        %2656 = vmatpush1.msra.mxu0 0.0
        %2657 = vmatprep.subr.mxu0 0.0
        %2658 = vmatpush1.msra.mxu0 0.0
        %2659 = vmatprep.subr.mxu0 0.0
        %2660 = vmatpush1.msra.mxu0 0.0
        %2661 = vmatprep.subr.mxu0 0.0
        %2662 = vmatpush1.msra.mxu0 0.0
        %2663 = vmatprep.subr.mxu0 0.0
        %2664 = vmatpush1.msra.mxu0 0.0
        %2665 = vmatprep.subr.mxu0 0.0
        %2666 = vmatpush1.msra.mxu0 0.0
        %2667 = vmatprep.subr.mxu0 0.0
        %2668 = vmatpush1.msra.mxu0 0.0
        %2669 = vmatprep.subr.mxu0 0.0
        %2670 = vmatpush1.msra.mxu0 0.0
        %2671 = vmatprep.subr.mxu0 0.0
        %2672 = vmatpush1.msra.mxu0 0.0
        %2673 = vmatprep.subr.mxu0 0.0
        %2674 = vmatpush1.msra.mxu0 0.0
        %2675 = vmatprep.subr.mxu0 0.0
        %2676 = vmatpush1.msra.mxu0 0.0
        %2677 = vmatprep.subr.mxu0 0.0
        %2678 = vmatpush1.msra.mxu0 0.0
        %2679 = vmatprep.subr.mxu0 0.0
        %2680 = vmatpush1.msra.mxu0 0.0
        %2681 = vmatprep.subr.mxu0 0.0
        %2682 = vmatpush1.msra.mxu0 0.0
        %2683 = vmatprep.subr.mxu0 0.0
        %2684 = vmatpush1.msra.mxu0 0.0
        %2685 = vmatprep.subr.mxu0 0.0
        %2686 = vmatpush1.msra.mxu0 0.0
        %2687 = vmatprep.subr.mxu0 0.0
        %2688 = vmatpush1.msra.mxu0 0.0
        %2689 = vmatprep.subr.mxu0 0.0
        %2690 = vmatpush1.msra.mxu0 0.0
        %2691 = vmatprep.subr.mxu0 0.0
        %2692 = vmatpush1.msra.mxu0 0.0
        %2693 = vmatprep.subr.mxu0 0.0
        %2694 = vmatpush1.msra.mxu0 0.0
        %2695 = vmatprep.subr.mxu0 0.0
        %2696 = vmatpush1.msra.mxu0 0.0
        %2697 = vmatprep.subr.mxu0 0.0
        %2698 = vmatpush1.msra.mxu0 0.0
        %2699 = vmatprep.subr.mxu0 0.0
        %2700 = vmatpush1.msra.mxu0 0.0
        %2701 = vmatprep.mubr.f32.mxu0 0.0
        %2702 = vmatmul.mubr.f32.gmra.mrb[0].mxu0 %v2392
        %v2703 = vpop.f32.mrb[0].mxu0
        %v2704 = vadd.f32 0.0, %v2703
        %v2705 = vpop.f32.mrb[0].mxu0
        %2706 = vdwg.mxu0
        %v2707 = vadd.f32 %v2632, %v2704
        %v2708 = vtanh.pop %v2707
        %v2709 = vmul.f32 %v2549, %v2380
        %v2710 = vmul.f32 %v2468, %v2708
        %v2711 = vadd.f32 %v2709, %v2710
        %v2712 = vtanh.pop %v2711
        %v2713 = vmul.f32 %v2630, %v2712
        %s2714 = scalar_lea.vmem [#allocation6], 40
        %2715 = vst.msk [vmem:[%s2714] sm:$0xff] %vm493, %v2713
        %s2716 = scalar_lea.vmem [#allocation2], 48
        %v2717 = vld [vmem:[%s2716] sm:$0xff]
        %v2718 = vld [vmem:[%s3] sm:$0xff]
        %v2719 = vld [vmem:[%s3 + $0x8] sm:$0xff]
        %v2720 = vld [vmem:[%s3 + $0x10] sm:$0xff]
        %v2721 = vld [vmem:[%s3 + $0x18] sm:$0xff]
        %v2723 = vsel %vm493, %v2713, 0
        %2725 = vmatprep.subr.mxu0 0.0
        %2726 = vmatpush1.msra.mxu0 %v2718
        %2727 = vmatprep.subr.mxu0 0.0
        %2728 = vmatpush1.msra.mxu0 %v2719
        %2729 = vmatprep.subr.mxu0 0.0
        %2730 = vmatpush1.msra.mxu0 %v2720
        %2731 = vmatprep.subr.mxu0 0.0
        %2732 = vmatpush1.msra.mxu0 %v2721
        %2733 = vmatprep.subr.mxu0 0.0
        %2734 = vmatpush1.msra.mxu0 0.0
        %2735 = vmatprep.subr.mxu0 0.0
        %2736 = vmatpush1.msra.mxu0 0.0
        %2737 = vmatprep.subr.mxu0 0.0
        %2738 = vmatpush1.msra.mxu0 0.0
        %2739 = vmatprep.subr.mxu0 0.0
        %2740 = vmatpush1.msra.mxu0 0.0
        %2741 = vmatprep.subr.mxu0 0.0
        %2742 = vmatpush1.msra.mxu0 0.0
        %2743 = vmatprep.subr.mxu0 0.0
        %2744 = vmatpush1.msra.mxu0 0.0
        %2745 = vmatprep.subr.mxu0 0.0
        %2746 = vmatpush1.msra.mxu0 0.0
        %2747 = vmatprep.subr.mxu0 0.0
        %2748 = vmatpush1.msra.mxu0 0.0
        %2749 = vmatprep.subr.mxu0 0.0
        %2750 = vmatpush1.msra.mxu0 0.0
        %2751 = vmatprep.subr.mxu0 0.0
        %2752 = vmatpush1.msra.mxu0 0.0
        %2753 = vmatprep.subr.mxu0 0.0
        %2754 = vmatpush1.msra.mxu0 0.0
        %2755 = vmatprep.subr.mxu0 0.0
        %2756 = vmatpush1.msra.mxu0 0.0
        %2757 = vmatprep.subr.mxu0 0.0
        %2758 = vmatpush1.msra.mxu0 0.0
        %2759 = vmatprep.subr.mxu0 0.0
        %2760 = vmatpush1.msra.mxu0 0.0
        %2761 = vmatprep.subr.mxu0 0.0
        %2762 = vmatpush1.msra.mxu0 0.0
        %2763 = vmatprep.subr.mxu0 0.0
        %2764 = vmatpush1.msra.mxu0 0.0
        %2765 = vmatprep.subr.mxu0 0.0
        %2766 = vmatpush1.msra.mxu0 0.0
        %2767 = vmatprep.subr.mxu0 0.0
        %2768 = vmatpush1.msra.mxu0 0.0
        %2769 = vmatprep.subr.mxu0 0.0
        %2770 = vmatpush1.msra.mxu0 0.0
        %2771 = vmatprep.subr.mxu0 0.0
        %2772 = vmatpush1.msra.mxu0 0.0
        %2773 = vmatprep.subr.mxu0 0.0
        %2774 = vmatpush1.msra.mxu0 0.0
        %2775 = vmatprep.subr.mxu0 0.0
        %2776 = vmatpush1.msra.mxu0 0.0
        %2777 = vmatprep.subr.mxu0 0.0
        %2778 = vmatpush1.msra.mxu0 0.0
        %2779 = vmatprep.subr.mxu0 0.0
        %2780 = vmatpush1.msra.mxu0 0.0
        %2781 = vmatprep.subr.mxu0 0.0
        %2782 = vmatpush1.msra.mxu0 0.0
        %2783 = vmatprep.subr.mxu0 0.0
        %2784 = vmatpush1.msra.mxu0 0.0
        %2785 = vmatprep.subr.mxu0 0.0
        %2786 = vmatpush1.msra.mxu0 0.0
        %2787 = vmatprep.subr.mxu0 0.0
        %2788 = vmatpush1.msra.mxu0 0.0
        %2789 = vmatprep.mubr.f32.mxu0 0.0
        %2790 = vmatmul.mubr.f32.gmra.mrb[0].mxu0 %v2723
        %v2791 = vpop.f32.mrb[0].mxu0
        %v2792 = vadd.f32 0.0, %v2791
        %v2793 = vpop.f32.mrb[0].mxu0
        %2794 = vdwg.mxu0
        %v2795 = vadd.f32 %v2717, %v2792
        %v2796 = vmul.f32 %v2795, 0.5
        %v2797 = vtanh.pop %v2796
        %v2798 = vmul.f32 %v2797, 0.5
        %v2799 = vadd.f32 %v2798, 0.5
        %s2800 = scalar_lea.vmem [#allocation3], 48
        %v2801 = vld [vmem:[%s2800] sm:$0xff]
        %v2802 = vld [vmem:[%s4] sm:$0xff]
        %v2803 = vld [vmem:[%s4 + $0x8] sm:$0xff]
        %v2804 = vld [vmem:[%s4 + $0x10] sm:$0xff]
        %v2805 = vld [vmem:[%s4 + $0x18] sm:$0xff]
        %2806 = vmatprep.subr.mxu0 0.0
        %2807 = vmatpush1.msra.mxu0 %v2802
        %2808 = vmatprep.subr.mxu0 0.0
        %2809 = vmatpush1.msra.mxu0 %v2803
        %2810 = vmatprep.subr.mxu0 0.0
        %2811 = vmatpush1.msra.mxu0 %v2804
        %2812 = vmatprep.subr.mxu0 0.0
        %2813 = vmatpush1.msra.mxu0 %v2805
        %2814 = vmatprep.subr.mxu0 0.0
        %2815 = vmatpush1.msra.mxu0 0.0
        %2816 = vmatprep.subr.mxu0 0.0
        %2817 = vmatpush1.msra.mxu0 0.0
        %2818 = vmatprep.subr.mxu0 0.0
        %2819 = vmatpush1.msra.mxu0 0.0
        %2820 = vmatprep.subr.mxu0 0.0
        %2821 = vmatpush1.msra.mxu0 0.0
        %2822 = vmatprep.subr.mxu0 0.0
        %2823 = vmatpush1.msra.mxu0 0.0
        %2824 = vmatprep.subr.mxu0 0.0
        %2825 = vmatpush1.msra.mxu0 0.0
        %2826 = vmatprep.subr.mxu0 0.0
        %2827 = vmatpush1.msra.mxu0 0.0
        %2828 = vmatprep.subr.mxu0 0.0
        %2829 = vmatpush1.msra.mxu0 0.0
        %2830 = vmatprep.subr.mxu0 0.0
        %2831 = vmatpush1.msra.mxu0 0.0
        %2832 = vmatprep.subr.mxu0 0.0
        %2833 = vmatpush1.msra.mxu0 0.0
        %2834 = vmatprep.subr.mxu0 0.0
        %2835 = vmatpush1.msra.mxu0 0.0
        %2836 = vmatprep.subr.mxu0 0.0
        %2837 = vmatpush1.msra.mxu0 0.0
        %2838 = vmatprep.subr.mxu0 0.0
        %2839 = vmatpush1.msra.mxu0 0.0
        %2840 = vmatprep.subr.mxu0 0.0
        %2841 = vmatpush1.msra.mxu0 0.0
        %2842 = vmatprep.subr.mxu0 0.0
        %2843 = vmatpush1.msra.mxu0 0.0
        %2844 = vmatprep.subr.mxu0 0.0
        %2845 = vmatpush1.msra.mxu0 0.0
        %2846 = vmatprep.subr.mxu0 0.0
        %2847 = vmatpush1.msra.mxu0 0.0
        %2848 = vmatprep.subr.mxu0 0.0
        %2849 = vmatpush1.msra.mxu0 0.0
        %2850 = vmatprep.subr.mxu0 0.0
        %2851 = vmatpush1.msra.mxu0 0.0
        %2852 = vmatprep.subr.mxu0 0.0
        %2853 = vmatpush1.msra.mxu0 0.0
        %2854 = vmatprep.subr.mxu0 0.0
        %2855 = vmatpush1.msra.mxu0 0.0
        %2856 = vmatprep.subr.mxu0 0.0
        %2857 = vmatpush1.msra.mxu0 0.0
        %2858 = vmatprep.subr.mxu0 0.0
        %2859 = vmatpush1.msra.mxu0 0.0
        %2860 = vmatprep.subr.mxu0 0.0
        %2861 = vmatpush1.msra.mxu0 0.0
        %2862 = vmatprep.subr.mxu0 0.0
        %2863 = vmatpush1.msra.mxu0 0.0
        %2864 = vmatprep.subr.mxu0 0.0
        %2865 = vmatpush1.msra.mxu0 0.0
        %2866 = vmatprep.subr.mxu0 0.0
        %2867 = vmatpush1.msra.mxu0 0.0
        %2868 = vmatprep.subr.mxu0 0.0
        %2869 = vmatpush1.msra.mxu0 0.0
        %2870 = vmatprep.mubr.f32.mxu0 0.0
        %2871 = vmatmul.mubr.f32.gmra.mrb[0].mxu0 %v2723
        %v2872 = vpop.f32.mrb[0].mxu0
        %v2873 = vadd.f32 0.0, %v2872
        %v2874 = vpop.f32.mrb[0].mxu0
        %2875 = vdwg.mxu0
        %v2876 = vadd.f32 %v2801, %v2873
        %v2877 = vmul.f32 %v2876, 0.5
        %v2878 = vtanh.pop %v2877
        %v2879 = vmul.f32 %v2878, 0.5
        %v2880 = vadd.f32 %v2879, 0.5
        %s2881 = scalar_lea.vmem [#allocation4], 48
        %v2882 = vld [vmem:[%s2881] sm:$0xff]
        %v2883 = vld [vmem:[%s5] sm:$0xff]
        %v2884 = vld [vmem:[%s5 + $0x8] sm:$0xff]
        %v2885 = vld [vmem:[%s5 + $0x10] sm:$0xff]
        %v2886 = vld [vmem:[%s5 + $0x18] sm:$0xff]
        %2887 = vmatprep.subr.mxu0 0.0
        %2888 = vmatpush1.msra.mxu0 %v2883
        %2889 = vmatprep.subr.mxu0 0.0
        %2890 = vmatpush1.msra.mxu0 %v2884
        %2891 = vmatprep.subr.mxu0 0.0
        %2892 = vmatpush1.msra.mxu0 %v2885
        %2893 = vmatprep.subr.mxu0 0.0
        %2894 = vmatpush1.msra.mxu0 %v2886
        %2895 = vmatprep.subr.mxu0 0.0
        %2896 = vmatpush1.msra.mxu0 0.0
        %2897 = vmatprep.subr.mxu0 0.0
        %2898 = vmatpush1.msra.mxu0 0.0
        %2899 = vmatprep.subr.mxu0 0.0
        %2900 = vmatpush1.msra.mxu0 0.0
        %2901 = vmatprep.subr.mxu0 0.0
        %2902 = vmatpush1.msra.mxu0 0.0
        %2903 = vmatprep.subr.mxu0 0.0
        %2904 = vmatpush1.msra.mxu0 0.0
        %2905 = vmatprep.subr.mxu0 0.0
        %2906 = vmatpush1.msra.mxu0 0.0
        %2907 = vmatprep.subr.mxu0 0.0
        %2908 = vmatpush1.msra.mxu0 0.0
        %2909 = vmatprep.subr.mxu0 0.0
        %2910 = vmatpush1.msra.mxu0 0.0
        %2911 = vmatprep.subr.mxu0 0.0
        %2912 = vmatpush1.msra.mxu0 0.0
        %2913 = vmatprep.subr.mxu0 0.0
        %2914 = vmatpush1.msra.mxu0 0.0
        %2915 = vmatprep.subr.mxu0 0.0
        %2916 = vmatpush1.msra.mxu0 0.0
        %2917 = vmatprep.subr.mxu0 0.0
        %2918 = vmatpush1.msra.mxu0 0.0
        %2919 = vmatprep.subr.mxu0 0.0
        %2920 = vmatpush1.msra.mxu0 0.0
        %2921 = vmatprep.subr.mxu0 0.0
        %2922 = vmatpush1.msra.mxu0 0.0
        %2923 = vmatprep.subr.mxu0 0.0
        %2924 = vmatpush1.msra.mxu0 0.0
        %2925 = vmatprep.subr.mxu0 0.0
        %2926 = vmatpush1.msra.mxu0 0.0
        %2927 = vmatprep.subr.mxu0 0.0
        %2928 = vmatpush1.msra.mxu0 0.0
        %2929 = vmatprep.subr.mxu0 0.0
        %2930 = vmatpush1.msra.mxu0 0.0
        %2931 = vmatprep.subr.mxu0 0.0
        %2932 = vmatpush1.msra.mxu0 0.0
        %2933 = vmatprep.subr.mxu0 0.0
        %2934 = vmatpush1.msra.mxu0 0.0
        %2935 = vmatprep.subr.mxu0 0.0
        %2936 = vmatpush1.msra.mxu0 0.0
        %2937 = vmatprep.subr.mxu0 0.0
        %2938 = vmatpush1.msra.mxu0 0.0
        %2939 = vmatprep.subr.mxu0 0.0
        %2940 = vmatpush1.msra.mxu0 0.0
        %2941 = vmatprep.subr.mxu0 0.0
        %2942 = vmatpush1.msra.mxu0 0.0
        %2943 = vmatprep.subr.mxu0 0.0
        %2944 = vmatpush1.msra.mxu0 0.0
        %2945 = vmatprep.subr.mxu0 0.0
        %2946 = vmatpush1.msra.mxu0 0.0
        %2947 = vmatprep.subr.mxu0 0.0
        %2948 = vmatpush1.msra.mxu0 0.0
        %2949 = vmatprep.subr.mxu0 0.0
        %2950 = vmatpush1.msra.mxu0 0.0
        %2951 = vmatprep.mubr.f32.mxu0 0.0
        %2952 = vmatmul.mubr.f32.gmra.mrb[0].mxu0 %v2723
        %v2953 = vpop.f32.mrb[0].mxu0
        %v2954 = vadd.f32 0.0, %v2953
        %v2955 = vpop.f32.mrb[0].mxu0
        %2956 = vdwg.mxu0
        %v2957 = vadd.f32 %v2882, %v2954
        %v2958 = vmul.f32 %v2957, 0.5
        %v2959 = vtanh.pop %v2958
        %v2960 = vmul.f32 %v2959, 0.5
        %v2961 = vadd.f32 %v2960, 0.5
        %s2962 = scalar_lea.vmem [#allocation5], 48
        %v2963 = vld [vmem:[%s2962] sm:$0xff]
        %v2964 = vld [vmem:[%s6] sm:$0xff]
        %v2965 = vld [vmem:[%s6 + $0x8] sm:$0xff]
        %v2966 = vld [vmem:[%s6 + $0x10] sm:$0xff]
        %v2967 = vld [vmem:[%s6 + $0x18] sm:$0xff]
        %2968 = vmatprep.subr.mxu0 0.0
        %2969 = vmatpush1.msra.mxu0 %v2964
        %2970 = vmatprep.subr.mxu0 0.0
        %2971 = vmatpush1.msra.mxu0 %v2965
        %2972 = vmatprep.subr.mxu0 0.0
        %2973 = vmatpush1.msra.mxu0 %v2966
        %2974 = vmatprep.subr.mxu0 0.0
        %2975 = vmatpush1.msra.mxu0 %v2967
        %2976 = vmatprep.subr.mxu0 0.0
        %2977 = vmatpush1.msra.mxu0 0.0
        %2978 = vmatprep.subr.mxu0 0.0
        %2979 = vmatpush1.msra.mxu0 0.0
        %2980 = vmatprep.subr.mxu0 0.0
        %2981 = vmatpush1.msra.mxu0 0.0
        %2982 = vmatprep.subr.mxu0 0.0
        %2983 = vmatpush1.msra.mxu0 0.0
        %2984 = vmatprep.subr.mxu0 0.0
        %2985 = vmatpush1.msra.mxu0 0.0
        %2986 = vmatprep.subr.mxu0 0.0
        %2987 = vmatpush1.msra.mxu0 0.0
        %2988 = vmatprep.subr.mxu0 0.0
        %2989 = vmatpush1.msra.mxu0 0.0
        %2990 = vmatprep.subr.mxu0 0.0
        %2991 = vmatpush1.msra.mxu0 0.0
        %2992 = vmatprep.subr.mxu0 0.0
        %2993 = vmatpush1.msra.mxu0 0.0
        %2994 = vmatprep.subr.mxu0 0.0
        %2995 = vmatpush1.msra.mxu0 0.0
        %2996 = vmatprep.subr.mxu0 0.0
        %2997 = vmatpush1.msra.mxu0 0.0
        %2998 = vmatprep.subr.mxu0 0.0
        %2999 = vmatpush1.msra.mxu0 0.0
        %3000 = vmatprep.subr.mxu0 0.0
        %3001 = vmatpush1.msra.mxu0 0.0
        %3002 = vmatprep.subr.mxu0 0.0
        %3003 = vmatpush1.msra.mxu0 0.0
        %3004 = vmatprep.subr.mxu0 0.0
        %3005 = vmatpush1.msra.mxu0 0.0
        %3006 = vmatprep.subr.mxu0 0.0
        %3007 = vmatpush1.msra.mxu0 0.0
        %3008 = vmatprep.subr.mxu0 0.0
        %3009 = vmatpush1.msra.mxu0 0.0
        %3010 = vmatprep.subr.mxu0 0.0
        %3011 = vmatpush1.msra.mxu0 0.0
        %3012 = vmatprep.subr.mxu0 0.0
        %3013 = vmatpush1.msra.mxu0 0.0
        %3014 = vmatprep.subr.mxu0 0.0
        %3015 = vmatpush1.msra.mxu0 0.0
        %3016 = vmatprep.subr.mxu0 0.0
        %3017 = vmatpush1.msra.mxu0 0.0
        %3018 = vmatprep.subr.mxu0 0.0
        %3019 = vmatpush1.msra.mxu0 0.0
        %3020 = vmatprep.subr.mxu0 0.0
        %3021 = vmatpush1.msra.mxu0 0.0
        %3022 = vmatprep.subr.mxu0 0.0
        %3023 = vmatpush1.msra.mxu0 0.0
        %3024 = vmatprep.subr.mxu0 0.0
        %3025 = vmatpush1.msra.mxu0 0.0
        %3026 = vmatprep.subr.mxu0 0.0
        %3027 = vmatpush1.msra.mxu0 0.0
        %3028 = vmatprep.subr.mxu0 0.0
        %3029 = vmatpush1.msra.mxu0 0.0
        %3030 = vmatprep.subr.mxu0 0.0
        %3031 = vmatpush1.msra.mxu0 0.0
        %3032 = vmatprep.mubr.f32.mxu0 0.0
        %3033 = vmatmul.mubr.f32.gmra.mrb[0].mxu0 %v2723
        %v3034 = vpop.f32.mrb[0].mxu0
        %v3035 = vadd.f32 0.0, %v3034
        %v3036 = vpop.f32.mrb[0].mxu0
        %3037 = vdwg.mxu0
        %v3038 = vadd.f32 %v2963, %v3035
        %v3039 = vtanh.pop %v3038
        %v3040 = vmul.f32 %v2880, %v2711
        %v3041 = vmul.f32 %v2799, %v3039
        %v3042 = vadd.f32 %v3040, %v3041
        %v3043 = vtanh.pop %v3042
        %v3044 = vmul.f32 %v2961, %v3043
        %s3045 = scalar_lea.vmem [#allocation6], 48
        %3046 = vst.msk [vmem:[%s3045] sm:$0xff] %vm493, %v3044
        %s3047 = scalar_lea.vmem [#allocation2], 56
        %v3048 = vld [vmem:[%s3047] sm:$0xff]
        %v3049 = vld [vmem:[%s3] sm:$0xff]
        %v3050 = vld [vmem:[%s3 + $0x8] sm:$0xff]
        %v3051 = vld [vmem:[%s3 + $0x10] sm:$0xff]
        %v3052 = vld [vmem:[%s3 + $0x18] sm:$0xff]
        %v3054 = vsel %vm493, %v3044, 0
        %3056 = vmatprep.subr.mxu0 0.0
        %3057 = vmatpush1.msra.mxu0 %v3049
        %3058 = vmatprep.subr.mxu0 0.0
        %3059 = vmatpush1.msra.mxu0 %v3050
        %3060 = vmatprep.subr.mxu0 0.0
        %3061 = vmatpush1.msra.mxu0 %v3051
        %3062 = vmatprep.subr.mxu0 0.0
        %3063 = vmatpush1.msra.mxu0 %v3052
        %3064 = vmatprep.subr.mxu0 0.0
        %3065 = vmatpush1.msra.mxu0 0.0
        %3066 = vmatprep.subr.mxu0 0.0
        %3067 = vmatpush1.msra.mxu0 0.0
        %3068 = vmatprep.subr.mxu0 0.0
        %3069 = vmatpush1.msra.mxu0 0.0
        %3070 = vmatprep.subr.mxu0 0.0
        %3071 = vmatpush1.msra.mxu0 0.0
        %3072 = vmatprep.subr.mxu0 0.0
        %3073 = vmatpush1.msra.mxu0 0.0
        %3074 = vmatprep.subr.mxu0 0.0
        %3075 = vmatpush1.msra.mxu0 0.0
        %3076 = vmatprep.subr.mxu0 0.0
        %3077 = vmatpush1.msra.mxu0 0.0
        %3078 = vmatprep.subr.mxu0 0.0
        %3079 = vmatpush1.msra.mxu0 0.0
        %3080 = vmatprep.subr.mxu0 0.0
        %3081 = vmatpush1.msra.mxu0 0.0
        %3082 = vmatprep.subr.mxu0 0.0
        %3083 = vmatpush1.msra.mxu0 0.0
        %3084 = vmatprep.subr.mxu0 0.0
        %3085 = vmatpush1.msra.mxu0 0.0
        %3086 = vmatprep.subr.mxu0 0.0
        %3087 = vmatpush1.msra.mxu0 0.0
        %3088 = vmatprep.subr.mxu0 0.0
        %3089 = vmatpush1.msra.mxu0 0.0
        %3090 = vmatprep.subr.mxu0 0.0
        %3091 = vmatpush1.msra.mxu0 0.0
        %3092 = vmatprep.subr.mxu0 0.0
        %3093 = vmatpush1.msra.mxu0 0.0
        %3094 = vmatprep.subr.mxu0 0.0
        %3095 = vmatpush1.msra.mxu0 0.0
        %3096 = vmatprep.subr.mxu0 0.0
        %3097 = vmatpush1.msra.mxu0 0.0
        %3098 = vmatprep.subr.mxu0 0.0
        %3099 = vmatpush1.msra.mxu0 0.0
        %3100 = vmatprep.subr.mxu0 0.0
        %3101 = vmatpush1.msra.mxu0 0.0
        %3102 = vmatprep.subr.mxu0 0.0
        %3103 = vmatpush1.msra.mxu0 0.0
        %3104 = vmatprep.subr.mxu0 0.0
        %3105 = vmatpush1.msra.mxu0 0.0
        %3106 = vmatprep.subr.mxu0 0.0
        %3107 = vmatpush1.msra.mxu0 0.0
        %3108 = vmatprep.subr.mxu0 0.0
        %3109 = vmatpush1.msra.mxu0 0.0
        %3110 = vmatprep.subr.mxu0 0.0
        %3111 = vmatpush1.msra.mxu0 0.0
        %3112 = vmatprep.subr.mxu0 0.0
        %3113 = vmatpush1.msra.mxu0 0.0
        %3114 = vmatprep.subr.mxu0 0.0
        %3115 = vmatpush1.msra.mxu0 0.0
        %3116 = vmatprep.subr.mxu0 0.0
        %3117 = vmatpush1.msra.mxu0 0.0
        %3118 = vmatprep.subr.mxu0 0.0
        %3119 = vmatpush1.msra.mxu0 0.0
        %3120 = vmatprep.mubr.f32.mxu0 0.0
        %3121 = vmatmul.mubr.f32.gmra.mrb[0].mxu0 %v3054
        %v3122 = vpop.f32.mrb[0].mxu0
        %v3123 = vadd.f32 0.0, %v3122
        %v3124 = vpop.f32.mrb[0].mxu0
        %3125 = vdwg.mxu0
        %v3126 = vadd.f32 %v3048, %v3123
        %v3127 = vmul.f32 %v3126, 0.5
        %v3128 = vtanh.pop %v3127
        %v3129 = vmul.f32 %v3128, 0.5
        %v3130 = vadd.f32 %v3129, 0.5
        %s3131 = scalar_lea.vmem [#allocation3], 56
        %v3132 = vld [vmem:[%s3131] sm:$0xff]
        %v3133 = vld [vmem:[%s4] sm:$0xff]
        %v3134 = vld [vmem:[%s4 + $0x8] sm:$0xff]
        %v3135 = vld [vmem:[%s4 + $0x10] sm:$0xff]
        %v3136 = vld [vmem:[%s4 + $0x18] sm:$0xff]
        %3137 = vmatprep.subr.mxu0 0.0
        %3138 = vmatpush1.msra.mxu0 %v3133
        %3139 = vmatprep.subr.mxu0 0.0
        %3140 = vmatpush1.msra.mxu0 %v3134
        %3141 = vmatprep.subr.mxu0 0.0
        %3142 = vmatpush1.msra.mxu0 %v3135
        %3143 = vmatprep.subr.mxu0 0.0
        %3144 = vmatpush1.msra.mxu0 %v3136
        %3145 = vmatprep.subr.mxu0 0.0
        %3146 = vmatpush1.msra.mxu0 0.0
        %3147 = vmatprep.subr.mxu0 0.0
        %3148 = vmatpush1.msra.mxu0 0.0
        %3149 = vmatprep.subr.mxu0 0.0
        %3150 = vmatpush1.msra.mxu0 0.0
        %3151 = vmatprep.subr.mxu0 0.0
        %3152 = vmatpush1.msra.mxu0 0.0
        %3153 = vmatprep.subr.mxu0 0.0
        %3154 = vmatpush1.msra.mxu0 0.0
        %3155 = vmatprep.subr.mxu0 0.0
        %3156 = vmatpush1.msra.mxu0 0.0
        %3157 = vmatprep.subr.mxu0 0.0
        %3158 = vmatpush1.msra.mxu0 0.0
        %3159 = vmatprep.subr.mxu0 0.0
        %3160 = vmatpush1.msra.mxu0 0.0
        %3161 = vmatprep.subr.mxu0 0.0
        %3162 = vmatpush1.msra.mxu0 0.0
        %3163 = vmatprep.subr.mxu0 0.0
        %3164 = vmatpush1.msra.mxu0 0.0
        %3165 = vmatprep.subr.mxu0 0.0
        %3166 = vmatpush1.msra.mxu0 0.0
        %3167 = vmatprep.subr.mxu0 0.0
        %3168 = vmatpush1.msra.mxu0 0.0
        %3169 = vmatprep.subr.mxu0 0.0
        %3170 = vmatpush1.msra.mxu0 0.0
        %3171 = vmatprep.subr.mxu0 0.0
        %3172 = vmatpush1.msra.mxu0 0.0
        %3173 = vmatprep.subr.mxu0 0.0
        %3174 = vmatpush1.msra.mxu0 0.0
        %3175 = vmatprep.subr.mxu0 0.0
        %3176 = vmatpush1.msra.mxu0 0.0
        %3177 = vmatprep.subr.mxu0 0.0
        %3178 = vmatpush1.msra.mxu0 0.0
        %3179 = vmatprep.subr.mxu0 0.0
        %3180 = vmatpush1.msra.mxu0 0.0
        %3181 = vmatprep.subr.mxu0 0.0
        %3182 = vmatpush1.msra.mxu0 0.0
        %3183 = vmatprep.subr.mxu0 0.0
        %3184 = vmatpush1.msra.mxu0 0.0
        %3185 = vmatprep.subr.mxu0 0.0
        %3186 = vmatpush1.msra.mxu0 0.0
        %3187 = vmatprep.subr.mxu0 0.0
        %3188 = vmatpush1.msra.mxu0 0.0
        %3189 = vmatprep.subr.mxu0 0.0
        %3190 = vmatpush1.msra.mxu0 0.0
        %3191 = vmatprep.subr.mxu0 0.0
        %3192 = vmatpush1.msra.mxu0 0.0
        %3193 = vmatprep.subr.mxu0 0.0
        %3194 = vmatpush1.msra.mxu0 0.0
        %3195 = vmatprep.subr.mxu0 0.0
        %3196 = vmatpush1.msra.mxu0 0.0
        %3197 = vmatprep.subr.mxu0 0.0
        %3198 = vmatpush1.msra.mxu0 0.0
        %3199 = vmatprep.subr.mxu0 0.0
        %3200 = vmatpush1.msra.mxu0 0.0
        %3201 = vmatprep.mubr.f32.mxu0 0.0
        %3202 = vmatmul.mubr.f32.gmra.mrb[0].mxu0 %v3054
        %v3203 = vpop.f32.mrb[0].mxu0
        %v3204 = vadd.f32 0.0, %v3203
        %v3205 = vpop.f32.mrb[0].mxu0
        %3206 = vdwg.mxu0
        %v3207 = vadd.f32 %v3132, %v3204
        %v3208 = vmul.f32 %v3207, 0.5
        %v3209 = vtanh.pop %v3208
        %v3210 = vmul.f32 %v3209, 0.5
        %v3211 = vadd.f32 %v3210, 0.5
        %s3212 = scalar_lea.vmem [#allocation4], 56
        %v3213 = vld [vmem:[%s3212] sm:$0xff]
        %v3214 = vld [vmem:[%s5] sm:$0xff]
        %v3215 = vld [vmem:[%s5 + $0x8] sm:$0xff]
        %v3216 = vld [vmem:[%s5 + $0x10] sm:$0xff]
        %v3217 = vld [vmem:[%s5 + $0x18] sm:$0xff]
        %3218 = vmatprep.subr.mxu0 0.0
        %3219 = vmatpush1.msra.mxu0 %v3214
        %3220 = vmatprep.subr.mxu0 0.0
        %3221 = vmatpush1.msra.mxu0 %v3215
        %3222 = vmatprep.subr.mxu0 0.0
        %3223 = vmatpush1.msra.mxu0 %v3216
        %3224 = vmatprep.subr.mxu0 0.0
        %3225 = vmatpush1.msra.mxu0 %v3217
        %3226 = vmatprep.subr.mxu0 0.0
        %3227 = vmatpush1.msra.mxu0 0.0
        %3228 = vmatprep.subr.mxu0 0.0
        %3229 = vmatpush1.msra.mxu0 0.0
        %3230 = vmatprep.subr.mxu0 0.0
        %3231 = vmatpush1.msra.mxu0 0.0
        %3232 = vmatprep.subr.mxu0 0.0
        %3233 = vmatpush1.msra.mxu0 0.0
        %3234 = vmatprep.subr.mxu0 0.0
        %3235 = vmatpush1.msra.mxu0 0.0
        %3236 = vmatprep.subr.mxu0 0.0
        %3237 = vmatpush1.msra.mxu0 0.0
        %3238 = vmatprep.subr.mxu0 0.0
        %3239 = vmatpush1.msra.mxu0 0.0
        %3240 = vmatprep.subr.mxu0 0.0
        %3241 = vmatpush1.msra.mxu0 0.0
        %3242 = vmatprep.subr.mxu0 0.0
        %3243 = vmatpush1.msra.mxu0 0.0
        %3244 = vmatprep.subr.mxu0 0.0
        %3245 = vmatpush1.msra.mxu0 0.0
        %3246 = vmatprep.subr.mxu0 0.0
        %3247 = vmatpush1.msra.mxu0 0.0
        %3248 = vmatprep.subr.mxu0 0.0
        %3249 = vmatpush1.msra.mxu0 0.0
        %3250 = vmatprep.subr.mxu0 0.0
        %3251 = vmatpush1.msra.mxu0 0.0
        %3252 = vmatprep.subr.mxu0 0.0
        %3253 = vmatpush1.msra.mxu0 0.0
        %3254 = vmatprep.subr.mxu0 0.0
        %3255 = vmatpush1.msra.mxu0 0.0
        %3256 = vmatprep.subr.mxu0 0.0
        %3257 = vmatpush1.msra.mxu0 0.0
        %3258 = vmatprep.subr.mxu0 0.0
        %3259 = vmatpush1.msra.mxu0 0.0
        %3260 = vmatprep.subr.mxu0 0.0
        %3261 = vmatpush1.msra.mxu0 0.0
        %3262 = vmatprep.subr.mxu0 0.0
        %3263 = vmatpush1.msra.mxu0 0.0
        %3264 = vmatprep.subr.mxu0 0.0
        %3265 = vmatpush1.msra.mxu0 0.0
        %3266 = vmatprep.subr.mxu0 0.0
        %3267 = vmatpush1.msra.mxu0 0.0
        %3268 = vmatprep.subr.mxu0 0.0
        %3269 = vmatpush1.msra.mxu0 0.0
        %3270 = vmatprep.subr.mxu0 0.0
        %3271 = vmatpush1.msra.mxu0 0.0
        %3272 = vmatprep.subr.mxu0 0.0
        %3273 = vmatpush1.msra.mxu0 0.0
        %3274 = vmatprep.subr.mxu0 0.0
        %3275 = vmatpush1.msra.mxu0 0.0
        %3276 = vmatprep.subr.mxu0 0.0
        %3277 = vmatpush1.msra.mxu0 0.0
        %3278 = vmatprep.subr.mxu0 0.0
        %3279 = vmatpush1.msra.mxu0 0.0
        %3280 = vmatprep.subr.mxu0 0.0
        %3281 = vmatpush1.msra.mxu0 0.0
        %3282 = vmatprep.mubr.f32.mxu0 0.0
        %3283 = vmatmul.mubr.f32.gmra.mrb[0].mxu0 %v3054
        %v3284 = vpop.f32.mrb[0].mxu0
        %v3285 = vadd.f32 0.0, %v3284
        %v3286 = vpop.f32.mrb[0].mxu0
        %3287 = vdwg.mxu0
        %v3288 = vadd.f32 %v3213, %v3285
        %v3289 = vmul.f32 %v3288, 0.5
        %v3290 = vtanh.pop %v3289
        %v3291 = vmul.f32 %v3290, 0.5
        %v3292 = vadd.f32 %v3291, 0.5
        %s3293 = scalar_lea.vmem [#allocation5], 56
        %v3294 = vld [vmem:[%s3293] sm:$0xff]
        %v3295 = vld [vmem:[%s6] sm:$0xff]
        %v3296 = vld [vmem:[%s6 + $0x8] sm:$0xff]
        %v3297 = vld [vmem:[%s6 + $0x10] sm:$0xff]
        %v3298 = vld [vmem:[%s6 + $0x18] sm:$0xff]
        %3299 = vmatprep.subr.mxu0 0.0
        %3300 = vmatpush1.msra.mxu0 %v3295
        %3301 = vmatprep.subr.mxu0 0.0
        %3302 = vmatpush1.msra.mxu0 %v3296
        %3303 = vmatprep.subr.mxu0 0.0
        %3304 = vmatpush1.msra.mxu0 %v3297
        %3305 = vmatprep.subr.mxu0 0.0
        %3306 = vmatpush1.msra.mxu0 %v3298
        %3307 = vmatprep.subr.mxu0 0.0
        %3308 = vmatpush1.msra.mxu0 0.0
        %3309 = vmatprep.subr.mxu0 0.0
        %3310 = vmatpush1.msra.mxu0 0.0
        %3311 = vmatprep.subr.mxu0 0.0
        %3312 = vmatpush1.msra.mxu0 0.0
        %3313 = vmatprep.subr.mxu0 0.0
        %3314 = vmatpush1.msra.mxu0 0.0
        %3315 = vmatprep.subr.mxu0 0.0
        %3316 = vmatpush1.msra.mxu0 0.0
        %3317 = vmatprep.subr.mxu0 0.0
        %3318 = vmatpush1.msra.mxu0 0.0
        %3319 = vmatprep.subr.mxu0 0.0
        %3320 = vmatpush1.msra.mxu0 0.0
        %3321 = vmatprep.subr.mxu0 0.0
        %3322 = vmatpush1.msra.mxu0 0.0
        %3323 = vmatprep.subr.mxu0 0.0
        %3324 = vmatpush1.msra.mxu0 0.0
        %3325 = vmatprep.subr.mxu0 0.0
        %3326 = vmatpush1.msra.mxu0 0.0
        %3327 = vmatprep.subr.mxu0 0.0
        %3328 = vmatpush1.msra.mxu0 0.0
        %3329 = vmatprep.subr.mxu0 0.0
        %3330 = vmatpush1.msra.mxu0 0.0
        %3331 = vmatprep.subr.mxu0 0.0
        %3332 = vmatpush1.msra.mxu0 0.0
        %3333 = vmatprep.subr.mxu0 0.0
        %3334 = vmatpush1.msra.mxu0 0.0
        %3335 = vmatprep.subr.mxu0 0.0
        %3336 = vmatpush1.msra.mxu0 0.0
        %3337 = vmatprep.subr.mxu0 0.0
        %3338 = vmatpush1.msra.mxu0 0.0
        %3339 = vmatprep.subr.mxu0 0.0
        %3340 = vmatpush1.msra.mxu0 0.0
        %3341 = vmatprep.subr.mxu0 0.0
        %3342 = vmatpush1.msra.mxu0 0.0
        %3343 = vmatprep.subr.mxu0 0.0
        %3344 = vmatpush1.msra.mxu0 0.0
        %3345 = vmatprep.subr.mxu0 0.0
        %3346 = vmatpush1.msra.mxu0 0.0
        %3347 = vmatprep.subr.mxu0 0.0
        %3348 = vmatpush1.msra.mxu0 0.0
        %3349 = vmatprep.subr.mxu0 0.0
        %3350 = vmatpush1.msra.mxu0 0.0
        %3351 = vmatprep.subr.mxu0 0.0
        %3352 = vmatpush1.msra.mxu0 0.0
        %3353 = vmatprep.subr.mxu0 0.0
        %3354 = vmatpush1.msra.mxu0 0.0
        %3355 = vmatprep.subr.mxu0 0.0
        %3356 = vmatpush1.msra.mxu0 0.0
        %3357 = vmatprep.subr.mxu0 0.0
        %3358 = vmatpush1.msra.mxu0 0.0
        %3359 = vmatprep.subr.mxu0 0.0
        %3360 = vmatpush1.msra.mxu0 0.0
        %3361 = vmatprep.subr.mxu0 0.0
        %3362 = vmatpush1.msra.mxu0 0.0
        %3363 = vmatprep.mubr.f32.mxu0 0.0
        %3364 = vmatmul.mubr.f32.gmra.mrb[0].mxu0 %v3054
        %v3365 = vpop.f32.mrb[0].mxu0
        %v3366 = vadd.f32 0.0, %v3365
        %v3367 = vpop.f32.mrb[0].mxu0
        %3368 = vdwg.mxu0
        %v3369 = vadd.f32 %v3294, %v3366
        %v3370 = vtanh.pop %v3369
        %v3371 = vmul.f32 %v3211, %v3042
        %v3372 = vmul.f32 %v3130, %v3370
        %v3373 = vadd.f32 %v3371, %v3372
        %v3374 = vtanh.pop %v3373
        %v3375 = vmul.f32 %v3292, %v3374
        %s3376 = scalar_lea.vmem [#allocation6], 56
        %3377 = vst.msk [vmem:[%s3376] sm:$0xff] %vm493, %v3375
        %v3378 = vld [vmem:[#allocation6] sm:$0xff]
        %v3379 = vld [vmem:[#allocation6 + $0x8] sm:$0xff]
        %v3380 = vld [vmem:[#allocation6 + $0x10] sm:$0xff]
        %v3381 = vld [vmem:[#allocation6 + $0x18] sm:$0xff]
        %v3382 = vld [vmem:[#allocation6 + $0x20] sm:$0xff]
        %v3383 = vld [vmem:[#allocation6 + $0x28] sm:$0xff]
        %v3384 = vld [vmem:[#allocation6 + $0x30] sm:$0xff]
        %v3385 = vld [vmem:[#allocation6 + $0x38] sm:$0xff]
        %v3386 = vld [vmem:[%s8] sm:$0xff]
        %v3387 = vld [vmem:[%s8 + $0x8] sm:$0xff]
        %v3388 = vld [vmem:[%s8 + $0x10] sm:$0xff]
        %v3389 = vld [vmem:[%s8 + $0x18] sm:$0xff]
        %v3391 = vsel %vm493, %v3378, 0
        %v3394 = vsel %vm493, %v3379, 0
        %v3397 = vsel %vm493, %v3380, 0
        %v3400 = vsel %vm493, %v3381, 0
        %v3403 = vsel %vm493, %v3382, 0
        %v3406 = vsel %vm493, %v3383, 0
        %v3409 = vsel %vm493, %v3384, 0
        %v3412 = vsel %vm493, %v3385, 0
        %3414 = vmatprep.subr.mxu0 0.0
        %3415 = vmatpush1.msra.mxu0 %v3386
        %3416 = vmatprep.subr.mxu0 0.0
        %3417 = vmatpush1.msra.mxu0 %v3387
        %3418 = vmatprep.subr.mxu0 0.0
        %3419 = vmatpush1.msra.mxu0 %v3388
        %3420 = vmatprep.subr.mxu0 0.0
        %3421 = vmatpush1.msra.mxu0 %v3389
        %3422 = vmatprep.subr.mxu0 0.0
        %3423 = vmatpush1.msra.mxu0 0.0
        %3424 = vmatprep.subr.mxu0 0.0
        %3425 = vmatpush1.msra.mxu0 0.0
        %3426 = vmatprep.subr.mxu0 0.0
        %3427 = vmatpush1.msra.mxu0 0.0
        %3428 = vmatprep.subr.mxu0 0.0
        %3429 = vmatpush1.msra.mxu0 0.0
        %3430 = vmatprep.subr.mxu0 0.0
        %3431 = vmatpush1.msra.mxu0 0.0
        %3432 = vmatprep.subr.mxu0 0.0
        %3433 = vmatpush1.msra.mxu0 0.0
        %3434 = vmatprep.subr.mxu0 0.0
        %3435 = vmatpush1.msra.mxu0 0.0
        %3436 = vmatprep.subr.mxu0 0.0
        %3437 = vmatpush1.msra.mxu0 0.0
        %3438 = vmatprep.subr.mxu0 0.0
        %3439 = vmatpush1.msra.mxu0 0.0
        %3440 = vmatprep.subr.mxu0 0.0
        %3441 = vmatpush1.msra.mxu0 0.0
        %3442 = vmatprep.subr.mxu0 0.0
        %3443 = vmatpush1.msra.mxu0 0.0
        %3444 = vmatprep.subr.mxu0 0.0
        %3445 = vmatpush1.msra.mxu0 0.0
        %3446 = vmatprep.subr.mxu0 0.0
        %3447 = vmatpush1.msra.mxu0 0.0
        %3448 = vmatprep.subr.mxu0 0.0
        %3449 = vmatpush1.msra.mxu0 0.0
        %3450 = vmatprep.subr.mxu0 0.0
        %3451 = vmatpush1.msra.mxu0 0.0
        %3452 = vmatprep.subr.mxu0 0.0
        %3453 = vmatpush1.msra.mxu0 0.0
        %3454 = vmatprep.subr.mxu0 0.0
        %3455 = vmatpush1.msra.mxu0 0.0
        %3456 = vmatprep.subr.mxu0 0.0
        %3457 = vmatpush1.msra.mxu0 0.0
        %3458 = vmatprep.subr.mxu0 0.0
        %3459 = vmatpush1.msra.mxu0 0.0
        %3460 = vmatprep.subr.mxu0 0.0
        %3461 = vmatpush1.msra.mxu0 0.0
        %3462 = vmatprep.subr.mxu0 0.0
        %3463 = vmatpush1.msra.mxu0 0.0
        %3464 = vmatprep.subr.mxu0 0.0
        %3465 = vmatpush1.msra.mxu0 0.0
        %3466 = vmatprep.subr.mxu0 0.0
        %3467 = vmatpush1.msra.mxu0 0.0
        %3468 = vmatprep.subr.mxu0 0.0
        %3469 = vmatpush1.msra.mxu0 0.0
        %3470 = vmatprep.subr.mxu0 0.0
        %3471 = vmatpush1.msra.mxu0 0.0
        %3472 = vmatprep.subr.mxu0 0.0
        %3473 = vmatpush1.msra.mxu0 0.0
        %3474 = vmatprep.subr.mxu0 0.0
        %3475 = vmatpush1.msra.mxu0 0.0
        %3476 = vmatprep.subr.mxu0 0.0
        %3477 = vmatpush1.msra.mxu0 0.0
        %3478 = vmatprep.mubr.f32.mxu0 0.0
        %3479 = vmatmul.mubr.f32.gmra.mrb[0].mxu0 %v3391
        %v3480 = vpop.f32.mrb[0].mxu0
        %v3481 = vadd.f32 0.0, %v3480
        %v3482 = vpop.f32.mrb[0].mxu0
        %3483 = vmatprep.mubr.f32.mxu0 0.0
        %3484 = vmatmul.mubr.f32.gmra.mrb[0].mxu0 %v3394
        %v3485 = vpop.f32.mrb[0].mxu0
        %v3486 = vadd.f32 0.0, %v3485
        %v3487 = vpop.f32.mrb[0].mxu0
        %3488 = vmatprep.mubr.f32.mxu0 0.0
        %3489 = vmatmul.mubr.f32.gmra.mrb[0].mxu0 %v3397
        %v3490 = vpop.f32.mrb[0].mxu0
        %v3491 = vadd.f32 0.0, %v3490
        %v3492 = vpop.f32.mrb[0].mxu0
        %3493 = vmatprep.mubr.f32.mxu0 0.0
        %3494 = vmatmul.mubr.f32.gmra.mrb[0].mxu0 %v3400
        %v3495 = vpop.f32.mrb[0].mxu0
        %v3496 = vadd.f32 0.0, %v3495
        %v3497 = vpop.f32.mrb[0].mxu0
        %3498 = vmatprep.mubr.f32.mxu0 0.0
        %3499 = vmatmul.mubr.f32.gmra.mrb[0].mxu0 %v3403
        %v3500 = vpop.f32.mrb[0].mxu0
        %v3501 = vadd.f32 0.0, %v3500
        %v3502 = vpop.f32.mrb[0].mxu0
        %3503 = vmatprep.mubr.f32.mxu0 0.0
        %3504 = vmatmul.mubr.f32.gmra.mrb[0].mxu0 %v3406
        %v3505 = vpop.f32.mrb[0].mxu0
        %v3506 = vadd.f32 0.0, %v3505
        %v3507 = vpop.f32.mrb[0].mxu0
        %3508 = vmatprep.mubr.f32.mxu0 0.0
        %3509 = vmatmul.mubr.f32.gmra.mrb[0].mxu0 %v3409
        %v3510 = vpop.f32.mrb[0].mxu0
        %v3511 = vadd.f32 0.0, %v3510
        %v3512 = vpop.f32.mrb[0].mxu0
        %3513 = vmatprep.mubr.f32.mxu0 0.0
        %3514 = vmatmul.mubr.f32.gmra.mrb[0].mxu0 %v3412
        %v3515 = vpop.f32.mrb[0].mxu0
        %v3516 = vadd.f32 0.0, %v3515
        %v3517 = vpop.f32.mrb[0].mxu0
        %3518 = vdwg.mxu0
        %v3519 = vld [vmem:[%s7] sm:$0xff]
        %v3520 = vld [vmem:[%s7 + $0x8] sm:$0xff]
        %v3521 = vld [vmem:[%s7 + $0x10] sm:$0xff]
        %v3522 = vld [vmem:[%s7 + $0x18] sm:$0xff]
        %v3524 = vsel %vm493, %v3375, 0
        %3526 = vmatprep.subr.mxu0 0.0
        %3527 = vmatpush1.msra.mxu0 %v3519
        %3528 = vmatprep.subr.mxu0 0.0
        %3529 = vmatpush1.msra.mxu0 %v3520
        %3530 = vmatprep.subr.mxu0 0.0
        %3531 = vmatpush1.msra.mxu0 %v3521
        %3532 = vmatprep.subr.mxu0 0.0
        %3533 = vmatpush1.msra.mxu0 %v3522
        %3534 = vmatprep.subr.mxu0 0.0
        %3535 = vmatpush1.msra.mxu0 0.0
        %3536 = vmatprep.subr.mxu0 0.0
        %3537 = vmatpush1.msra.mxu0 0.0
        %3538 = vmatprep.subr.mxu0 0.0
        %3539 = vmatpush1.msra.mxu0 0.0
        %3540 = vmatprep.subr.mxu0 0.0
        %3541 = vmatpush1.msra.mxu0 0.0
        %3542 = vmatprep.subr.mxu0 0.0
        %3543 = vmatpush1.msra.mxu0 0.0
        %3544 = vmatprep.subr.mxu0 0.0
        %3545 = vmatpush1.msra.mxu0 0.0
        %3546 = vmatprep.subr.mxu0 0.0
        %3547 = vmatpush1.msra.mxu0 0.0
        %3548 = vmatprep.subr.mxu0 0.0
        %3549 = vmatpush1.msra.mxu0 0.0
        %3550 = vmatprep.subr.mxu0 0.0
        %3551 = vmatpush1.msra.mxu0 0.0
        %3552 = vmatprep.subr.mxu0 0.0
        %3553 = vmatpush1.msra.mxu0 0.0
        %3554 = vmatprep.subr.mxu0 0.0
        %3555 = vmatpush1.msra.mxu0 0.0
        %3556 = vmatprep.subr.mxu0 0.0
        %3557 = vmatpush1.msra.mxu0 0.0
        %3558 = vmatprep.subr.mxu0 0.0
        %3559 = vmatpush1.msra.mxu0 0.0
        %3560 = vmatprep.subr.mxu0 0.0
        %3561 = vmatpush1.msra.mxu0 0.0
        %3562 = vmatprep.subr.mxu0 0.0
        %3563 = vmatpush1.msra.mxu0 0.0
        %3564 = vmatprep.subr.mxu0 0.0
        %3565 = vmatpush1.msra.mxu0 0.0
        %3566 = vmatprep.subr.mxu0 0.0
        %3567 = vmatpush1.msra.mxu0 0.0
        %3568 = vmatprep.subr.mxu0 0.0
        %3569 = vmatpush1.msra.mxu0 0.0
        %3570 = vmatprep.subr.mxu0 0.0
        %3571 = vmatpush1.msra.mxu0 0.0
        %3572 = vmatprep.subr.mxu0 0.0
        %3573 = vmatpush1.msra.mxu0 0.0
        %3574 = vmatprep.subr.mxu0 0.0
        %3575 = vmatpush1.msra.mxu0 0.0
        %3576 = vmatprep.subr.mxu0 0.0
        %3577 = vmatpush1.msra.mxu0 0.0
        %3578 = vmatprep.subr.mxu0 0.0
        %3579 = vmatpush1.msra.mxu0 0.0
        %3580 = vmatprep.subr.mxu0 0.0
        %3581 = vmatpush1.msra.mxu0 0.0
        %3582 = vmatprep.subr.mxu0 0.0
        %3583 = vmatpush1.msra.mxu0 0.0
        %3584 = vmatprep.subr.mxu0 0.0
        %3585 = vmatpush1.msra.mxu0 0.0
        %3586 = vmatprep.subr.mxu0 0.0
        %3587 = vmatpush1.msra.mxu0 0.0
        %3588 = vmatprep.subr.mxu0 0.0
        %3589 = vmatpush1.msra.mxu0 0.0
        %3590 = vmatprep.mubr.f32.mxu0 0.0
        %3591 = vmatmul.mubr.f32.gmra.mrb[0].mxu0 %v3524
        %v3592 = vpop.f32.mrb[0].mxu0
        %v3593 = vadd.f32 0.0, %v3592
        %v3594 = vpop.f32.mrb[0].mxu0
        %3595 = vdwg.mxu0
        %v3596 = vadd.f32 %v3481, %v3593
        %v3597 = vadd.f32 %v3486, %v3593
        %v3598 = vadd.f32 %v3491, %v3593
        %v3599 = vadd.f32 %v3496, %v3593
        %v3600 = vadd.f32 %v3501, %v3593
        %v3601 = vadd.f32 %v3506, %v3593
        %v3602 = vadd.f32 %v3511, %v3593
        %v3603 = vadd.f32 %v3516, %v3593
        %v3604 = vtanh.pop %v3596
        %v3605 = vtanh.pop %v3597
        %v3606 = vtanh.pop %v3598
        %v3607 = vtanh.pop %v3599
        %v3608 = vtanh.pop %v3600
        %v3609 = vtanh.pop %v3601
        %v3610 = vtanh.pop %v3602
        %v3611 = vtanh.pop %v3603
        %v3612 = vld [vmem:[%s9] sm:$0x1]
        %v3614 = vlaneseq
        %v3615 = vshrl.u32 %v3614, 7
        %v3616 = vsub.s32 0, %v3615
        %v3617 = vrot.slane %v3612, %v3616
        %v3619 = vmul.f32 %v3604, %v3617
        %v3620 = vmul.f32 %v3605, %v3617
        %v3621 = vmul.f32 %v3606, %v3617
        %v3622 = vmul.f32 %v3607, %v3617
        %v3623 = vmul.f32 %v3608, %v3617
        %v3624 = vmul.f32 %v3609, %v3617
        %v3625 = vmul.f32 %v3610, %v3617
        %v3626 = vmul.f32 %v3611, %v3617
        %v3627 = vsel %vm493, %v3619, 0.0
        %3628 = vadd.xlane.f32.xlu0 %v3627
        %v3629 = vpop.xlane.xlu0 %3628
        %v3630 = vsel %vm493, %v3620, 0.0
        %3631 = vadd.xlane.f32.xlu0 %v3630
        %v3632 = vpop.xlane.xlu0 %3631
        %v3633 = vsel %vm493, %v3621, 0.0
        %3634 = vadd.xlane.f32.xlu0 %v3633
        %v3635 = vpop.xlane.xlu0 %3634
        %v3636 = vsel %vm493, %v3622, 0.0
        %3637 = vadd.xlane.f32.xlu0 %v3636
        %v3638 = vpop.xlane.xlu0 %3637
        %v3639 = vsel %vm493, %v3623, 0.0
        %3640 = vadd.xlane.f32.xlu0 %v3639
        %v3641 = vpop.xlane.xlu0 %3640
        %v3642 = vsel %vm493, %v3624, 0.0
        %3643 = vadd.xlane.f32.xlu0 %v3642
        %v3644 = vpop.xlane.xlu0 %3643
        %v3645 = vsel %vm493, %v3625, 0.0
        %3646 = vadd.xlane.f32.xlu0 %v3645
        %v3647 = vpop.xlane.xlu0 %3646
        %v3648 = vsel %vm493, %v3626, 0.0
        %3649 = vadd.xlane.f32.xlu0 %v3648
        %v3650 = vpop.xlane.xlu0 %3649
        %v3659 = vlaneseq
        %v3660 = vand.u32 %v3659, 127
        %v3661 = vlaneseq
        %v3662 = vshrl.u32 %v3661, 7
        %v3663 = vsub.s32 %v3660, %v3662
        %v3664 = vrot.slane %v3629, %v3663
        %v3665 = vlaneseq
        %v3666 = vshrl.u32 %v3665, 7
        %v3667 = vsub.s32 %v3660, %v3666
        %v3668 = vrot.slane %v3632, %v3667
        %v3669 = vlaneseq
        %v3670 = vshrl.u32 %v3669, 7
        %v3671 = vsub.s32 %v3660, %v3670
        %v3672 = vrot.slane %v3635, %v3671
        %v3673 = vlaneseq
        %v3674 = vshrl.u32 %v3673, 7
        %v3675 = vsub.s32 %v3660, %v3674
        %v3676 = vrot.slane %v3638, %v3675
        %v3677 = vlaneseq
        %v3678 = vshrl.u32 %v3677, 7
        %v3679 = vsub.s32 %v3660, %v3678
        %v3680 = vrot.slane %v3641, %v3679
        %v3681 = vlaneseq
        %v3682 = vshrl.u32 %v3681, 7
        %v3683 = vsub.s32 %v3660, %v3682
        %v3684 = vrot.slane %v3644, %v3683
        %v3685 = vlaneseq
        %v3686 = vshrl.u32 %v3685, 7
        %v3687 = vsub.s32 %v3660, %v3686
        %v3688 = vrot.slane %v3647, %v3687
        %v3689 = vlaneseq
        %v3690 = vshrl.u32 %v3689, 7
        %v3691 = vsub.s32 %v3660, %v3690
        %v3692 = vrot.slane %v3650, %v3691
        %vm3693 = vcmask 1041409
        %v3694 = vsel %vm3693, %v3668, %v3664
        %vm3695 = vcmask 1042434
        %v3696 = vsel %vm3695, %v3672, %v3694
        %vm3697 = vcmask 1043459
        %v3698 = vsel %vm3697, %v3676, %v3696
        %vm3699 = vcmask 1044484
        %v3700 = vsel %vm3699, %v3680, %v3698
        %vm3701 = vcmask 1045509
        %v3702 = vsel %vm3701, %v3684, %v3700
        %vm3703 = vcmask 1046534
        %v3704 = vsel %vm3703, %v3688, %v3702
        %vm3705 = vcmask 1047559
        %v3706 = vsel %vm3705, %v3692, %v3704
        %3708 = vxpose.xlu0.b32.start [1/16] %v3706, 128
        %3709 = vxpose.xlu0.b32.cont [2/16] 0.0, 128
        %3710 = vxpose.xlu0.b32.cont [3/16] 0.0, 128
        %3711 = vxpose.xlu0.b32.cont [4/16] 0.0, 128
        %3712 = vxpose.xlu0.b32.cont [5/16] 0.0, 128
        %3713 = vxpose.xlu0.b32.cont [6/16] 0.0, 128
        %3714 = vxpose.xlu0.b32.cont [7/16] 0.0, 128
        %3715 = vxpose.xlu0.b32.cont [8/16] 0.0, 128
        %3716 = vxpose.xlu0.b32.cont [9/16] 0.0, 128
        %3717 = vxpose.xlu0.b32.cont [10/16] 0.0, 128
        %3718 = vxpose.xlu0.b32.cont [11/16] 0.0, 128
        %3719 = vxpose.xlu0.b32.cont [12/16] 0.0, 128
        %3720 = vxpose.xlu0.b32.cont [13/16] 0.0, 128
        %3721 = vxpose.xlu0.b32.cont [14/16] 0.0, 128
        %3722 = vxpose.xlu0.b32.cont [15/16] 0.0, 128
        %3723 = vxpose.xlu0.b32.end [16/16] 0.0, 128
        %v3724 = vpop.trf.xlu0
        %v3725 = vpop.trf.xlu0
        %v3726 = vpop.trf.xlu0
        %v3727 = vpop.trf.xlu0
        %v3728 = vpop.trf.xlu0
        %v3729 = vpop.trf.xlu0
        %v3730 = vpop.trf.xlu0
        %v3731 = vpop.trf.xlu0
        %v3732 = vpop.trf.xlu0
        %v3733 = vpop.trf.xlu0
        %v3734 = vpop.trf.xlu0
        %v3735 = vpop.trf.xlu0
        %v3736 = vpop.trf.xlu0
        %v3737 = vpop.trf.xlu0
        %v3738 = vpop.trf.xlu0
        %v3739 = vpop.trf.xlu0
        %vm3740 = vcmask 64512
        %v3741 = vsel %vm3740, %v3724, -inf
        %3742 = vmax.xlane.f32.xlu0 %v3741
        %v3743 = vpop.xlane.xlu0 %3742
        %v3744 = vsub.f32 %v3724, %v3743
        %v3745 = vmul.f32 %v3744, 1.442695
        %v3746 = vpow.pop %v3745
        %v3747 = vsel %vm3740, %v3746, 0.0
        %3748 = vadd.xlane.f32.xlu0 %v3747
        %v3749 = vpop.xlane.xlu0 %3748
        %v3750 = vrcp.pop %v3749
        %v3751 = vmul.f32 %v3746, %v3750
        %3752 = vxpose.xlu0.b32.start [1/16] %v3751, 128
        %3753 = vxpose.xlu0.b32.cont [2/16] 0.0, 128
        %3754 = vxpose.xlu0.b32.cont [3/16] 0.0, 128
        %3755 = vxpose.xlu0.b32.cont [4/16] 0.0, 128
        %3756 = vxpose.xlu0.b32.cont [5/16] 0.0, 128
        %3757 = vxpose.xlu0.b32.cont [6/16] 0.0, 128
        %3758 = vxpose.xlu0.b32.cont [7/16] 0.0, 128
        %3759 = vxpose.xlu0.b32.cont [8/16] 0.0, 128
        %3760 = vxpose.xlu0.b32.cont [9/16] 0.0, 128
        %3761 = vxpose.xlu0.b32.cont [10/16] 0.0, 128
        %3762 = vxpose.xlu0.b32.cont [11/16] 0.0, 128
        %3763 = vxpose.xlu0.b32.cont [12/16] 0.0, 128
        %3764 = vxpose.xlu0.b32.cont [13/16] 0.0, 128
        %3765 = vxpose.xlu0.b32.cont [14/16] 0.0, 128
        %3766 = vxpose.xlu0.b32.cont [15/16] 0.0, 128
        %3767 = vxpose.xlu0.b32.end [16/16] 0.0, 128
        %v3768 = vpop.trf.xlu0
        %v3769 = vpop.trf.xlu0
        %v3770 = vpop.trf.xlu0
        %v3771 = vpop.trf.xlu0
        %v3772 = vpop.trf.xlu0
        %v3773 = vpop.trf.xlu0
        %v3774 = vpop.trf.xlu0
        %v3775 = vpop.trf.xlu0
        %v3776 = vpop.trf.xlu0
        %v3777 = vpop.trf.xlu0
        %v3778 = vpop.trf.xlu0
        %v3779 = vpop.trf.xlu0
        %v3780 = vpop.trf.xlu0
        %v3781 = vpop.trf.xlu0
        %v3782 = vpop.trf.xlu0
        %v3783 = vpop.trf.xlu0
        %v3784 = vlaneseq
        %v3785 = vshrl.u32 %v3784, 7
        %v3786 = vsub.s32 0, %v3785
        %v3787 = vrot.slane %v3768, %v3786
        %3789 = vbcast.lane.b32.xlu0 %v3787, 256
        %v3790 = vpop.permute.xlu0 %3789
        %v3791 = vlaneseq
        %v3792 = vshrl.u32 %v3791, 7
        %v3793 = vsub.s32 1, %v3792
        %v3794 = vrot.slane %v3768, %v3793
        %3796 = vbcast.lane.b32.xlu0 %v3794, 256
        %v3797 = vpop.permute.xlu0 %3796
        %v3798 = vlaneseq
        %v3799 = vshrl.u32 %v3798, 7
        %v3800 = vsub.s32 2, %v3799
        %v3801 = vrot.slane %v3768, %v3800
        %3803 = vbcast.lane.b32.xlu0 %v3801, 256
        %v3804 = vpop.permute.xlu0 %3803
        %v3805 = vlaneseq
        %v3806 = vshrl.u32 %v3805, 7
        %v3807 = vsub.s32 3, %v3806
        %v3808 = vrot.slane %v3768, %v3807
        %3810 = vbcast.lane.b32.xlu0 %v3808, 256
        %v3811 = vpop.permute.xlu0 %3810
        %v3812 = vlaneseq
        %v3813 = vshrl.u32 %v3812, 7
        %v3814 = vsub.s32 4, %v3813
        %v3815 = vrot.slane %v3768, %v3814
        %3817 = vbcast.lane.b32.xlu0 %v3815, 256
        %v3818 = vpop.permute.xlu0 %3817
        %v3819 = vlaneseq
        %v3820 = vshrl.u32 %v3819, 7
        %v3821 = vsub.s32 5, %v3820
        %v3822 = vrot.slane %v3768, %v3821
        %3824 = vbcast.lane.b32.xlu0 %v3822, 256
        %v3825 = vpop.permute.xlu0 %3824
        %v3826 = vlaneseq
        %v3827 = vshrl.u32 %v3826, 7
        %v3828 = vsub.s32 6, %v3827
        %v3829 = vrot.slane %v3768, %v3828
        %3831 = vbcast.lane.b32.xlu0 %v3829, 256
        %v3832 = vpop.permute.xlu0 %3831
        %v3833 = vlaneseq
        %v3834 = vshrl.u32 %v3833, 7
        %v3835 = vsub.s32 7, %v3834
        %v3836 = vrot.slane %v3768, %v3835
        %3838 = vbcast.lane.b32.xlu0 %v3836, 256
        %v3839 = vpop.permute.xlu0 %3838
        %v3840 = vmul.f32 %v3790, %v3378
        %v3841 = vmul.f32 %v3797, %v3379
        %v3842 = vmul.f32 %v3804, %v3380
        %v3843 = vmul.f32 %v3811, %v3381
        %v3844 = vmul.f32 %v3818, %v3382
        %v3845 = vmul.f32 %v3825, %v3383
        %v3846 = vmul.f32 %v3832, %v3384
        %v3847 = vmul.f32 %v3839, %v3385
        %v3848 = vsel %vm493, %v3840, 0.0
        %v3849 = vsel %vm493, %v3841, 0.0
        %v3850 = vadd.f32 %v3848, %v3849
        %v3851 = vsel %vm493, %v3842, 0.0
        %v3852 = vadd.f32 %v3850, %v3851
        %v3853 = vsel %vm493, %v3843, 0.0
        %v3854 = vadd.f32 %v3852, %v3853
        %v3855 = vsel %vm493, %v3844, 0.0
        %v3856 = vadd.f32 %v3854, %v3855
        %v3857 = vsel %vm493, %v3845, 0.0
        %v3858 = vadd.f32 %v3856, %v3857
        %v3859 = vsel %vm493, %v3846, 0.0
        %v3860 = vadd.f32 %v3858, %v3859
        %v3861 = vsel %vm493, %v3847, 0.0
        %v3862 = vadd.f32 %v3860, %v3861
        %v3863 = vld [vmem:[%s10] sm:$0xff]
        %v3864 = vld [vmem:[%s10 + $0x8] sm:$0xff]
        %v3865 = vld [vmem:[%s10 + $0x10] sm:$0xff]
        %v3866 = vld [vmem:[%s10 + $0x18] sm:$0xff]
        %v3867 = vld [vmem:[%s11] sm:$0x1]
        %v3869 = vlaneseq
        %v3870 = vshrl.u32 %v3869, 7
        %v3871 = vsub.s32 0, %v3870
        %v3872 = vrot.slane %v3867, %v3871
        %v3875 = vsel %vm493, %v3862, 0
        %3877 = vmatprep.subr.mxu0 0.0
        %3878 = vmatpush1.msra.mxu0 %v3863
        %3879 = vmatprep.subr.mxu0 0.0
        %3880 = vmatpush1.msra.mxu0 %v3864
        %3881 = vmatprep.subr.mxu0 0.0
        %3882 = vmatpush1.msra.mxu0 %v3865
        %3883 = vmatprep.subr.mxu0 0.0
        %3884 = vmatpush1.msra.mxu0 %v3866
        %3885 = vmatprep.subr.mxu0 0.0
        %3886 = vmatpush1.msra.mxu0 0.0
        %3887 = vmatprep.subr.mxu0 0.0
        %3888 = vmatpush1.msra.mxu0 0.0
        %3889 = vmatprep.subr.mxu0 0.0
        %3890 = vmatpush1.msra.mxu0 0.0
        %3891 = vmatprep.subr.mxu0 0.0
        %3892 = vmatpush1.msra.mxu0 0.0
        %3893 = vmatprep.subr.mxu0 0.0
        %3894 = vmatpush1.msra.mxu0 0.0
        %3895 = vmatprep.subr.mxu0 0.0
        %3896 = vmatpush1.msra.mxu0 0.0
        %3897 = vmatprep.subr.mxu0 0.0
        %3898 = vmatpush1.msra.mxu0 0.0
        %3899 = vmatprep.subr.mxu0 0.0
        %3900 = vmatpush1.msra.mxu0 0.0
        %3901 = vmatprep.subr.mxu0 0.0
        %3902 = vmatpush1.msra.mxu0 0.0
        %3903 = vmatprep.subr.mxu0 0.0
        %3904 = vmatpush1.msra.mxu0 0.0
        %3905 = vmatprep.subr.mxu0 0.0
        %3906 = vmatpush1.msra.mxu0 0.0
        %3907 = vmatprep.subr.mxu0 0.0
        %3908 = vmatpush1.msra.mxu0 0.0
        %3909 = vmatprep.subr.mxu0 0.0
        %3910 = vmatpush1.msra.mxu0 0.0
        %3911 = vmatprep.subr.mxu0 0.0
        %3912 = vmatpush1.msra.mxu0 0.0
        %3913 = vmatprep.subr.mxu0 0.0
        %3914 = vmatpush1.msra.mxu0 0.0
        %3915 = vmatprep.subr.mxu0 0.0
        %3916 = vmatpush1.msra.mxu0 0.0
        %3917 = vmatprep.subr.mxu0 0.0
        %3918 = vmatpush1.msra.mxu0 0.0
        %3919 = vmatprep.subr.mxu0 0.0
        %3920 = vmatpush1.msra.mxu0 0.0
        %3921 = vmatprep.subr.mxu0 0.0
        %3922 = vmatpush1.msra.mxu0 0.0
        %3923 = vmatprep.subr.mxu0 0.0
        %3924 = vmatpush1.msra.mxu0 0.0
        %3925 = vmatprep.subr.mxu0 0.0
        %3926 = vmatpush1.msra.mxu0 0.0
        %3927 = vmatprep.subr.mxu0 0.0
        %3928 = vmatpush1.msra.mxu0 0.0
        %3929 = vmatprep.subr.mxu0 0.0
        %3930 = vmatpush1.msra.mxu0 0.0
        %3931 = vmatprep.subr.mxu0 0.0
        %3932 = vmatpush1.msra.mxu0 0.0
        %3933 = vmatprep.subr.mxu0 0.0
        %3934 = vmatpush1.msra.mxu0 0.0
        %3935 = vmatprep.subr.mxu0 0.0
        %3936 = vmatpush1.msra.mxu0 0.0
        %3937 = vmatprep.subr.mxu0 0.0
        %3938 = vmatpush1.msra.mxu0 0.0
        %3939 = vmatprep.subr.mxu0 0.0
        %3940 = vmatpush1.msra.mxu0 0.0
        %3941 = vmatprep.mubr.f32.mxu0 0.0
        %3942 = vmatmul.mubr.f32.gmra.mrb[0].mxu0 %v3875
        %v3943 = vpop.f32.mrb[0].mxu0
        %v3944 = vadd.f32 %v3872, %v3943
        %v3945 = vpop.f32.mrb[0].mxu0
        %3946 = vdwg.mxu0
        %3947 = vst [vmem:[%s473] sm:$0xff] %v3944
        %p3948 = scmp.lt.s32.totalorder %s23, 1
        %s3949 = scalar_select %p3948, %s23, 1
        %s3950 = smul.addr %s3949, 8
        %s3951 = scalar_lea.vmem %s12, %s3950
        // Predicated region
        $region107: #{net_forward.1} parent=101 // pred_check
          %p3952 = pneg %p298
        $region108: #{net_forward.1} parent=101 // pred_check_branch
          %3954 = sbr.rel (%p3952) target = $region110
        $region109: #{net_forward.1} parent=101 // pred_region
          _
        $region110: #{net_forward.1} parent=101 // pred_fallthru
          _
      $region102: #{net_forward.1} parent=5 // pred_fallthru
        _
      %p3955 = scmp.le.s32.totalorder 2, %s18
      // Predicated region
      $region111: #{net_forward.1} parent=5 // pred_check
        %p3956 = pneg %p3955
      $region112: #{net_forward.1} parent=5 // pred_check_branch
        %3958 = sbr.rel (%p3956) target = $region114
      $region113: #{net_forward.1} parent=5 // pred_region
        %s3959 = ssub.s32 %s18, 2
        // Predicated region
        $region115: #{net_forward.1} parent=113 // pred_check
          %p3960 = pneg %p304
        $region116: #{net_forward.1} parent=113 // pred_check_branch
          %3962 = sbr.rel (%p3960) target = $region118
        $region117: #{net_forward.1} parent=113 // pred_region
          %p3963 = scmp.lt.s32.totalorder %s24, 1
          %s3964 = scalar_select %p3963, %s24, 1
          %s3965 = smul.addr %s3964, 8
          %s3966 = scalar_lea.vmem %s12, %s3965
        $region118: #{net_forward.1} parent=113 // pred_fallthru
          _
      $region114: #{net_forward.1} parent=5 // pred_fallthru
        _
    $region6: #{net_forward.1} parent=1 // loop_footer
      %s22 = sadd.s32 1, %s18
    $region7: #{net_forward.1} parent=1 // loop_footer_branch
      %17 = sbr.rel target = $region3
    $region8: #{net_forward.1} parent=1 // loop_exit
      _

</llo_original>
